<compile_context>
chip_gen: v7x
topology: tpu7x:2x2x1
jax: 0.10.0
libtpu: 0.0.40
codegen_flags: <defaults>
</compile_context>

<pallas_src>
import functools

import jax
import jax.numpy as jnp
from jax.experimental import pallas as pl
from jax.experimental.pallas import tpu as pltpu


_PADL = 8   # left pad along W (sublane-aligned so interior stores are aligned)
_PADR = 1   # right pad along W (the conv only needs 1 column of zeros)


# ---------------------------------------------------------------------------
# Fused kernel: lnum x (Conv3x3 + folded-BN bias + ReLU) + MaxPool2x2,
# one image per grid step, activations resident in VMEM.
# ---------------------------------------------------------------------------
def _make_fused_kernel(H, W, Cin, Cout, lnum, compute_dtype):
    HW = H * W
    taps = [(dy, dx) for dy in range(3) for dx in range(3)]

    def kernel(x_ref, *refs):
        # refs = (w_0, b_0, ..., w_{L-1}, b_{L-1}, o_ref, pad_ref, col_ref)
        wb = refs[: 2 * lnum]
        o_ref = refs[2 * lnum]
        pad_ref = refs[2 * lnum + 1]   # (H+2, W+_PADL+_PADR, Cmax) padded acts
        col_ref = refs[2 * lnum + 2]   # (H*W, 9*Cmax) im2col staging buffer

        # Zero the padded buffer once; the border stays zero for every layer
        # ("same" padding). Then drop the input image into the interior
        # (sublane-aligned store thanks to _PADL == 8).
        pad_ref[...] = jnp.zeros_like(pad_ref)
        pad_ref[1:H + 1, _PADL:_PADL + W, :Cin] = x_ref[0]

        act = None
        c_prev = Cin
        for l in range(lnum):
            if l > 0:
                # Write the previous layer's activation back into the padded
                # VMEM buffer (interior only; borders remain zero).
                pad_ref[1:H + 1, _PADL:_PADL + W, :Cout] = act
                c_prev = Cout

            w_ref = wb[2 * l]       # (9*c_prev, Cout)  BN scale folded in
            b_ref = wb[2 * l + 1]   # (1, Cout)         folded BN bias

            # im2col: stage one (H*W, 9*c_prev) patch matrix, then a single
            # MXU matmul with K = 9*c_prev (instead of 9 tiny K=c dots).
            for t, (dy, dx) in enumerate(taps):
                x0 = _PADL - 1 + dx
                patch = pad_ref[dy:dy + H, x0:x0 + W, :c_prev]
                col_ref[:, t * c_prev:(t + 1) * c_prev] = (
                    patch.reshape(HW, c_prev).astype(compute_dtype))

            acc = jnp.dot(col_ref[:, :9 * c_prev], w_ref[...],
                          preferred_element_type=jnp.float32)
            act = jnp.maximum(acc + b_ref[...], 0.0)     # bias + ReLU
            act = act.reshape(H, W, Cout)

        # Fused 2x2 stride-2 max-pool epilogue (halves the HBM writeback).
        p = jnp.max(act.reshape(H, W // 2, 2, Cout), axis=2)
        p = jnp.max(p.reshape(H // 2, 2, W // 2, Cout), axis=1)
        o_ref[...] = p.reshape(1, H // 2, W // 2, Cout).astype(o_ref.dtype)

    return kernel


def vgg_block_fused(x, layer_params, *, compute_dtype=jnp.float32):
    """x: (N, H, W, Cin) NHWC.  layer_params: list of (w9c, bias) where
    w9c: (9*Cin_l, Cout) BN-scale-folded weights, bias: (1, Cout)."""
    N, H, W, Cin = x.shape
    Cout = layer_params[0][0].shape[-1]
    lnum = len(layer_params)
    assert H % 2 == 0 and W % 2 == 0, "MaxPool2d(2,2) requires even H and W"
    Cmax = max(Cin, Cout)

    kernel = _make_fused_kernel(H, W, Cin, Cout, lnum, compute_dtype)

    in_specs = [pl.BlockSpec((1, H, W, Cin), lambda n: (n, 0, 0, 0))]
    flat_params = []
    for (w9, b) in layer_params:
        kin, kout = w9.shape
        in_specs.append(pl.BlockSpec((kin, kout), lambda n: (0, 0)))
        in_specs.append(pl.BlockSpec((1, kout), lambda n: (0, 0)))
        flat_params.append(w9.astype(compute_dtype))
        flat_params.append(b)

    return pl.pallas_call(
        kernel,
        out_shape=jax.ShapeDtypeStruct((N, H // 2, W // 2, Cout), x.dtype),
        grid=(N,),
        in_specs=in_specs,
        out_specs=pl.BlockSpec((1, H // 2, W // 2, Cout),
                               lambda n: (n, 0, 0, 0)),
        scratch_shapes=[
            pltpu.VMEM((H + 2, W + _PADL + _PADR, Cmax), jnp.float32),
            pltpu.VMEM((H * W, 9 * Cmax), compute_dtype),
        ],
        compiler_params=pltpu.CompilerParams(
            dimension_semantics=("parallel",)),
    )(x, *flat_params)


# ---------------------------------------------------------------------------
# Parameters (inference-mode BN folded into conv weights) + forward glue.
# ---------------------------------------------------------------------------
def init_vgg_block_params(key, inp, outp, lnum):
    """Deterministic synthetic Conv+BN parameters (PyTorch-equivalent set)."""
    params = []
    cin = inp
    for _ in range(lnum):
        key, kw, kg, kb, km, kv = jax.random.split(key, 6)
        params.append(dict(
            w=jax.random.normal(kw, (3, 3, cin, outp), jnp.float32) * 0.1,
            gamma=1.0 + 0.1 * jax.random.normal(kg, (outp,), jnp.float32),
            beta=0.1 * jax.random.normal(kb, (outp,), jnp.float32),
            mean=0.1 * jax.random.normal(km, (outp,), jnp.float32),
            var=1.0 + 0.1 * jax.random.uniform(kv, (outp,), jnp.float32),
        ))
        cin = outp
    return params


def fold_bn_params(params, eps=1e-5):
    """Fold inference-mode BN into the conv weights; reshape for im2col.

    Column order of the folded weight matches the kernel's im2col layout:
    col = (dy*3 + dx) * Cin + cin.
    """
    folded = []
    for p in params:
        scale = p["gamma"] / jnp.sqrt(p["var"] + eps)        # (Cout,)
        w = p["w"] * scale[None, None, None, :]              # (3,3,Cin,Cout)
        b = p["beta"] - p["mean"] * scale                    # (Cout,)
        kh, kw, cin, cout = w.shape
        folded.append((w.reshape(kh * kw * cin, cout), b.reshape(1, cout)))
    return folded


@functools.partial(jax.jit, static_argnames=("compute_dtype",))
def vgg_block_forward(x_nchw, params, *, compute_dtype=jnp.float32):
    # NCHW -> NHWC (channels on the lane dim) for the kernel, back at the end.
    x = jnp.transpose(x_nchw, (0, 2, 3, 1))
    folded = fold_bn_params(params)
    y = vgg_block_fused(x, folded, compute_dtype=compute_dtype)
    return jnp.transpose(y, (0, 3, 1, 2))


if __name__ == "__main__":
    key = jax.random.PRNGKey(0)
    kx, kp = jax.random.split(key)

    N, inp, H, W = 2, 4, 16, 16
    outp, lnum = 8, 2

    x = jax.random.normal(kx, (N, inp, H, W), jnp.float32)
    params = init_vgg_block_params(kp, inp, outp, lnum)

    out = vgg_block_forward(x, params)
    jax.block_until_ready(out)

    assert out.shape == (N, outp, H // 2, W // 2), out.shape
    assert out.dtype == jnp.float32
    print("KERNEL_OK")
</pallas_src>

<mosaic_0001>
module attributes {stable_mosaic.version = 11 : i64} {
  func.func @kernel(%arg0: i32, %arg1: memref<1x16x16x4xf32, #tpu.memory_space<vmem>>, %arg2: memref<36x8xf32, #tpu.memory_space<vmem>>, %arg3: memref<1x8xf32, #tpu.memory_space<vmem>>, %arg4: memref<72x8xf32, #tpu.memory_space<vmem>>, %arg5: memref<1x8xf32, #tpu.memory_space<vmem>>, %arg6: memref<1x8x8x8xf32, #tpu.memory_space<vmem>>, %arg7: memref<18x25x8xf32, #tpu.memory_space<vmem>>, %arg8: memref<256x72xf32, #tpu.memory_space<vmem>>) attributes {dimension_semantics = [#tpu.dimension_semantics<parallel>], iteration_bounds = array<i64: 2>, scalar_prefetch = 0 : i64, scratch_operands = 2 : i64, tpu.core_type = #tpu.core_type<tc>, window_params = [{transform_indices = @transform_0, window_bounds = array<i64: 1, 16, 16, 4>}, {pipeline_mode = #tpu.pipeline_mode<synchronous>, transform_indices = @transform_1, window_bounds = array<i64: 36, 8>}, {pipeline_mode = #tpu.pipeline_mode<synchronous>, transform_indices = @transform_2, window_bounds = array<i64: 1, 8>}, {pipeline_mode = #tpu.pipeline_mode<synchronous>, transform_indices = @transform_3, window_bounds = array<i64: 72, 8>}, {pipeline_mode = #tpu.pipeline_mode<synchronous>, transform_indices = @transform_4, window_bounds = array<i64: 1, 8>}, {transform_indices = @transform_5, window_bounds = array<i64: 1, 8, 8, 8>}]} {
    %cst = arith.constant 0.000000e+00 : f32
    %0 = vector.broadcast %cst : f32 to vector<18x25x8xf32>
    %c0 = arith.constant 0 : index
    %c0_0 = arith.constant 0 : index
    %c0_1 = arith.constant 0 : index
    %1 = vector.load %arg7[%c0, %c0_0, %c0_1] : memref<18x25x8xf32, #tpu.memory_space<vmem>>, vector<18x25x8xf32>
    tpu.vector_store %arg7[%c0, %c0_0, %c0_1], %0 {strides = array<i32>} : memref<18x25x8xf32, #tpu.memory_space<vmem>>, vector<18x25x8xf32>,
    %c0_2 = arith.constant 0 : index
    %c0_3 = arith.constant 0 : index
    %c0_4 = arith.constant 0 : index
    %c0_5 = arith.constant 0 : index
    %2 = vector.load %arg1[%c0_2, %c0_3, %c0_4, %c0_5] : memref<1x16x16x4xf32, #tpu.memory_space<vmem>>, vector<1x16x16x4xf32>
    %3 = vector.shape_cast %2 : vector<1x16x16x4xf32> to vector<16x16x4xf32>
    %c1 = arith.constant 1 : index
    %c8 = arith.constant 8 : index
    %c0_6 = arith.constant 0 : index
    %4 = vector.load %arg7[%c1, %c8, %c0_6] : memref<18x25x8xf32, #tpu.memory_space<vmem>>, vector<16x16x4xf32>
    tpu.vector_store %arg7[%c1, %c8, %c0_6], %3 {strides = array<i32>} : memref<18x25x8xf32, #tpu.memory_space<vmem>>, vector<16x16x4xf32>,
    %c0_7 = arith.constant 0 : index
    %c7 = arith.constant 7 : index
    %c0_8 = arith.constant 0 : index
    %5 = vector.load %arg7[%c0_7, %c7, %c0_8] : memref<18x25x8xf32, #tpu.memory_space<vmem>>, vector<16x16x4xf32>
    %6 = vector.shape_cast %5 : vector<16x16x4xf32> to vector<256x4xf32>
    %c0_9 = arith.constant 0 : index
    %c0_10 = arith.constant 0 : index
    %7 = vector.load %arg8[%c0_9, %c0_10] : memref<256x72xf32, #tpu.memory_space<vmem>>, vector<256x4xf32>
    tpu.vector_store %arg8[%c0_9, %c0_10], %6 {strides = array<i32>} : memref<256x72xf32, #tpu.memory_space<vmem>>, vector<256x4xf32>,
    %c0_11 = arith.constant 0 : index
    %c8_12 = arith.constant 8 : index
    %c0_13 = arith.constant 0 : index
    %8 = vector.load %arg7[%c0_11, %c8_12, %c0_13] : memref<18x25x8xf32, #tpu.memory_space<vmem>>, vector<16x16x4xf32>
    %9 = vector.shape_cast %8 : vector<16x16x4xf32> to vector<256x4xf32>
    %c0_14 = arith.constant 0 : index
    %c4 = arith.constant 4 : index
    %10 = vector.load %arg8[%c0_14, %c4] : memref<256x72xf32, #tpu.memory_space<vmem>>, vector<256x4xf32>
    tpu.vector_store %arg8[%c0_14, %c4], %9 {strides = array<i32>} : memref<256x72xf32, #tpu.memory_space<vmem>>, vector<256x4xf32>,
    %c0_15 = arith.constant 0 : index
    %c9 = arith.constant 9 : index
    %c0_16 = arith.constant 0 : index
    %11 = vector.load %arg7[%c0_15, %c9, %c0_16] : memref<18x25x8xf32, #tpu.memory_space<vmem>>, vector<16x16x4xf32>
    %12 = vector.shape_cast %11 : vector<16x16x4xf32> to vector<256x4xf32>
    %c0_17 = arith.constant 0 : index
    %c8_18 = arith.constant 8 : index
    %13 = vector.load %arg8[%c0_17, %c8_18] : memref<256x72xf32, #tpu.memory_space<vmem>>, vector<256x4xf32>
    tpu.vector_store %arg8[%c0_17, %c8_18], %12 {strides = array<i32>} : memref<256x72xf32, #tpu.memory_space<vmem>>, vector<256x4xf32>,
    %c1_19 = arith.constant 1 : index
    %c7_20 = arith.constant 7 : index
    %c0_21 = arith.constant 0 : index
    %14 = vector.load %arg7[%c1_19, %c7_20, %c0_21] : memref<18x25x8xf32, #tpu.memory_space<vmem>>, vector<16x16x4xf32>
    %15 = vector.shape_cast %14 : vector<16x16x4xf32> to vector<256x4xf32>
    %c0_22 = arith.constant 0 : index
    %c12 = arith.constant 12 : index
    %16 = vector.load %arg8[%c0_22, %c12] : memref<256x72xf32, #tpu.memory_space<vmem>>, vector<256x4xf32>
    tpu.vector_store %arg8[%c0_22, %c12], %15 {strides = array<i32>} : memref<256x72xf32, #tpu.memory_space<vmem>>, vector<256x4xf32>,
    %c1_23 = arith.constant 1 : index
    %c8_24 = arith.constant 8 : index
    %c0_25 = arith.constant 0 : index
    %17 = vector.load %arg7[%c1_23, %c8_24, %c0_25] : memref<18x25x8xf32, #tpu.memory_space<vmem>>, vector<16x16x4xf32>
    %18 = vector.shape_cast %17 : vector<16x16x4xf32> to vector<256x4xf32>
    %c0_26 = arith.constant 0 : index
    %c16 = arith.constant 16 : index
    %19 = vector.load %arg8[%c0_26, %c16] : memref<256x72xf32, #tpu.memory_space<vmem>>, vector<256x4xf32>
    tpu.vector_store %arg8[%c0_26, %c16], %18 {strides = array<i32>} : memref<256x72xf32, #tpu.memory_space<vmem>>, vector<256x4xf32>,
    %c1_27 = arith.constant 1 : index
    %c9_28 = arith.constant 9 : index
    %c0_29 = arith.constant 0 : index
    %20 = vector.load %arg7[%c1_27, %c9_28, %c0_29] : memref<18x25x8xf32, #tpu.memory_space<vmem>>, vector<16x16x4xf32>
    %21 = vector.shape_cast %20 : vector<16x16x4xf32> to vector<256x4xf32>
    %c0_30 = arith.constant 0 : index
    %c20 = arith.constant 20 : index
    %22 = vector.load %arg8[%c0_30, %c20] : memref<256x72xf32, #tpu.memory_space<vmem>>, vector<256x4xf32>
    tpu.vector_store %arg8[%c0_30, %c20], %21 {strides = array<i32>} : memref<256x72xf32, #tpu.memory_space<vmem>>, vector<256x4xf32>,
    %c2 = arith.constant 2 : index
    %c7_31 = arith.constant 7 : index
    %c0_32 = arith.constant 0 : index
    %23 = vector.load %arg7[%c2, %c7_31, %c0_32] : memref<18x25x8xf32, #tpu.memory_space<vmem>>, vector<16x16x4xf32>
    %24 = vector.shape_cast %23 : vector<16x16x4xf32> to vector<256x4xf32>
    %c0_33 = arith.constant 0 : index
    %c24 = arith.constant 24 : index
    %25 = vector.load %arg8[%c0_33, %c24] : memref<256x72xf32, #tpu.memory_space<vmem>>, vector<256x4xf32>
    tpu.vector_store %arg8[%c0_33, %c24], %24 {strides = array<i32>} : memref<256x72xf32, #tpu.memory_space<vmem>>, vector<256x4xf32>,
    %c2_34 = arith.constant 2 : index
    %c8_35 = arith.constant 8 : index
    %c0_36 = arith.constant 0 : index
    %26 = vector.load %arg7[%c2_34, %c8_35, %c0_36] : memref<18x25x8xf32, #tpu.memory_space<vmem>>, vector<16x16x4xf32>
    %27 = vector.shape_cast %26 : vector<16x16x4xf32> to vector<256x4xf32>
    %c0_37 = arith.constant 0 : index
    %c28 = arith.constant 28 : index
    %28 = vector.load %arg8[%c0_37, %c28] : memref<256x72xf32, #tpu.memory_space<vmem>>, vector<256x4xf32>
    tpu.vector_store %arg8[%c0_37, %c28], %27 {strides = array<i32>} : memref<256x72xf32, #tpu.memory_space<vmem>>, vector<256x4xf32>,
    %c2_38 = arith.constant 2 : index
    %c9_39 = arith.constant 9 : index
    %c0_40 = arith.constant 0 : index
    %29 = vector.load %arg7[%c2_38, %c9_39, %c0_40] : memref<18x25x8xf32, #tpu.memory_space<vmem>>, vector<16x16x4xf32>
    %30 = vector.shape_cast %29 : vector<16x16x4xf32> to vector<256x4xf32>
    %c0_41 = arith.constant 0 : index
    %c32 = arith.constant 32 : index
    %31 = vector.load %arg8[%c0_41, %c32] : memref<256x72xf32, #tpu.memory_space<vmem>>, vector<256x4xf32>
    tpu.vector_store %arg8[%c0_41, %c32], %30 {strides = array<i32>} : memref<256x72xf32, #tpu.memory_space<vmem>>, vector<256x4xf32>,
    %c0_42 = arith.constant 0 : index
    %c0_43 = arith.constant 0 : index
    %32 = vector.load %arg8[%c0_42, %c0_43] : memref<256x72xf32, #tpu.memory_space<vmem>>, vector<256x36xf32>
    %c0_44 = arith.constant 0 : index
    %c0_45 = arith.constant 0 : index
    %33 = vector.load %arg2[%c0_44, %c0_45] : memref<36x8xf32, #tpu.memory_space<vmem>>, vector<36x8xf32>
    %cst_46 = arith.constant dense<0.000000e+00> : vector<256x8xf32>
    %34 = tpu.matmul %32, %33, %cst_46 {dimension_numbers = #tpu.dot_dimension_numbers<[1], [0], [0], [1], [0, 0, 1, 1], [], []>} : vector<256x36xf32>, vector<36x8xf32>, vector<256x8xf32> -> vector<256x8xf32>
    %c0_47 = arith.constant 0 : index
    %c0_48 = arith.constant 0 : index
    %35 = vector.load %arg3[%c0_47, %c0_48] : memref<1x8xf32, #tpu.memory_space<vmem>>, vector<1x8xf32>
    %36 = vector.broadcast %35 : vector<1x8xf32> to vector<256x8xf32>
    %37 = arith.addf %34, %36 : vector<256x8xf32>
    %cst_49 = arith.constant 0.000000e+00 : f32
    %38 = vector.broadcast %cst_49 : f32 to vector<256x8xf32>
    %39 = arith.maximumf %37, %38 : vector<256x8xf32>
    %40 = vector.shape_cast %39 : vector<256x8xf32> to vector<16x16x8xf32>
    %c1_50 = arith.constant 1 : index
    %c8_51 = arith.constant 8 : index
    %c0_52 = arith.constant 0 : index
    %41 = vector.load %arg7[%c1_50, %c8_51, %c0_52] : memref<18x25x8xf32, #tpu.memory_space<vmem>>, vector<16x16x8xf32>
    tpu.vector_store %arg7[%c1_50, %c8_51, %c0_52], %40 {strides = array<i32>} : memref<18x25x8xf32, #tpu.memory_space<vmem>>, vector<16x16x8xf32>,
    %c0_53 = arith.constant 0 : index
    %c7_54 = arith.constant 7 : index
    %c0_55 = arith.constant 0 : index
    %42 = vector.load %arg7[%c0_53, %c7_54, %c0_55] : memref<18x25x8xf32, #tpu.memory_space<vmem>>, vector<16x16x8xf32>
    %43 = vector.shape_cast %42 : vector<16x16x8xf32> to vector<256x8xf32>
    %c0_56 = arith.constant 0 : index
    %c0_57 = arith.constant 0 : index
    %44 = vector.load %arg8[%c0_56, %c0_57] : memref<256x72xf32, #tpu.memory_space<vmem>>, vector<256x8xf32>
    tpu.vector_store %arg8[%c0_56, %c0_57], %43 {strides = array<i32>} : memref<256x72xf32, #tpu.memory_space<vmem>>, vector<256x8xf32>,
    %c0_58 = arith.constant 0 : index
    %c8_59 = arith.constant 8 : index
    %c0_60 = arith.constant 0 : index
    %45 = vector.load %arg7[%c0_58, %c8_59, %c0_60] : memref<18x25x8xf32, #tpu.memory_space<vmem>>, vector<16x16x8xf32>
    %46 = vector.shape_cast %45 : vector<16x16x8xf32> to vector<256x8xf32>
    %c0_61 = arith.constant 0 : index
    %c8_62 = arith.constant 8 : index
    %47 = vector.load %arg8[%c0_61, %c8_62] : memref<256x72xf32, #tpu.memory_space<vmem>>, vector<256x8xf32>
    tpu.vector_store %arg8[%c0_61, %c8_62], %46 {strides = array<i32>} : memref<256x72xf32, #tpu.memory_space<vmem>>, vector<256x8xf32>,
    %c0_63 = arith.constant 0 : index
    %c9_64 = arith.constant 9 : index
    %c0_65 = arith.constant 0 : index
    %48 = vector.load %arg7[%c0_63, %c9_64, %c0_65] : memref<18x25x8xf32, #tpu.memory_space<vmem>>, vector<16x16x8xf32>
    %49 = vector.shape_cast %48 : vector<16x16x8xf32> to vector<256x8xf32>
    %c0_66 = arith.constant 0 : index
    %c16_67 = arith.constant 16 : index
    %50 = vector.load %arg8[%c0_66, %c16_67] : memref<256x72xf32, #tpu.memory_space<vmem>>, vector<256x8xf32>
    tpu.vector_store %arg8[%c0_66, %c16_67], %49 {strides = array<i32>} : memref<256x72xf32, #tpu.memory_space<vmem>>, vector<256x8xf32>,
    %c1_68 = arith.constant 1 : index
    %c7_69 = arith.constant 7 : index
    %c0_70 = arith.constant 0 : index
    %51 = vector.load %arg7[%c1_68, %c7_69, %c0_70] : memref<18x25x8xf32, #tpu.memory_space<vmem>>, vector<16x16x8xf32>
    %52 = vector.shape_cast %51 : vector<16x16x8xf32> to vector<256x8xf32>
    %c0_71 = arith.constant 0 : index
    %c24_72 = arith.constant 24 : index
    %53 = vector.load %arg8[%c0_71, %c24_72] : memref<256x72xf32, #tpu.memory_space<vmem>>, vector<256x8xf32>
    tpu.vector_store %arg8[%c0_71, %c24_72], %52 {strides = array<i32>} : memref<256x72xf32, #tpu.memory_space<vmem>>, vector<256x8xf32>,
    %c1_73 = arith.constant 1 : index
    %c8_74 = arith.constant 8 : index
    %c0_75 = arith.constant 0 : index
    %54 = vector.load %arg7[%c1_73, %c8_74, %c0_75] : memref<18x25x8xf32, #tpu.memory_space<vmem>>, vector<16x16x8xf32>
    %55 = vector.shape_cast %54 : vector<16x16x8xf32> to vector<256x8xf32>
    %c0_76 = arith.constant 0 : index
    %c32_77 = arith.constant 32 : index
    %56 = vector.load %arg8[%c0_76, %c32_77] : memref<256x72xf32, #tpu.memory_space<vmem>>, vector<256x8xf32>
    tpu.vector_store %arg8[%c0_76, %c32_77], %55 {strides = array<i32>} : memref<256x72xf32, #tpu.memory_space<vmem>>, vector<256x8xf32>,
    %c1_78 = arith.constant 1 : index
    %c9_79 = arith.constant 9 : index
    %c0_80 = arith.constant 0 : index
    %57 = vector.load %arg7[%c1_78, %c9_79, %c0_80] : memref<18x25x8xf32, #tpu.memory_space<vmem>>, vector<16x16x8xf32>
    %58 = vector.shape_cast %57 : vector<16x16x8xf32> to vector<256x8xf32>
    %c0_81 = arith.constant 0 : index
    %c40 = arith.constant 40 : index
    %59 = vector.load %arg8[%c0_81, %c40] : memref<256x72xf32, #tpu.memory_space<vmem>>, vector<256x8xf32>
    tpu.vector_store %arg8[%c0_81, %c40], %58 {strides = array<i32>} : memref<256x72xf32, #tpu.memory_space<vmem>>, vector<256x8xf32>,
    %c2_82 = arith.constant 2 : index
    %c7_83 = arith.constant 7 : index
    %c0_84 = arith.constant 0 : index
    %60 = vector.load %arg7[%c2_82, %c7_83, %c0_84] : memref<18x25x8xf32, #tpu.memory_space<vmem>>, vector<16x16x8xf32>
    %61 = vector.shape_cast %60 : vector<16x16x8xf32> to vector<256x8xf32>
    %c0_85 = arith.constant 0 : index
    %c48 = arith.constant 48 : index
    %62 = vector.load %arg8[%c0_85, %c48] : memref<256x72xf32, #tpu.memory_space<vmem>>, vector<256x8xf32>
    tpu.vector_store %arg8[%c0_85, %c48], %61 {strides = array<i32>} : memref<256x72xf32, #tpu.memory_space<vmem>>, vector<256x8xf32>,
    %c2_86 = arith.constant 2 : index
    %c8_87 = arith.constant 8 : index
    %c0_88 = arith.constant 0 : index
    %63 = vector.load %arg7[%c2_86, %c8_87, %c0_88] : memref<18x25x8xf32, #tpu.memory_space<vmem>>, vector<16x16x8xf32>
    %64 = vector.shape_cast %63 : vector<16x16x8xf32> to vector<256x8xf32>
    %c0_89 = arith.constant 0 : index
    %c56 = arith.constant 56 : index
    %65 = vector.load %arg8[%c0_89, %c56] : memref<256x72xf32, #tpu.memory_space<vmem>>, vector<256x8xf32>
    tpu.vector_store %arg8[%c0_89, %c56], %64 {strides = array<i32>} : memref<256x72xf32, #tpu.memory_space<vmem>>, vector<256x8xf32>,
    %c2_90 = arith.constant 2 : index
    %c9_91 = arith.constant 9 : index
    %c0_92 = arith.constant 0 : index
    %66 = vector.load %arg7[%c2_90, %c9_91, %c0_92] : memref<18x25x8xf32, #tpu.memory_space<vmem>>, vector<16x16x8xf32>
    %67 = vector.shape_cast %66 : vector<16x16x8xf32> to vector<256x8xf32>
    %c0_93 = arith.constant 0 : index
    %c64 = arith.constant 64 : index
    %68 = vector.load %arg8[%c0_93, %c64] : memref<256x72xf32, #tpu.memory_space<vmem>>, vector<256x8xf32>
    tpu.vector_store %arg8[%c0_93, %c64], %67 {strides = array<i32>} : memref<256x72xf32, #tpu.memory_space<vmem>>, vector<256x8xf32>,
    %c0_94 = arith.constant 0 : index
    %c0_95 = arith.constant 0 : index
    %69 = vector.load %arg8[%c0_94, %c0_95] : memref<256x72xf32, #tpu.memory_space<vmem>>, vector<256x72xf32>
    %c0_96 = arith.constant 0 : index
    %c0_97 = arith.constant 0 : index
    %70 = vector.load %arg4[%c0_96, %c0_97] : memref<72x8xf32, #tpu.memory_space<vmem>>, vector<72x8xf32>
    %cst_98 = arith.constant dense<0.000000e+00> : vector<256x8xf32>
    %71 = tpu.matmul %69, %70, %cst_98 {dimension_numbers = #tpu.dot_dimension_numbers<[1], [0], [0], [1], [0, 0, 1, 1], [], []>} : vector<256x72xf32>, vector<72x8xf32>, vector<256x8xf32> -> vector<256x8xf32>
    %c0_99 = arith.constant 0 : index
    %c0_100 = arith.constant 0 : index
    %72 = vector.load %arg5[%c0_99, %c0_100] : memref<1x8xf32, #tpu.memory_space<vmem>>, vector<1x8xf32>
    %73 = vector.broadcast %72 : vector<1x8xf32> to vector<256x8xf32>
    %74 = arith.addf %71, %73 : vector<256x8xf32>
    %cst_101 = arith.constant 0.000000e+00 : f32
    %75 = vector.broadcast %cst_101 : f32 to vector<256x8xf32>
    %76 = arith.maximumf %74, %75 : vector<256x8xf32>
    %77 = vector.shape_cast %76 : vector<256x8xf32> to vector<16x16x8xf32>
    %78 = vector.shape_cast %77 : vector<16x16x8xf32> to vector<16x8x2x8xf32>
    %cst_102 = arith.constant dense<0xFF800000> : vector<16x8x8xf32>
    %79 = vector.multi_reduction <maximumf>, %78, %cst_102 [2] : vector<16x8x2x8xf32> to vector<16x8x8xf32>
    %80 = vector.shape_cast %79 : vector<16x8x8xf32> to vector<8x2x8x8xf32>
    %cst_103 = arith.constant dense<0xFF800000> : vector<8x8x8xf32>
    %81 = vector.multi_reduction <maximumf>, %80, %cst_103 [1] : vector<8x2x8x8xf32> to vector<8x8x8xf32>
    %82 = vector.shape_cast %81 : vector<8x8x8xf32> to vector<1x8x8x8xf32>
    %c0_104 = arith.constant 0 : index
    %c0_105 = arith.constant 0 : index
    %c0_106 = arith.constant 0 : index
    %c0_107 = arith.constant 0 : index
    %83 = vector.load %arg6[%c0_104, %c0_105, %c0_106, %c0_107] : memref<1x8x8x8xf32, #tpu.memory_space<vmem>>, vector<1x8x8x8xf32>
    tpu.vector_store %arg6[%c0_104, %c0_105, %c0_106, %c0_107], %82 {strides = array<i32>} : memref<1x8x8x8xf32, #tpu.memory_space<vmem>>, vector<1x8x8x8xf32>,
    return
  }
  func.func @transform_0(%arg0: i32) -> (i32, i32, i32, i32) {
    %c0_i32 = arith.constant 0 : i32
    %c0_i32_0 = arith.constant 0 : i32
    %c0_i32_1 = arith.constant 0 : i32
    %c0_i32_2 = arith.constant 0 : i32
    return %arg0, %c0_i32, %c0_i32_0, %c0_i32_1 : i32, i32, i32, i32
  }
  func.func @transform_1(%arg0: i32) -> (i32, i32) {
    %c0_i32 = arith.constant 0 : i32
    %c0_i32_0 = arith.constant 0 : i32
    %c0_i32_1 = arith.constant 0 : i32
    return %c0_i32, %c0_i32_0 : i32, i32
  }
  func.func @transform_2(%arg0: i32) -> (i32, i32) {
    %c0_i32 = arith.constant 0 : i32
    %c0_i32_0 = arith.constant 0 : i32
    %c0_i32_1 = arith.constant 0 : i32
    return %c0_i32, %c0_i32_0 : i32, i32
  }
  func.func @transform_3(%arg0: i32) -> (i32, i32) {
    %c0_i32 = arith.constant 0 : i32
    %c0_i32_0 = arith.constant 0 : i32
    %c0_i32_1 = arith.constant 0 : i32
    return %c0_i32, %c0_i32_0 : i32, i32
  }
  func.func @transform_4(%arg0: i32) -> (i32, i32) {
    %c0_i32 = arith.constant 0 : i32
    %c0_i32_0 = arith.constant 0 : i32
    %c0_i32_1 = arith.constant 0 : i32
    return %c0_i32, %c0_i32_0 : i32, i32
  }
  func.func @transform_5(%arg0: i32) -> (i32, i32, i32, i32) {
    %c0_i32 = arith.constant 0 : i32
    %c0_i32_0 = arith.constant 0 : i32
    %c0_i32_1 = arith.constant 0 : i32
    %c0_i32_2 = arith.constant 0 : i32
    return %arg0, %c0_i32, %c0_i32_0, %c0_i32_1 : i32, i32, i32, i32
  }
}

</mosaic_0001>

<llo_original>
// kernel: vgg_block_forward.1
$region0: #{vgg_block_forward.1}
  #allocation0 [shape = 'u32[]', space=smem, size = 0x4, offset = 0x4, fixed_abs, tag = 'smem constant byte address 0x4 - core index']
  #allocation1 [shape = 'u32[144,128]{1,0:T(1,128)}', space=vmem, size = 0x12000, scoped, tag = 'internal scratch']
  #allocation2 [shape = 'f32[18,25,8]{2,1,0:T(8,128)}', space=vmem, size = 0x48000, scoped, tag = 'scratch operand']
  #allocation3 [shape = 'f32[256,72]{1,0:T(8,128)}', space=vmem, size = 0x20000, scoped, tag = 'scratch operand']
  %s0 = inlined_call_operand.vmem [shape: f32[2,16,16,4], index: 0, kind: input, shape index: {}]
  %s1 = inlined_call_operand.vmem [shape: f32[36,8], index: 1, kind: input, shape index: {}]
  %s2 = inlined_call_operand.vmem [shape: f32[1,8], index: 2, kind: input, shape index: {}]
  %s3 = inlined_call_operand.vmem [shape: f32[72,8], index: 3, kind: input, shape index: {}]
  %s4 = inlined_call_operand.vmem [shape: f32[1,8], index: 4, kind: input, shape index: {}]
  %s5 = inlined_call_operand.vmem [shape: f32[2,8,8,8], index: 5, kind: output, shape index: {}]
  %s6 = sld [smem:[#allocation0]]
  $region53: #{vgg_block_forward.1} parent=0
    _
  %s8 = ssub.s32 1, %s6
  %s9 = scalar_select 0, %s8, %s6
  loop: start=0, step=1, limit=4
  $region2: #{vgg_block_forward.1} parent=0 // loop_pre_header
    _
  $region3: #{vgg_block_forward.1} parent=0 // loop_header
    %s11 = sphi 0, %s15
    %p12 = scmp.ge.s32.totalorder %s11, 4
    %s21 = sphi 0, %s23
    %s24 = sphi 0, %s21
    %s25 = sphi 0, %s24
    %s41 = sphi 0, %s25
    %s45 = sphi 0, %s45
    %s47 = sphi 0, %s45
    %s48 = sphi 0, %s47
    %s62 = sphi 0, %s48
    %s66 = sphi 0, %s66
    %s68 = sphi 0, %s66
    %s69 = sphi 0, %s68
    %s83 = sphi 0, %s69
    %s87 = sphi 0, %s87
    %s89 = sphi 0, %s87
    %s90 = sphi 0, %s89
    %s104 = sphi 0, %s90
    %s108 = sphi 0, %s108
    %s110 = sphi 0, %s108
    %s111 = sphi 0, %s110
    %s125 = sphi 0, %s111
    %s131 = sphi 0, %s133
    %s134 = sphi 0, %s131
    %s135 = sphi 0, %s134
    %s151 = sphi 0, %s135
  $region4: #{vgg_block_forward.1} parent=0 // loop_header_branch
    %14 = sbr.rel (%p12) target = $region8
  $region5: #{vgg_block_forward.1} parent=0 // loop_body
    %s16 = ssub.s32 %s11, 1
    %s17 = ssub.s32 %s11, 2
    %s18 = sadd.s32 %s11, 1
    %s19 = ssub.s32 %s11, %s18
    %p20 = scmp.eq.s32.totalorder %s19, 0
    %s22 = sadd.s32 %s21, 1
    %s23 = scalar_select %p20, %s21, %s22
    %p26 = pneg %p20
    %p27 = scmp.eq.s32.totalorder %s11, 1
    %p28 = por %p26, %p27
    %p29 = scmp.ne.s32.totalorder %s21, %s24
    %p30 = scmp.eq.s32.totalorder %s11, 0
    %p31 = por %p29, %p30
    %p32 = scmp.ne.s32.totalorder %s21, %s24
    %p33 = scmp.eq.s32.totalorder %s16, 1
    %p34 = por %p32, %p33
    %p35 = scmp.ne.s32.totalorder %s24, %s25
    %p36 = scmp.eq.s32.totalorder %s16, 0
    %p37 = por %p35, %p36
    %p38 = scmp.ne.s32.totalorder %s24, %s25
    %p39 = scmp.eq.s32.totalorder %s17, 1
    %p40 = por %p38, %p39
    %p42 = scmp.ne.s32.totalorder %s25, %s41
    %p43 = scmp.eq.s32.totalorder %s17, 0
    %p44 = por %p42, %p43
    %s46 = sadd.s32 %s45, 1
    %p49 = scmp.eq.s32.totalorder %s11, 1
    %p50 = scmp.ne.s32.totalorder %s45, %s47
    %p51 = scmp.eq.s32.totalorder %s11, 0
    %p52 = por %p50, %p51
    %p53 = scmp.ne.s32.totalorder %s45, %s47
    %p54 = scmp.eq.s32.totalorder %s16, 1
    %p55 = por %p53, %p54
    %p56 = scmp.ne.s32.totalorder %s47, %s48
    %p57 = scmp.eq.s32.totalorder %s16, 0
    %p58 = por %p56, %p57
    %p59 = scmp.ne.s32.totalorder %s47, %s48
    %p60 = scmp.eq.s32.totalorder %s17, 1
    %p61 = por %p59, %p60
    %p63 = scmp.ne.s32.totalorder %s48, %s62
    %p64 = scmp.eq.s32.totalorder %s17, 0
    %p65 = por %p63, %p64
    %s67 = sadd.s32 %s66, 1
    %p70 = scmp.eq.s32.totalorder %s11, 1
    %p71 = scmp.ne.s32.totalorder %s66, %s68
    %p72 = scmp.eq.s32.totalorder %s11, 0
    %p73 = por %p71, %p72
    %p74 = scmp.ne.s32.totalorder %s66, %s68
    %p75 = scmp.eq.s32.totalorder %s16, 1
    %p76 = por %p74, %p75
    %p77 = scmp.ne.s32.totalorder %s68, %s69
    %p78 = scmp.eq.s32.totalorder %s16, 0
    %p79 = por %p77, %p78
    %p80 = scmp.ne.s32.totalorder %s68, %s69
    %p81 = scmp.eq.s32.totalorder %s17, 1
    %p82 = por %p80, %p81
    %p84 = scmp.ne.s32.totalorder %s69, %s83
    %p85 = scmp.eq.s32.totalorder %s17, 0
    %p86 = por %p84, %p85
    %s88 = sadd.s32 %s87, 1
    %p91 = scmp.eq.s32.totalorder %s11, 1
    %p92 = scmp.ne.s32.totalorder %s87, %s89
    %p93 = scmp.eq.s32.totalorder %s11, 0
    %p94 = por %p92, %p93
    %p95 = scmp.ne.s32.totalorder %s87, %s89
    %p96 = scmp.eq.s32.totalorder %s16, 1
    %p97 = por %p95, %p96
    %p98 = scmp.ne.s32.totalorder %s89, %s90
    %p99 = scmp.eq.s32.totalorder %s16, 0
    %p100 = por %p98, %p99
    %p101 = scmp.ne.s32.totalorder %s89, %s90
    %p102 = scmp.eq.s32.totalorder %s17, 1
    %p103 = por %p101, %p102
    %p105 = scmp.ne.s32.totalorder %s90, %s104
    %p106 = scmp.eq.s32.totalorder %s17, 0
    %p107 = por %p105, %p106
    %s109 = sadd.s32 %s108, 1
    %p112 = scmp.eq.s32.totalorder %s11, 1
    %p113 = scmp.ne.s32.totalorder %s108, %s110
    %p114 = scmp.eq.s32.totalorder %s11, 0
    %p115 = por %p113, %p114
    %p116 = scmp.ne.s32.totalorder %s108, %s110
    %p117 = scmp.eq.s32.totalorder %s16, 1
    %p118 = por %p116, %p117
    %p119 = scmp.ne.s32.totalorder %s110, %s111
    %p120 = scmp.eq.s32.totalorder %s16, 0
    %p121 = por %p119, %p120
    %p122 = scmp.ne.s32.totalorder %s110, %s111
    %p123 = scmp.eq.s32.totalorder %s17, 1
    %p124 = por %p122, %p123
    %p126 = scmp.ne.s32.totalorder %s111, %s125
    %p127 = scmp.eq.s32.totalorder %s17, 0
    %p128 = por %p126, %p127
    %s129 = ssub.s32 %s11, %s18
    %p130 = scmp.eq.s32.totalorder %s129, 0
    %s132 = sadd.s32 %s131, 1
    %s133 = scalar_select %p130, %s131, %s132
    %p136 = pneg %p130
    %p137 = scmp.eq.s32.totalorder %s11, 1
    %p138 = por %p136, %p137
    %p139 = scmp.ne.s32.totalorder %s131, %s134
    %p140 = scmp.eq.s32.totalorder %s11, 0
    %p141 = por %p139, %p140
    %p142 = scmp.ne.s32.totalorder %s131, %s134
    %p143 = scmp.eq.s32.totalorder %s16, 1
    %p144 = por %p142, %p143
    %p145 = scmp.ne.s32.totalorder %s134, %s135
    %p146 = scmp.eq.s32.totalorder %s16, 0
    %p147 = por %p145, %p146
    %p148 = scmp.ne.s32.totalorder %s134, %s135
    %p149 = scmp.eq.s32.totalorder %s17, 1
    %p150 = por %p148, %p149
    %p152 = scmp.ne.s32.totalorder %s135, %s151
    %p153 = scmp.eq.s32.totalorder %s17, 0
    %p154 = por %p152, %p153
    %p155 = scmp.le.s32.totalorder 1, %s11
    %p156 = scmp.lt.s32.totalorder %s11, 3
    %p157 = pnand %p155, %p156
    %p158 = pneg %p157
    // Predicated region
    $region9: #{vgg_block_forward.1} parent=5 // pred_check
      _
    $region10: #{vgg_block_forward.1} parent=5 // pred_check_branch
      %160 = sbr.rel (%p157) target = $region12
    $region11: #{vgg_block_forward.1} parent=5 // pred_region
      %s161 = ssub.s32 %s11, 1
      // Predicated region
      $region13: #{vgg_block_forward.1} parent=11 // pred_check
        %p162 = pneg %p58
      $region14: #{vgg_block_forward.1} parent=11 // pred_check_branch
        %164 = sbr.rel (%p162) target = $region16
      $region15: #{vgg_block_forward.1} parent=11 // pred_region
        _
      $region16: #{vgg_block_forward.1} parent=11 // pred_fallthru
        _
      // Predicated region
      $region17: #{vgg_block_forward.1} parent=11 // pred_check
        %p165 = pneg %p79
      $region18: #{vgg_block_forward.1} parent=11 // pred_check_branch
        %167 = sbr.rel (%p165) target = $region20
      $region19: #{vgg_block_forward.1} parent=11 // pred_region
        _
      $region20: #{vgg_block_forward.1} parent=11 // pred_fallthru
        _
      // Predicated region
      $region21: #{vgg_block_forward.1} parent=11 // pred_check
        %p168 = pneg %p100
      $region22: #{vgg_block_forward.1} parent=11 // pred_check_branch
        %170 = sbr.rel (%p168) target = $region24
      $region23: #{vgg_block_forward.1} parent=11 // pred_region
        _
      $region24: #{vgg_block_forward.1} parent=11 // pred_fallthru
        _
      // Predicated region
      $region25: #{vgg_block_forward.1} parent=11 // pred_check
        %p171 = pneg %p121
      $region26: #{vgg_block_forward.1} parent=11 // pred_check_branch
        %173 = sbr.rel (%p171) target = $region28
      $region27: #{vgg_block_forward.1} parent=11 // pred_region
        _
      $region28: #{vgg_block_forward.1} parent=11 // pred_fallthru
        _
    $region12: #{vgg_block_forward.1} parent=5 // pred_fallthru
      _
    %p174 = scmp.lt.s32.totalorder %s11, 2
    // Predicated region
    $region29: #{vgg_block_forward.1} parent=5 // pred_check
      %p175 = pneg %p174
    $region30: #{vgg_block_forward.1} parent=5 // pred_check_branch
      %177 = sbr.rel (%p175) target = $region32
    $region31: #{vgg_block_forward.1} parent=5 // pred_region
      // Predicated region
      $region33: #{vgg_block_forward.1} parent=31 // pred_check
        %p178 = pneg %p31
      $region34: #{vgg_block_forward.1} parent=31 // pred_check_branch
        %180 = sbr.rel (%p178) target = $region36
      $region35: #{vgg_block_forward.1} parent=31 // pred_region
        %p181 = scmp.lt.s32.totalorder %s11, 1
        %s182 = scalar_select %p181, %s11, 1
        %s183 = smul.addr %s182, 32
        %s184 = smul.addr %s183, 8
        %s185 = scalar_lea.vmem %s0, %s184
      $region36: #{vgg_block_forward.1} parent=31 // pred_fallthru
        _
    $region32: #{vgg_block_forward.1} parent=5 // pred_fallthru
      _
    %p186 = scmp.le.s32.totalorder 1, %s11
    %p187 = scmp.lt.s32.totalorder %s11, 3
    %p188 = pnand %p186, %p187
    %p189 = pneg %p188
    // Predicated region
    $region37: #{vgg_block_forward.1} parent=5 // pred_check
      _
    $region38: #{vgg_block_forward.1} parent=5 // pred_check_branch
      %191 = sbr.rel (%p188) target = $region40
    $region39: #{vgg_block_forward.1} parent=5 // pred_region
      %s192 = ssub.s32 %s11, 1
      %p193 = scmp.lt.s32.totalorder %s16, 1
      %s194 = scalar_select %p193, %s16, 1
      %s195 = smul.addr %s194, 32
      %s196 = smul.addr %s195, 8
      %s197 = scalar_lea.vmem %s0, %s196
      %p198 = pneg %p37
      %p199 = pneg %p34
      %p200 = pneg %p58
      %p201 = pneg %p55
      %p202 = pneg %p79
      %p203 = pneg %p76
      %p204 = pneg %p100
      %p205 = pneg %p97
      %p206 = pneg %p121
      %p207 = pneg %p118
      %p208 = pneg %p147
      %p209 = pneg %p144
      %p210 = scmp.lt.s32.totalorder %s16, 1
      %s211 = scalar_select %p210, %s16, 1
      %s212 = smul.addr %s211, 8
      %s213 = smul.addr %s212, 8
      %s214 = scalar_lea.vmem %s5, %s213
      %p215 = scmp.lt.s32.totalorder %s16, 1
      %s216 = scalar_select %p215, %s16, 1
      %s217 = smul.addr %s216, 32
      %s218 = smul.addr %s217, 8
      %s219 = scalar_lea.vmem %s0, %s218
      %p220 = scmp.lt.s32.totalorder %s16, 1
      %s221 = scalar_select %p220, %s16, 1
      %s222 = smul.addr %s221, 8
      %s223 = smul.addr %s222, 8
      %s224 = scalar_lea.vmem %s5, %s223
      %vm225 = vcmask 64512
      %226 = vst.msk [vmem:[#allocation2] sm:$0xff] %vm225, 0.0
      %227 = vst.msk [vmem:[#allocation2 + $0x8] sm:$0xff] %vm225, 0.0
      %228 = vst.msk [vmem:[#allocation2 + $0x10] sm:$0xff] %vm225, 0.0
      %vm229 = vcmask 57344
      %230 = vst.msk [vmem:[#allocation2 + $0x18] sm:$0x1] %vm229, 0.0
      %231 = vst.msk [vmem:[#allocation2 + $0x20] sm:$0xff] %vm225, 0.0
      %232 = vst.msk [vmem:[#allocation2 + $0x28] sm:$0xff] %vm225, 0.0
      %233 = vst.msk [vmem:[#allocation2 + $0x30] sm:$0xff] %vm225, 0.0
      %234 = vst.msk [vmem:[#allocation2 + $0x38] sm:$0x1] %vm229, 0.0
      %235 = vst.msk [vmem:[#allocation2 + $0x40] sm:$0xff] %vm225, 0.0
      %236 = vst.msk [vmem:[#allocation2 + $0x48] sm:$0xff] %vm225, 0.0
      %237 = vst.msk [vmem:[#allocation2 + $0x50] sm:$0xff] %vm225, 0.0
      %238 = vst.msk [vmem:[#allocation2 + $0x58] sm:$0x1] %vm229, 0.0
      %239 = vst.msk [vmem:[#allocation2 + $0x60] sm:$0xff] %vm225, 0.0
      %240 = vst.msk [vmem:[#allocation2 + $0x68] sm:$0xff] %vm225, 0.0
      %241 = vst.msk [vmem:[#allocation2 + $0x70] sm:$0xff] %vm225, 0.0
      %242 = vst.msk [vmem:[#allocation2 + $0x78] sm:$0x1] %vm229, 0.0
      %243 = vst.msk [vmem:[#allocation2 + $0x80] sm:$0xff] %vm225, 0.0
      %244 = vst.msk [vmem:[#allocation2 + $0x88] sm:$0xff] %vm225, 0.0
      %245 = vst.msk [vmem:[#allocation2 + $0x90] sm:$0xff] %vm225, 0.0
      %246 = vst.msk [vmem:[#allocation2 + $0x98] sm:$0x1] %vm229, 0.0
      %247 = vst.msk [vmem:[#allocation2 + $0xa0] sm:$0xff] %vm225, 0.0
      %248 = vst.msk [vmem:[#allocation2 + $0xa8] sm:$0xff] %vm225, 0.0
      %249 = vst.msk [vmem:[#allocation2 + $0xb0] sm:$0xff] %vm225, 0.0
      %250 = vst.msk [vmem:[#allocation2 + $0xb8] sm:$0x1] %vm229, 0.0
      %251 = vst.msk [vmem:[#allocation2 + $0xc0] sm:$0xff] %vm225, 0.0
      %252 = vst.msk [vmem:[#allocation2 + $0xc8] sm:$0xff] %vm225, 0.0
      %253 = vst.msk [vmem:[#allocation2 + $0xd0] sm:$0xff] %vm225, 0.0
      %254 = vst.msk [vmem:[#allocation2 + $0xd8] sm:$0x1] %vm229, 0.0
      %255 = vst.msk [vmem:[#allocation2 + $0xe0] sm:$0xff] %vm225, 0.0
      %256 = vst.msk [vmem:[#allocation2 + $0xe8] sm:$0xff] %vm225, 0.0
      %257 = vst.msk [vmem:[#allocation2 + $0xf0] sm:$0xff] %vm225, 0.0
      %258 = vst.msk [vmem:[#allocation2 + $0xf8] sm:$0x1] %vm229, 0.0
      %259 = vst.msk [vmem:[#allocation2 + $0x100] sm:$0xff] %vm225, 0.0
      %260 = vst.msk [vmem:[#allocation2 + $0x108] sm:$0xff] %vm225, 0.0
      %261 = vst.msk [vmem:[#allocation2 + $0x110] sm:$0xff] %vm225, 0.0
      %262 = vst.msk [vmem:[#allocation2 + $0x118] sm:$0x1] %vm229, 0.0
      %263 = vst.msk [vmem:[#allocation2 + $0x120] sm:$0xff] %vm225, 0.0
      %264 = vst.msk [vmem:[#allocation2 + $0x128] sm:$0xff] %vm225, 0.0
      %265 = vst.msk [vmem:[#allocation2 + $0x130] sm:$0xff] %vm225, 0.0
      %266 = vst.msk [vmem:[#allocation2 + $0x138] sm:$0x1] %vm229, 0.0
      %267 = vst.msk [vmem:[#allocation2 + $0x140] sm:$0xff] %vm225, 0.0
      %268 = vst.msk [vmem:[#allocation2 + $0x148] sm:$0xff] %vm225, 0.0
      %269 = vst.msk [vmem:[#allocation2 + $0x150] sm:$0xff] %vm225, 0.0
      %270 = vst.msk [vmem:[#allocation2 + $0x158] sm:$0x1] %vm229, 0.0
      %271 = vst.msk [vmem:[#allocation2 + $0x160] sm:$0xff] %vm225, 0.0
      %272 = vst.msk [vmem:[#allocation2 + $0x168] sm:$0xff] %vm225, 0.0
      %273 = vst.msk [vmem:[#allocation2 + $0x170] sm:$0xff] %vm225, 0.0
      %274 = vst.msk [vmem:[#allocation2 + $0x178] sm:$0x1] %vm229, 0.0
      %275 = vst.msk [vmem:[#allocation2 + $0x180] sm:$0xff] %vm225, 0.0
      %276 = vst.msk [vmem:[#allocation2 + $0x188] sm:$0xff] %vm225, 0.0
      %277 = vst.msk [vmem:[#allocation2 + $0x190] sm:$0xff] %vm225, 0.0
      %278 = vst.msk [vmem:[#allocation2 + $0x198] sm:$0x1] %vm229, 0.0
      %279 = vst.msk [vmem:[#allocation2 + $0x1a0] sm:$0xff] %vm225, 0.0
      %280 = vst.msk [vmem:[#allocation2 + $0x1a8] sm:$0xff] %vm225, 0.0
      %281 = vst.msk [vmem:[#allocation2 + $0x1b0] sm:$0xff] %vm225, 0.0
      %282 = vst.msk [vmem:[#allocation2 + $0x1b8] sm:$0x1] %vm229, 0.0
      %283 = vst.msk [vmem:[#allocation2 + $0x1c0] sm:$0xff] %vm225, 0.0
      %284 = vst.msk [vmem:[#allocation2 + $0x1c8] sm:$0xff] %vm225, 0.0
      %285 = vst.msk [vmem:[#allocation2 + $0x1d0] sm:$0xff] %vm225, 0.0
      %286 = vst.msk [vmem:[#allocation2 + $0x1d8] sm:$0x1] %vm229, 0.0
      %287 = vst.msk [vmem:[#allocation2 + $0x1e0] sm:$0xff] %vm225, 0.0
      %288 = vst.msk [vmem:[#allocation2 + $0x1e8] sm:$0xff] %vm225, 0.0
      %289 = vst.msk [vmem:[#allocation2 + $0x1f0] sm:$0xff] %vm225, 0.0
      %290 = vst.msk [vmem:[#allocation2 + $0x1f8] sm:$0x1] %vm229, 0.0
      %291 = vst.msk [vmem:[#allocation2 + $0x200] sm:$0xff] %vm225, 0.0
      %292 = vst.msk [vmem:[#allocation2 + $0x208] sm:$0xff] %vm225, 0.0
      %293 = vst.msk [vmem:[#allocation2 + $0x210] sm:$0xff] %vm225, 0.0
      %294 = vst.msk [vmem:[#allocation2 + $0x218] sm:$0x1] %vm229, 0.0
      %295 = vst.msk [vmem:[#allocation2 + $0x220] sm:$0xff] %vm225, 0.0
      %296 = vst.msk [vmem:[#allocation2 + $0x228] sm:$0xff] %vm225, 0.0
      %297 = vst.msk [vmem:[#allocation2 + $0x230] sm:$0xff] %vm225, 0.0
      %298 = vst.msk [vmem:[#allocation2 + $0x238] sm:$0x1] %vm229, 0.0
      %v299 = vld [vmem:[%s219] sm:$0xff]
      %v300 = vld [vmem:[%s219 + $0x8] sm:$0xff]
      %v301 = vld [vmem:[%s219 + $0x10] sm:$0xff]
      %v302 = vld [vmem:[%s219 + $0x18] sm:$0xff]
      %v303 = vld [vmem:[%s219 + $0x20] sm:$0xff]
      %v304 = vld [vmem:[%s219 + $0x28] sm:$0xff]
      %v305 = vld [vmem:[%s219 + $0x30] sm:$0xff]
      %v306 = vld [vmem:[%s219 + $0x38] sm:$0xff]
      %v307 = vld [vmem:[%s219 + $0x40] sm:$0xff]
      %v308 = vld [vmem:[%s219 + $0x48] sm:$0xff]
      %v309 = vld [vmem:[%s219 + $0x50] sm:$0xff]
      %v310 = vld [vmem:[%s219 + $0x58] sm:$0xff]
      %v311 = vld [vmem:[%s219 + $0x60] sm:$0xff]
      %v312 = vld [vmem:[%s219 + $0x68] sm:$0xff]
      %v313 = vld [vmem:[%s219 + $0x70] sm:$0xff]
      %v314 = vld [vmem:[%s219 + $0x78] sm:$0xff]
      %v315 = vld [vmem:[%s219 + $0x80] sm:$0xff]
      %v316 = vld [vmem:[%s219 + $0x88] sm:$0xff]
      %v317 = vld [vmem:[%s219 + $0x90] sm:$0xff]
      %v318 = vld [vmem:[%s219 + $0x98] sm:$0xff]
      %v319 = vld [vmem:[%s219 + $0xa0] sm:$0xff]
      %v320 = vld [vmem:[%s219 + $0xa8] sm:$0xff]
      %v321 = vld [vmem:[%s219 + $0xb0] sm:$0xff]
      %v322 = vld [vmem:[%s219 + $0xb8] sm:$0xff]
      %v323 = vld [vmem:[%s219 + $0xc0] sm:$0xff]
      %v324 = vld [vmem:[%s219 + $0xc8] sm:$0xff]
      %v325 = vld [vmem:[%s219 + $0xd0] sm:$0xff]
      %v326 = vld [vmem:[%s219 + $0xd8] sm:$0xff]
      %v327 = vld [vmem:[%s219 + $0xe0] sm:$0xff]
      %v328 = vld [vmem:[%s219 + $0xe8] sm:$0xff]
      %v329 = vld [vmem:[%s219 + $0xf0] sm:$0xff]
      %v330 = vld [vmem:[%s219 + $0xf8] sm:$0xff]
      %s331 = scalar_lea.vmem [#allocation2], 32
      %vm332 = vcmask 31744
      %333 = vst.msk [vmem:[%s331 + $0x8] sm:$0xff] %vm332, %v299
      %334 = vst.msk [vmem:[%s331 + $0x10] sm:$0xff] %vm332, %v300
      %335 = vst.msk [vmem:[%s331 + $0x28] sm:$0xff] %vm332, %v301
      %336 = vst.msk [vmem:[%s331 + $0x30] sm:$0xff] %vm332, %v302
      %337 = vst.msk [vmem:[%s331 + $0x48] sm:$0xff] %vm332, %v303
      %338 = vst.msk [vmem:[%s331 + $0x50] sm:$0xff] %vm332, %v304
      %339 = vst.msk [vmem:[%s331 + $0x68] sm:$0xff] %vm332, %v305
      %340 = vst.msk [vmem:[%s331 + $0x70] sm:$0xff] %vm332, %v306
      %341 = vst.msk [vmem:[%s331 + $0x88] sm:$0xff] %vm332, %v307
      %342 = vst.msk [vmem:[%s331 + $0x90] sm:$0xff] %vm332, %v308
      %343 = vst.msk [vmem:[%s331 + $0xa8] sm:$0xff] %vm332, %v309
      %344 = vst.msk [vmem:[%s331 + $0xb0] sm:$0xff] %vm332, %v310
      %345 = vst.msk [vmem:[%s331 + $0xc8] sm:$0xff] %vm332, %v311
      %346 = vst.msk [vmem:[%s331 + $0xd0] sm:$0xff] %vm332, %v312
      %347 = vst.msk [vmem:[%s331 + $0xe8] sm:$0xff] %vm332, %v313
      %348 = vst.msk [vmem:[%s331 + $0xf0] sm:$0xff] %vm332, %v314
      %349 = vst.msk [vmem:[%s331 + $0x108] sm:$0xff] %vm332, %v315
      %350 = vst.msk [vmem:[%s331 + $0x110] sm:$0xff] %vm332, %v316
      %351 = vst.msk [vmem:[%s331 + $0x128] sm:$0xff] %vm332, %v317
      %352 = vst.msk [vmem:[%s331 + $0x130] sm:$0xff] %vm332, %v318
      %353 = vst.msk [vmem:[%s331 + $0x148] sm:$0xff] %vm332, %v319
      %354 = vst.msk [vmem:[%s331 + $0x150] sm:$0xff] %vm332, %v320
      %355 = vst.msk [vmem:[%s331 + $0x168] sm:$0xff] %vm332, %v321
      %356 = vst.msk [vmem:[%s331 + $0x170] sm:$0xff] %vm332, %v322
      %357 = vst.msk [vmem:[%s331 + $0x188] sm:$0xff] %vm332, %v323
      %358 = vst.msk [vmem:[%s331 + $0x190] sm:$0xff] %vm332, %v324
      %359 = vst.msk [vmem:[%s331 + $0x1a8] sm:$0xff] %vm332, %v325
      %360 = vst.msk [vmem:[%s331 + $0x1b0] sm:$0xff] %vm332, %v326
      %361 = vst.msk [vmem:[%s331 + $0x1c8] sm:$0xff] %vm332, %v327
      %362 = vst.msk [vmem:[%s331 + $0x1d0] sm:$0xff] %vm332, %v328
      %363 = vst.msk [vmem:[%s331 + $0x1e8] sm:$0xff] %vm332, %v329
      %364 = vst.msk [vmem:[%s331 + $0x1f0] sm:$0xff] %vm332, %v330
      %v365 = vld [vmem:[#allocation2 + $0x7] sm:$0xff]
      %v366 = vld [vmem:[#allocation2 + $0xf] sm:$0xff]
      %v367 = vld [vmem:[#allocation2 + $0x27] sm:$0xff]
      %v368 = vld [vmem:[#allocation2 + $0x2f] sm:$0xff]
      %v369 = vld [vmem:[#allocation2 + $0x47] sm:$0xff]
      %v370 = vld [vmem:[#allocation2 + $0x4f] sm:$0xff]
      %v371 = vld [vmem:[#allocation2 + $0x67] sm:$0xff]
      %v372 = vld [vmem:[#allocation2 + $0x6f] sm:$0xff]
      %v373 = vld [vmem:[#allocation2 + $0x87] sm:$0xff]
      %v374 = vld [vmem:[#allocation2 + $0x8f] sm:$0xff]
      %v375 = vld [vmem:[#allocation2 + $0xa7] sm:$0xff]
      %v376 = vld [vmem:[#allocation2 + $0xaf] sm:$0xff]
      %v377 = vld [vmem:[#allocation2 + $0xc7] sm:$0xff]
      %v378 = vld [vmem:[#allocation2 + $0xcf] sm:$0xff]
      %v379 = vld [vmem:[#allocation2 + $0xe7] sm:$0xff]
      %v380 = vld [vmem:[#allocation2 + $0xef] sm:$0xff]
      %v381 = vld [vmem:[#allocation2 + $0x107] sm:$0xff]
      %v382 = vld [vmem:[#allocation2 + $0x10f] sm:$0xff]
      %v383 = vld [vmem:[#allocation2 + $0x127] sm:$0xff]
      %v384 = vld [vmem:[#allocation2 + $0x12f] sm:$0xff]
      %v385 = vld [vmem:[#allocation2 + $0x147] sm:$0xff]
      %v386 = vld [vmem:[#allocation2 + $0x14f] sm:$0xff]
      %v387 = vld [vmem:[#allocation2 + $0x167] sm:$0xff]
      %v388 = vld [vmem:[#allocation2 + $0x16f] sm:$0xff]
      %v389 = vld [vmem:[#allocation2 + $0x187] sm:$0xff]
      %v390 = vld [vmem:[#allocation2 + $0x18f] sm:$0xff]
      %v391 = vld [vmem:[#allocation2 + $0x1a7] sm:$0xff]
      %v392 = vld [vmem:[#allocation2 + $0x1af] sm:$0xff]
      %v393 = vld [vmem:[#allocation2 + $0x1c7] sm:$0xff]
      %v394 = vld [vmem:[#allocation2 + $0x1cf] sm:$0xff]
      %v395 = vld [vmem:[#allocation2 + $0x1e7] sm:$0xff]
      %v396 = vld [vmem:[#allocation2 + $0x1ef] sm:$0xff]
      %397 = vst.msk [vmem:[#allocation3] sm:$0xff] %vm332, %v365
      %398 = vst.msk [vmem:[#allocation3 + $0x8] sm:$0xff] %vm332, %v366
      %399 = vst.msk [vmem:[#allocation3 + $0x10] sm:$0xff] %vm332, %v367
      %400 = vst.msk [vmem:[#allocation3 + $0x18] sm:$0xff] %vm332, %v368
      %401 = vst.msk [vmem:[#allocation3 + $0x20] sm:$0xff] %vm332, %v369
      %402 = vst.msk [vmem:[#allocation3 + $0x28] sm:$0xff] %vm332, %v370
      %403 = vst.msk [vmem:[#allocation3 + $0x30] sm:$0xff] %vm332, %v371
      %404 = vst.msk [vmem:[#allocation3 + $0x38] sm:$0xff] %vm332, %v372
      %405 = vst.msk [vmem:[#allocation3 + $0x40] sm:$0xff] %vm332, %v373
      %406 = vst.msk [vmem:[#allocation3 + $0x48] sm:$0xff] %vm332, %v374
      %407 = vst.msk [vmem:[#allocation3 + $0x50] sm:$0xff] %vm332, %v375
      %408 = vst.msk [vmem:[#allocation3 + $0x58] sm:$0xff] %vm332, %v376
      %409 = vst.msk [vmem:[#allocation3 + $0x60] sm:$0xff] %vm332, %v377
      %410 = vst.msk [vmem:[#allocation3 + $0x68] sm:$0xff] %vm332, %v378
      %411 = vst.msk [vmem:[#allocation3 + $0x70] sm:$0xff] %vm332, %v379
      %412 = vst.msk [vmem:[#allocation3 + $0x78] sm:$0xff] %vm332, %v380
      %413 = vst.msk [vmem:[#allocation3 + $0x80] sm:$0xff] %vm332, %v381
      %414 = vst.msk [vmem:[#allocation3 + $0x88] sm:$0xff] %vm332, %v382
      %415 = vst.msk [vmem:[#allocation3 + $0x90] sm:$0xff] %vm332, %v383
      %416 = vst.msk [vmem:[#allocation3 + $0x98] sm:$0xff] %vm332, %v384
      %417 = vst.msk [vmem:[#allocation3 + $0xa0] sm:$0xff] %vm332, %v385
      %418 = vst.msk [vmem:[#allocation3 + $0xa8] sm:$0xff] %vm332, %v386
      %419 = vst.msk [vmem:[#allocation3 + $0xb0] sm:$0xff] %vm332, %v387
      %420 = vst.msk [vmem:[#allocation3 + $0xb8] sm:$0xff] %vm332, %v388
      %421 = vst.msk [vmem:[#allocation3 + $0xc0] sm:$0xff] %vm332, %v389
      %422 = vst.msk [vmem:[#allocation3 + $0xc8] sm:$0xff] %vm332, %v390
      %423 = vst.msk [vmem:[#allocation3 + $0xd0] sm:$0xff] %vm332, %v391
      %424 = vst.msk [vmem:[#allocation3 + $0xd8] sm:$0xff] %vm332, %v392
      %425 = vst.msk [vmem:[#allocation3 + $0xe0] sm:$0xff] %vm332, %v393
      %426 = vst.msk [vmem:[#allocation3 + $0xe8] sm:$0xff] %vm332, %v394
      %427 = vst.msk [vmem:[#allocation3 + $0xf0] sm:$0xff] %vm332, %v395
      %428 = vst.msk [vmem:[#allocation3 + $0xf8] sm:$0xff] %vm332, %v396
      %v429 = vld [vmem:[#allocation2 + $0x8] sm:$0xff]
      %v430 = vld [vmem:[#allocation2 + $0x10] sm:$0xff]
      %v431 = vld [vmem:[#allocation2 + $0x28] sm:$0xff]
      %v432 = vld [vmem:[#allocation2 + $0x30] sm:$0xff]
      %v433 = vld [vmem:[#allocation2 + $0x48] sm:$0xff]
      %v434 = vld [vmem:[#allocation2 + $0x50] sm:$0xff]
      %v435 = vld [vmem:[#allocation2 + $0x68] sm:$0xff]
      %v436 = vld [vmem:[#allocation2 + $0x70] sm:$0xff]
      %v437 = vld [vmem:[#allocation2 + $0x88] sm:$0xff]
      %v438 = vld [vmem:[#allocation2 + $0x90] sm:$0xff]
      %v439 = vld [vmem:[#allocation2 + $0xa8] sm:$0xff]
      %v440 = vld [vmem:[#allocation2 + $0xb0] sm:$0xff]
      %v441 = vld [vmem:[#allocation2 + $0xc8] sm:$0xff]
      %v442 = vld [vmem:[#allocation2 + $0xd0] sm:$0xff]
      %v443 = vld [vmem:[#allocation2 + $0xe8] sm:$0xff]
      %v444 = vld [vmem:[#allocation2 + $0xf0] sm:$0xff]
      %v445 = vld [vmem:[#allocation2 + $0x108] sm:$0xff]
      %v446 = vld [vmem:[#allocation2 + $0x110] sm:$0xff]
      %v447 = vld [vmem:[#allocation2 + $0x128] sm:$0xff]
      %v448 = vld [vmem:[#allocation2 + $0x130] sm:$0xff]
      %v449 = vld [vmem:[#allocation2 + $0x148] sm:$0xff]
      %v450 = vld [vmem:[#allocation2 + $0x150] sm:$0xff]
      %v451 = vld [vmem:[#allocation2 + $0x168] sm:$0xff]
      %v452 = vld [vmem:[#allocation2 + $0x170] sm:$0xff]
      %v453 = vld [vmem:[#allocation2 + $0x188] sm:$0xff]
      %v454 = vld [vmem:[#allocation2 + $0x190] sm:$0xff]
      %v455 = vld [vmem:[#allocation2 + $0x1a8] sm:$0xff]
      %v456 = vld [vmem:[#allocation2 + $0x1b0] sm:$0xff]
      %v457 = vld [vmem:[#allocation2 + $0x1c8] sm:$0xff]
      %v458 = vld [vmem:[#allocation2 + $0x1d0] sm:$0xff]
      %v459 = vld [vmem:[#allocation2 + $0x1e8] sm:$0xff]
      %v460 = vld [vmem:[#allocation2 + $0x1f0] sm:$0xff]
      %493 = vrot.lane.b32.xlu0 %v429, 4
      %v494 = vpop.permute.xlu0 %493
      %495 = vrot.lane.b32.xlu0 %v430, 4
      %v496 = vpop.permute.xlu0 %495
      %497 = vrot.lane.b32.xlu0 %v431, 4
      %v498 = vpop.permute.xlu0 %497
      %499 = vrot.lane.b32.xlu0 %v432, 4
      %v500 = vpop.permute.xlu0 %499
      %501 = vrot.lane.b32.xlu0 %v433, 4
      %v502 = vpop.permute.xlu0 %501
      %503 = vrot.lane.b32.xlu0 %v434, 4
      %v504 = vpop.permute.xlu0 %503
      %505 = vrot.lane.b32.xlu0 %v435, 4
      %v506 = vpop.permute.xlu0 %505
      %507 = vrot.lane.b32.xlu0 %v436, 4
      %v508 = vpop.permute.xlu0 %507
      %509 = vrot.lane.b32.xlu0 %v437, 4
      %v510 = vpop.permute.xlu0 %509
      %511 = vrot.lane.b32.xlu0 %v438, 4
      %v512 = vpop.permute.xlu0 %511
      %513 = vrot.lane.b32.xlu0 %v439, 4
      %v514 = vpop.permute.xlu0 %513
      %515 = vrot.lane.b32.xlu0 %v440, 4
      %v516 = vpop.permute.xlu0 %515
      %517 = vrot.lane.b32.xlu0 %v441, 4
      %v518 = vpop.permute.xlu0 %517
      %519 = vrot.lane.b32.xlu0 %v442, 4
      %v520 = vpop.permute.xlu0 %519
      %521 = vrot.lane.b32.xlu0 %v443, 4
      %v522 = vpop.permute.xlu0 %521
      %523 = vrot.lane.b32.xlu0 %v444, 4
      %v524 = vpop.permute.xlu0 %523
      %525 = vrot.lane.b32.xlu0 %v445, 4
      %v526 = vpop.permute.xlu0 %525
      %527 = vrot.lane.b32.xlu0 %v446, 4
      %v528 = vpop.permute.xlu0 %527
      %529 = vrot.lane.b32.xlu0 %v447, 4
      %v530 = vpop.permute.xlu0 %529
      %531 = vrot.lane.b32.xlu0 %v448, 4
      %v532 = vpop.permute.xlu0 %531
      %533 = vrot.lane.b32.xlu0 %v449, 4
      %v534 = vpop.permute.xlu0 %533
      %535 = vrot.lane.b32.xlu0 %v450, 4
      %v536 = vpop.permute.xlu0 %535
      %537 = vrot.lane.b32.xlu0 %v451, 4
      %v538 = vpop.permute.xlu0 %537
      %539 = vrot.lane.b32.xlu0 %v452, 4
      %v540 = vpop.permute.xlu0 %539
      %541 = vrot.lane.b32.xlu0 %v453, 4
      %v542 = vpop.permute.xlu0 %541
      %543 = vrot.lane.b32.xlu0 %v454, 4
      %v544 = vpop.permute.xlu0 %543
      %545 = vrot.lane.b32.xlu0 %v455, 4
      %v546 = vpop.permute.xlu0 %545
      %547 = vrot.lane.b32.xlu0 %v456, 4
      %v548 = vpop.permute.xlu0 %547
      %549 = vrot.lane.b32.xlu0 %v457, 4
      %v550 = vpop.permute.xlu0 %549
      %551 = vrot.lane.b32.xlu0 %v458, 4
      %v552 = vpop.permute.xlu0 %551
      %553 = vrot.lane.b32.xlu0 %v459, 4
      %v554 = vpop.permute.xlu0 %553
      %555 = vrot.lane.b32.xlu0 %v460, 4
      %v556 = vpop.permute.xlu0 %555
      %vm589 = vcmask 64544
      %590 = vst.msk [vmem:[#allocation3] sm:$0xff] %vm589, %v494
      %591 = vst.msk [vmem:[#allocation3 + $0x8] sm:$0xff] %vm589, %v496
      %592 = vst.msk [vmem:[#allocation3 + $0x10] sm:$0xff] %vm589, %v498
      %593 = vst.msk [vmem:[#allocation3 + $0x18] sm:$0xff] %vm589, %v500
      %594 = vst.msk [vmem:[#allocation3 + $0x20] sm:$0xff] %vm589, %v502
      %595 = vst.msk [vmem:[#allocation3 + $0x28] sm:$0xff] %vm589, %v504
      %596 = vst.msk [vmem:[#allocation3 + $0x30] sm:$0xff] %vm589, %v506
      %597 = vst.msk [vmem:[#allocation3 + $0x38] sm:$0xff] %vm589, %v508
      %598 = vst.msk [vmem:[#allocation3 + $0x40] sm:$0xff] %vm589, %v510
      %599 = vst.msk [vmem:[#allocation3 + $0x48] sm:$0xff] %vm589, %v512
      %600 = vst.msk [vmem:[#allocation3 + $0x50] sm:$0xff] %vm589, %v514
      %601 = vst.msk [vmem:[#allocation3 + $0x58] sm:$0xff] %vm589, %v516
      %602 = vst.msk [vmem:[#allocation3 + $0x60] sm:$0xff] %vm589, %v518
      %603 = vst.msk [vmem:[#allocation3 + $0x68] sm:$0xff] %vm589, %v520
      %604 = vst.msk [vmem:[#allocation3 + $0x70] sm:$0xff] %vm589, %v522
      %605 = vst.msk [vmem:[#allocation3 + $0x78] sm:$0xff] %vm589, %v524
      %606 = vst.msk [vmem:[#allocation3 + $0x80] sm:$0xff] %vm589, %v526
      %607 = vst.msk [vmem:[#allocation3 + $0x88] sm:$0xff] %vm589, %v528
      %608 = vst.msk [vmem:[#allocation3 + $0x90] sm:$0xff] %vm589, %v530
      %609 = vst.msk [vmem:[#allocation3 + $0x98] sm:$0xff] %vm589, %v532
      %610 = vst.msk [vmem:[#allocation3 + $0xa0] sm:$0xff] %vm589, %v534
      %611 = vst.msk [vmem:[#allocation3 + $0xa8] sm:$0xff] %vm589, %v536
      %612 = vst.msk [vmem:[#allocation3 + $0xb0] sm:$0xff] %vm589, %v538
      %613 = vst.msk [vmem:[#allocation3 + $0xb8] sm:$0xff] %vm589, %v540
      %614 = vst.msk [vmem:[#allocation3 + $0xc0] sm:$0xff] %vm589, %v542
      %615 = vst.msk [vmem:[#allocation3 + $0xc8] sm:$0xff] %vm589, %v544
      %616 = vst.msk [vmem:[#allocation3 + $0xd0] sm:$0xff] %vm589, %v546
      %617 = vst.msk [vmem:[#allocation3 + $0xd8] sm:$0xff] %vm589, %v548
      %618 = vst.msk [vmem:[#allocation3 + $0xe0] sm:$0xff] %vm589, %v550
      %619 = vst.msk [vmem:[#allocation3 + $0xe8] sm:$0xff] %vm589, %v552
      %620 = vst.msk [vmem:[#allocation3 + $0xf0] sm:$0xff] %vm589, %v554
      %621 = vst.msk [vmem:[#allocation3 + $0xf8] sm:$0xff] %vm589, %v556
      %v622 = vld [vmem:[#allocation2 + $0x9] sm:$0xff]
      %v623 = vld [vmem:[#allocation2 + $0x11] sm:$0xff]
      %v624 = vld [vmem:[#allocation2 + $0x29] sm:$0xff]
      %v625 = vld [vmem:[#allocation2 + $0x31] sm:$0xff]
      %v626 = vld [vmem:[#allocation2 + $0x49] sm:$0xff]
      %v627 = vld [vmem:[#allocation2 + $0x51] sm:$0xff]
      %v628 = vld [vmem:[#allocation2 + $0x69] sm:$0xff]
      %v629 = vld [vmem:[#allocation2 + $0x71] sm:$0xff]
      %v630 = vld [vmem:[#allocation2 + $0x89] sm:$0xff]
      %v631 = vld [vmem:[#allocation2 + $0x91] sm:$0xff]
      %v632 = vld [vmem:[#allocation2 + $0xa9] sm:$0xff]
      %v633 = vld [vmem:[#allocation2 + $0xb1] sm:$0xff]
      %v634 = vld [vmem:[#allocation2 + $0xc9] sm:$0xff]
      %v635 = vld [vmem:[#allocation2 + $0xd1] sm:$0xff]
      %v636 = vld [vmem:[#allocation2 + $0xe9] sm:$0xff]
      %v637 = vld [vmem:[#allocation2 + $0xf1] sm:$0xff]
      %v638 = vld [vmem:[#allocation2 + $0x109] sm:$0xff]
      %v639 = vld [vmem:[#allocation2 + $0x111] sm:$0xff]
      %v640 = vld [vmem:[#allocation2 + $0x129] sm:$0xff]
      %v641 = vld [vmem:[#allocation2 + $0x131] sm:$0xff]
      %v642 = vld [vmem:[#allocation2 + $0x149] sm:$0xff]
      %v643 = vld [vmem:[#allocation2 + $0x151] sm:$0xff]
      %v644 = vld [vmem:[#allocation2 + $0x169] sm:$0xff]
      %v645 = vld [vmem:[#allocation2 + $0x171] sm:$0xff]
      %v646 = vld [vmem:[#allocation2 + $0x189] sm:$0xff]
      %v647 = vld [vmem:[#allocation2 + $0x191] sm:$0xff]
      %v648 = vld [vmem:[#allocation2 + $0x1a9] sm:$0xff]
      %v649 = vld [vmem:[#allocation2 + $0x1b1] sm:$0xff]
      %v650 = vld [vmem:[#allocation2 + $0x1c9] sm:$0xff]
      %v651 = vld [vmem:[#allocation2 + $0x1d1] sm:$0xff]
      %v652 = vld [vmem:[#allocation2 + $0x1e9] sm:$0xff]
      %v653 = vld [vmem:[#allocation2 + $0x1f1] sm:$0xff]
      %686 = vrot.lane.b32.xlu0 %v622, 8
      %v687 = vpop.permute.xlu0 %686
      %688 = vrot.lane.b32.xlu0 %v623, 8
      %v689 = vpop.permute.xlu0 %688
      %690 = vrot.lane.b32.xlu0 %v624, 8
      %v691 = vpop.permute.xlu0 %690
      %692 = vrot.lane.b32.xlu0 %v625, 8
      %v693 = vpop.permute.xlu0 %692
      %694 = vrot.lane.b32.xlu0 %v626, 8
      %v695 = vpop.permute.xlu0 %694
      %696 = vrot.lane.b32.xlu0 %v627, 8
      %v697 = vpop.permute.xlu0 %696
      %698 = vrot.lane.b32.xlu0 %v628, 8
      %v699 = vpop.permute.xlu0 %698
      %700 = vrot.lane.b32.xlu0 %v629, 8
      %v701 = vpop.permute.xlu0 %700
      %702 = vrot.lane.b32.xlu0 %v630, 8
      %v703 = vpop.permute.xlu0 %702
      %704 = vrot.lane.b32.xlu0 %v631, 8
      %v705 = vpop.permute.xlu0 %704
      %706 = vrot.lane.b32.xlu0 %v632, 8
      %v707 = vpop.permute.xlu0 %706
      %708 = vrot.lane.b32.xlu0 %v633, 8
      %v709 = vpop.permute.xlu0 %708
      %710 = vrot.lane.b32.xlu0 %v634, 8
      %v711 = vpop.permute.xlu0 %710
      %712 = vrot.lane.b32.xlu0 %v635, 8
      %v713 = vpop.permute.xlu0 %712
      %714 = vrot.lane.b32.xlu0 %v636, 8
      %v715 = vpop.permute.xlu0 %714
      %716 = vrot.lane.b32.xlu0 %v637, 8
      %v717 = vpop.permute.xlu0 %716
      %718 = vrot.lane.b32.xlu0 %v638, 8
      %v719 = vpop.permute.xlu0 %718
      %720 = vrot.lane.b32.xlu0 %v639, 8
      %v721 = vpop.permute.xlu0 %720
      %722 = vrot.lane.b32.xlu0 %v640, 8
      %v723 = vpop.permute.xlu0 %722
      %724 = vrot.lane.b32.xlu0 %v641, 8
      %v725 = vpop.permute.xlu0 %724
      %726 = vrot.lane.b32.xlu0 %v642, 8
      %v727 = vpop.permute.xlu0 %726
      %728 = vrot.lane.b32.xlu0 %v643, 8
      %v729 = vpop.permute.xlu0 %728
      %730 = vrot.lane.b32.xlu0 %v644, 8
      %v731 = vpop.permute.xlu0 %730
      %732 = vrot.lane.b32.xlu0 %v645, 8
      %v733 = vpop.permute.xlu0 %732
      %734 = vrot.lane.b32.xlu0 %v646, 8
      %v735 = vpop.permute.xlu0 %734
      %736 = vrot.lane.b32.xlu0 %v647, 8
      %v737 = vpop.permute.xlu0 %736
      %738 = vrot.lane.b32.xlu0 %v648, 8
      %v739 = vpop.permute.xlu0 %738
      %740 = vrot.lane.b32.xlu0 %v649, 8
      %v741 = vpop.permute.xlu0 %740
      %742 = vrot.lane.b32.xlu0 %v650, 8
      %v743 = vpop.permute.xlu0 %742
      %744 = vrot.lane.b32.xlu0 %v651, 8
      %v745 = vpop.permute.xlu0 %744
      %746 = vrot.lane.b32.xlu0 %v652, 8
      %v747 = vpop.permute.xlu0 %746
      %748 = vrot.lane.b32.xlu0 %v653, 8
      %v749 = vpop.permute.xlu0 %748
      %vm782 = vcmask 97344
      %783 = vst.msk [vmem:[#allocation3] sm:$0xff] %vm782, %v687
      %784 = vst.msk [vmem:[#allocation3 + $0x8] sm:$0xff] %vm782, %v689
      %785 = vst.msk [vmem:[#allocation3 + $0x10] sm:$0xff] %vm782, %v691
      %786 = vst.msk [vmem:[#allocation3 + $0x18] sm:$0xff] %vm782, %v693
      %787 = vst.msk [vmem:[#allocation3 + $0x20] sm:$0xff] %vm782, %v695
      %788 = vst.msk [vmem:[#allocation3 + $0x28] sm:$0xff] %vm782, %v697
      %789 = vst.msk [vmem:[#allocation3 + $0x30] sm:$0xff] %vm782, %v699
      %790 = vst.msk [vmem:[#allocation3 + $0x38] sm:$0xff] %vm782, %v701
      %791 = vst.msk [vmem:[#allocation3 + $0x40] sm:$0xff] %vm782, %v703
      %792 = vst.msk [vmem:[#allocation3 + $0x48] sm:$0xff] %vm782, %v705
      %793 = vst.msk [vmem:[#allocation3 + $0x50] sm:$0xff] %vm782, %v707
      %794 = vst.msk [vmem:[#allocation3 + $0x58] sm:$0xff] %vm782, %v709
      %795 = vst.msk [vmem:[#allocation3 + $0x60] sm:$0xff] %vm782, %v711
      %796 = vst.msk [vmem:[#allocation3 + $0x68] sm:$0xff] %vm782, %v713
      %797 = vst.msk [vmem:[#allocation3 + $0x70] sm:$0xff] %vm782, %v715
      %798 = vst.msk [vmem:[#allocation3 + $0x78] sm:$0xff] %vm782, %v717
      %799 = vst.msk [vmem:[#allocation3 + $0x80] sm:$0xff] %vm782, %v719
      %800 = vst.msk [vmem:[#allocation3 + $0x88] sm:$0xff] %vm782, %v721
      %801 = vst.msk [vmem:[#allocation3 + $0x90] sm:$0xff] %vm782, %v723
      %802 = vst.msk [vmem:[#allocation3 + $0x98] sm:$0xff] %vm782, %v725
      %803 = vst.msk [vmem:[#allocation3 + $0xa0] sm:$0xff] %vm782, %v727
      %804 = vst.msk [vmem:[#allocation3 + $0xa8] sm:$0xff] %vm782, %v729
      %805 = vst.msk [vmem:[#allocation3 + $0xb0] sm:$0xff] %vm782, %v731
      %806 = vst.msk [vmem:[#allocation3 + $0xb8] sm:$0xff] %vm782, %v733
      %807 = vst.msk [vmem:[#allocation3 + $0xc0] sm:$0xff] %vm782, %v735
      %808 = vst.msk [vmem:[#allocation3 + $0xc8] sm:$0xff] %vm782, %v737
      %809 = vst.msk [vmem:[#allocation3 + $0xd0] sm:$0xff] %vm782, %v739
      %810 = vst.msk [vmem:[#allocation3 + $0xd8] sm:$0xff] %vm782, %v741
      %811 = vst.msk [vmem:[#allocation3 + $0xe0] sm:$0xff] %vm782, %v743
      %812 = vst.msk [vmem:[#allocation3 + $0xe8] sm:$0xff] %vm782, %v745
      %813 = vst.msk [vmem:[#allocation3 + $0xf0] sm:$0xff] %vm782, %v747
      %814 = vst.msk [vmem:[#allocation3 + $0xf8] sm:$0xff] %vm782, %v749
      %v815 = vld [vmem:[%s331 + $0x7] sm:$0xff]
      %v816 = vld [vmem:[%s331 + $0xf] sm:$0xff]
      %v817 = vld [vmem:[%s331 + $0x27] sm:$0xff]
      %v818 = vld [vmem:[%s331 + $0x2f] sm:$0xff]
      %v819 = vld [vmem:[%s331 + $0x47] sm:$0xff]
      %v820 = vld [vmem:[%s331 + $0x4f] sm:$0xff]
      %v821 = vld [vmem:[%s331 + $0x67] sm:$0xff]
      %v822 = vld [vmem:[%s331 + $0x6f] sm:$0xff]
      %v823 = vld [vmem:[%s331 + $0x87] sm:$0xff]
      %v824 = vld [vmem:[%s331 + $0x8f] sm:$0xff]
      %v825 = vld [vmem:[%s331 + $0xa7] sm:$0xff]
      %v826 = vld [vmem:[%s331 + $0xaf] sm:$0xff]
      %v827 = vld [vmem:[%s331 + $0xc7] sm:$0xff]
      %v828 = vld [vmem:[%s331 + $0xcf] sm:$0xff]
      %v829 = vld [vmem:[%s331 + $0xe7] sm:$0xff]
      %v830 = vld [vmem:[%s331 + $0xef] sm:$0xff]
      %v831 = vld [vmem:[%s331 + $0x107] sm:$0xff]
      %v832 = vld [vmem:[%s331 + $0x10f] sm:$0xff]
      %v833 = vld [vmem:[%s331 + $0x127] sm:$0xff]
      %v834 = vld [vmem:[%s331 + $0x12f] sm:$0xff]
      %v835 = vld [vmem:[%s331 + $0x147] sm:$0xff]
      %v836 = vld [vmem:[%s331 + $0x14f] sm:$0xff]
      %v837 = vld [vmem:[%s331 + $0x167] sm:$0xff]
      %v838 = vld [vmem:[%s331 + $0x16f] sm:$0xff]
      %v839 = vld [vmem:[%s331 + $0x187] sm:$0xff]
      %v840 = vld [vmem:[%s331 + $0x18f] sm:$0xff]
      %v841 = vld [vmem:[%s331 + $0x1a7] sm:$0xff]
      %v842 = vld [vmem:[%s331 + $0x1af] sm:$0xff]
      %v843 = vld [vmem:[%s331 + $0x1c7] sm:$0xff]
      %v844 = vld [vmem:[%s331 + $0x1cf] sm:$0xff]
      %v845 = vld [vmem:[%s331 + $0x1e7] sm:$0xff]
      %v846 = vld [vmem:[%s331 + $0x1ef] sm:$0xff]
      %879 = vrot.lane.b32.xlu0 %v815, 12
      %v880 = vpop.permute.xlu0 %879
      %881 = vrot.lane.b32.xlu0 %v816, 12
      %v882 = vpop.permute.xlu0 %881
      %883 = vrot.lane.b32.xlu0 %v817, 12
      %v884 = vpop.permute.xlu0 %883
      %885 = vrot.lane.b32.xlu0 %v818, 12
      %v886 = vpop.permute.xlu0 %885
      %887 = vrot.lane.b32.xlu0 %v819, 12
      %v888 = vpop.permute.xlu0 %887
      %889 = vrot.lane.b32.xlu0 %v820, 12
      %v890 = vpop.permute.xlu0 %889
      %891 = vrot.lane.b32.xlu0 %v821, 12
      %v892 = vpop.permute.xlu0 %891
      %893 = vrot.lane.b32.xlu0 %v822, 12
      %v894 = vpop.permute.xlu0 %893
      %895 = vrot.lane.b32.xlu0 %v823, 12
      %v896 = vpop.permute.xlu0 %895
      %897 = vrot.lane.b32.xlu0 %v824, 12
      %v898 = vpop.permute.xlu0 %897
      %899 = vrot.lane.b32.xlu0 %v825, 12
      %v900 = vpop.permute.xlu0 %899
      %901 = vrot.lane.b32.xlu0 %v826, 12
      %v902 = vpop.permute.xlu0 %901
      %903 = vrot.lane.b32.xlu0 %v827, 12
      %v904 = vpop.permute.xlu0 %903
      %905 = vrot.lane.b32.xlu0 %v828, 12
      %v906 = vpop.permute.xlu0 %905
      %907 = vrot.lane.b32.xlu0 %v829, 12
      %v908 = vpop.permute.xlu0 %907
      %909 = vrot.lane.b32.xlu0 %v830, 12
      %v910 = vpop.permute.xlu0 %909
      %911 = vrot.lane.b32.xlu0 %v831, 12
      %v912 = vpop.permute.xlu0 %911
      %913 = vrot.lane.b32.xlu0 %v832, 12
      %v914 = vpop.permute.xlu0 %913
      %915 = vrot.lane.b32.xlu0 %v833, 12
      %v916 = vpop.permute.xlu0 %915
      %917 = vrot.lane.b32.xlu0 %v834, 12
      %v918 = vpop.permute.xlu0 %917
      %919 = vrot.lane.b32.xlu0 %v835, 12
      %v920 = vpop.permute.xlu0 %919
      %921 = vrot.lane.b32.xlu0 %v836, 12
      %v922 = vpop.permute.xlu0 %921
      %923 = vrot.lane.b32.xlu0 %v837, 12
      %v924 = vpop.permute.xlu0 %923
      %925 = vrot.lane.b32.xlu0 %v838, 12
      %v926 = vpop.permute.xlu0 %925
      %927 = vrot.lane.b32.xlu0 %v839, 12
      %v928 = vpop.permute.xlu0 %927
      %929 = vrot.lane.b32.xlu0 %v840, 12
      %v930 = vpop.permute.xlu0 %929
      %931 = vrot.lane.b32.xlu0 %v841, 12
      %v932 = vpop.permute.xlu0 %931
      %933 = vrot.lane.b32.xlu0 %v842, 12
      %v934 = vpop.permute.xlu0 %933
      %935 = vrot.lane.b32.xlu0 %v843, 12
      %v936 = vpop.permute.xlu0 %935
      %937 = vrot.lane.b32.xlu0 %v844, 12
      %v938 = vpop.permute.xlu0 %937
      %939 = vrot.lane.b32.xlu0 %v845, 12
      %v940 = vpop.permute.xlu0 %939
      %941 = vrot.lane.b32.xlu0 %v846, 12
      %v942 = vpop.permute.xlu0 %941
      %vm975 = vcmask 130144
      %976 = vst.msk [vmem:[#allocation3] sm:$0xff] %vm975, %v880
      %977 = vst.msk [vmem:[#allocation3 + $0x8] sm:$0xff] %vm975, %v882
      %978 = vst.msk [vmem:[#allocation3 + $0x10] sm:$0xff] %vm975, %v884
      %979 = vst.msk [vmem:[#allocation3 + $0x18] sm:$0xff] %vm975, %v886
      %980 = vst.msk [vmem:[#allocation3 + $0x20] sm:$0xff] %vm975, %v888
      %981 = vst.msk [vmem:[#allocation3 + $0x28] sm:$0xff] %vm975, %v890
      %982 = vst.msk [vmem:[#allocation3 + $0x30] sm:$0xff] %vm975, %v892
      %983 = vst.msk [vmem:[#allocation3 + $0x38] sm:$0xff] %vm975, %v894
      %984 = vst.msk [vmem:[#allocation3 + $0x40] sm:$0xff] %vm975, %v896
      %985 = vst.msk [vmem:[#allocation3 + $0x48] sm:$0xff] %vm975, %v898
      %986 = vst.msk [vmem:[#allocation3 + $0x50] sm:$0xff] %vm975, %v900
      %987 = vst.msk [vmem:[#allocation3 + $0x58] sm:$0xff] %vm975, %v902
      %988 = vst.msk [vmem:[#allocation3 + $0x60] sm:$0xff] %vm975, %v904
      %989 = vst.msk [vmem:[#allocation3 + $0x68] sm:$0xff] %vm975, %v906
      %990 = vst.msk [vmem:[#allocation3 + $0x70] sm:$0xff] %vm975, %v908
      %991 = vst.msk [vmem:[#allocation3 + $0x78] sm:$0xff] %vm975, %v910
      %992 = vst.msk [vmem:[#allocation3 + $0x80] sm:$0xff] %vm975, %v912
      %993 = vst.msk [vmem:[#allocation3 + $0x88] sm:$0xff] %vm975, %v914
      %994 = vst.msk [vmem:[#allocation3 + $0x90] sm:$0xff] %vm975, %v916
      %995 = vst.msk [vmem:[#allocation3 + $0x98] sm:$0xff] %vm975, %v918
      %996 = vst.msk [vmem:[#allocation3 + $0xa0] sm:$0xff] %vm975, %v920
      %997 = vst.msk [vmem:[#allocation3 + $0xa8] sm:$0xff] %vm975, %v922
      %998 = vst.msk [vmem:[#allocation3 + $0xb0] sm:$0xff] %vm975, %v924
      %999 = vst.msk [vmem:[#allocation3 + $0xb8] sm:$0xff] %vm975, %v926
      %1000 = vst.msk [vmem:[#allocation3 + $0xc0] sm:$0xff] %vm975, %v928
      %1001 = vst.msk [vmem:[#allocation3 + $0xc8] sm:$0xff] %vm975, %v930
      %1002 = vst.msk [vmem:[#allocation3 + $0xd0] sm:$0xff] %vm975, %v932
      %1003 = vst.msk [vmem:[#allocation3 + $0xd8] sm:$0xff] %vm975, %v934
      %1004 = vst.msk [vmem:[#allocation3 + $0xe0] sm:$0xff] %vm975, %v936
      %1005 = vst.msk [vmem:[#allocation3 + $0xe8] sm:$0xff] %vm975, %v938
      %1006 = vst.msk [vmem:[#allocation3 + $0xf0] sm:$0xff] %vm975, %v940
      %1007 = vst.msk [vmem:[#allocation3 + $0xf8] sm:$0xff] %vm975, %v942
      %v1008 = vld [vmem:[%s331 + $0x8] sm:$0xff]
      %v1009 = vld [vmem:[%s331 + $0x10] sm:$0xff]
      %v1010 = vld [vmem:[%s331 + $0x28] sm:$0xff]
      %v1011 = vld [vmem:[%s331 + $0x30] sm:$0xff]
      %v1012 = vld [vmem:[%s331 + $0x48] sm:$0xff]
      %v1013 = vld [vmem:[%s331 + $0x50] sm:$0xff]
      %v1014 = vld [vmem:[%s331 + $0x68] sm:$0xff]
      %v1015 = vld [vmem:[%s331 + $0x70] sm:$0xff]
      %v1016 = vld [vmem:[%s331 + $0x88] sm:$0xff]
      %v1017 = vld [vmem:[%s331 + $0x90] sm:$0xff]
      %v1018 = vld [vmem:[%s331 + $0xa8] sm:$0xff]
      %v1019 = vld [vmem:[%s331 + $0xb0] sm:$0xff]
      %v1020 = vld [vmem:[%s331 + $0xc8] sm:$0xff]
      %v1021 = vld [vmem:[%s331 + $0xd0] sm:$0xff]
      %v1022 = vld [vmem:[%s331 + $0xe8] sm:$0xff]
      %v1023 = vld [vmem:[%s331 + $0xf0] sm:$0xff]
      %v1024 = vld [vmem:[%s331 + $0x108] sm:$0xff]
      %v1025 = vld [vmem:[%s331 + $0x110] sm:$0xff]
      %v1026 = vld [vmem:[%s331 + $0x128] sm:$0xff]
      %v1027 = vld [vmem:[%s331 + $0x130] sm:$0xff]
      %v1028 = vld [vmem:[%s331 + $0x148] sm:$0xff]
      %v1029 = vld [vmem:[%s331 + $0x150] sm:$0xff]
      %v1030 = vld [vmem:[%s331 + $0x168] sm:$0xff]
      %v1031 = vld [vmem:[%s331 + $0x170] sm:$0xff]
      %v1032 = vld [vmem:[%s331 + $0x188] sm:$0xff]
      %v1033 = vld [vmem:[%s331 + $0x190] sm:$0xff]
      %v1034 = vld [vmem:[%s331 + $0x1a8] sm:$0xff]
      %v1035 = vld [vmem:[%s331 + $0x1b0] sm:$0xff]
      %v1036 = vld [vmem:[%s331 + $0x1c8] sm:$0xff]
      %v1037 = vld [vmem:[%s331 + $0x1d0] sm:$0xff]
      %v1038 = vld [vmem:[%s331 + $0x1e8] sm:$0xff]
      %v1039 = vld [vmem:[%s331 + $0x1f0] sm:$0xff]
      %1072 = vrot.lane.b32.xlu0 %v1008, 16
      %v1073 = vpop.permute.xlu0 %1072
      %1074 = vrot.lane.b32.xlu0 %v1009, 16
      %v1075 = vpop.permute.xlu0 %1074
      %1076 = vrot.lane.b32.xlu0 %v1010, 16
      %v1077 = vpop.permute.xlu0 %1076
      %1078 = vrot.lane.b32.xlu0 %v1011, 16
      %v1079 = vpop.permute.xlu0 %1078
      %1080 = vrot.lane.b32.xlu0 %v1012, 16
      %v1081 = vpop.permute.xlu0 %1080
      %1082 = vrot.lane.b32.xlu0 %v1013, 16
      %v1083 = vpop.permute.xlu0 %1082
      %1084 = vrot.lane.b32.xlu0 %v1014, 16
      %v1085 = vpop.permute.xlu0 %1084
      %1086 = vrot.lane.b32.xlu0 %v1015, 16
      %v1087 = vpop.permute.xlu0 %1086
      %1088 = vrot.lane.b32.xlu0 %v1016, 16
      %v1089 = vpop.permute.xlu0 %1088
      %1090 = vrot.lane.b32.xlu0 %v1017, 16
      %v1091 = vpop.permute.xlu0 %1090
      %1092 = vrot.lane.b32.xlu0 %v1018, 16
      %v1093 = vpop.permute.xlu0 %1092
      %1094 = vrot.lane.b32.xlu0 %v1019, 16
      %v1095 = vpop.permute.xlu0 %1094
      %1096 = vrot.lane.b32.xlu0 %v1020, 16
      %v1097 = vpop.permute.xlu0 %1096
      %1098 = vrot.lane.b32.xlu0 %v1021, 16
      %v1099 = vpop.permute.xlu0 %1098
      %1100 = vrot.lane.b32.xlu0 %v1022, 16
      %v1101 = vpop.permute.xlu0 %1100
      %1102 = vrot.lane.b32.xlu0 %v1023, 16
      %v1103 = vpop.permute.xlu0 %1102
      %1104 = vrot.lane.b32.xlu0 %v1024, 16
      %v1105 = vpop.permute.xlu0 %1104
      %1106 = vrot.lane.b32.xlu0 %v1025, 16
      %v1107 = vpop.permute.xlu0 %1106
      %1108 = vrot.lane.b32.xlu0 %v1026, 16
      %v1109 = vpop.permute.xlu0 %1108
      %1110 = vrot.lane.b32.xlu0 %v1027, 16
      %v1111 = vpop.permute.xlu0 %1110
      %1112 = vrot.lane.b32.xlu0 %v1028, 16
      %v1113 = vpop.permute.xlu0 %1112
      %1114 = vrot.lane.b32.xlu0 %v1029, 16
      %v1115 = vpop.permute.xlu0 %1114
      %1116 = vrot.lane.b32.xlu0 %v1030, 16
      %v1117 = vpop.permute.xlu0 %1116
      %1118 = vrot.lane.b32.xlu0 %v1031, 16
      %v1119 = vpop.permute.xlu0 %1118
      %1120 = vrot.lane.b32.xlu0 %v1032, 16
      %v1121 = vpop.permute.xlu0 %1120
      %1122 = vrot.lane.b32.xlu0 %v1033, 16
      %v1123 = vpop.permute.xlu0 %1122
      %1124 = vrot.lane.b32.xlu0 %v1034, 16
      %v1125 = vpop.permute.xlu0 %1124
      %1126 = vrot.lane.b32.xlu0 %v1035, 16
      %v1127 = vpop.permute.xlu0 %1126
      %1128 = vrot.lane.b32.xlu0 %v1036, 16
      %v1129 = vpop.permute.xlu0 %1128
      %1130 = vrot.lane.b32.xlu0 %v1037, 16
      %v1131 = vpop.permute.xlu0 %1130
      %1132 = vrot.lane.b32.xlu0 %v1038, 16
      %v1133 = vpop.permute.xlu0 %1132
      %1134 = vrot.lane.b32.xlu0 %v1039, 16
      %v1135 = vpop.permute.xlu0 %1134
      %vm1168 = vcmask 162944
      %1169 = vst.msk [vmem:[#allocation3] sm:$0xff] %vm1168, %v1073
      %1170 = vst.msk [vmem:[#allocation3 + $0x8] sm:$0xff] %vm1168, %v1075
      %1171 = vst.msk [vmem:[#allocation3 + $0x10] sm:$0xff] %vm1168, %v1077
      %1172 = vst.msk [vmem:[#allocation3 + $0x18] sm:$0xff] %vm1168, %v1079
      %1173 = vst.msk [vmem:[#allocation3 + $0x20] sm:$0xff] %vm1168, %v1081
      %1174 = vst.msk [vmem:[#allocation3 + $0x28] sm:$0xff] %vm1168, %v1083
      %1175 = vst.msk [vmem:[#allocation3 + $0x30] sm:$0xff] %vm1168, %v1085
      %1176 = vst.msk [vmem:[#allocation3 + $0x38] sm:$0xff] %vm1168, %v1087
      %1177 = vst.msk [vmem:[#allocation3 + $0x40] sm:$0xff] %vm1168, %v1089
      %1178 = vst.msk [vmem:[#allocation3 + $0x48] sm:$0xff] %vm1168, %v1091
      %1179 = vst.msk [vmem:[#allocation3 + $0x50] sm:$0xff] %vm1168, %v1093
      %1180 = vst.msk [vmem:[#allocation3 + $0x58] sm:$0xff] %vm1168, %v1095
      %1181 = vst.msk [vmem:[#allocation3 + $0x60] sm:$0xff] %vm1168, %v1097
      %1182 = vst.msk [vmem:[#allocation3 + $0x68] sm:$0xff] %vm1168, %v1099
      %1183 = vst.msk [vmem:[#allocation3 + $0x70] sm:$0xff] %vm1168, %v1101
      %1184 = vst.msk [vmem:[#allocation3 + $0x78] sm:$0xff] %vm1168, %v1103
      %1185 = vst.msk [vmem:[#allocation3 + $0x80] sm:$0xff] %vm1168, %v1105
      %1186 = vst.msk [vmem:[#allocation3 + $0x88] sm:$0xff] %vm1168, %v1107
      %1187 = vst.msk [vmem:[#allocation3 + $0x90] sm:$0xff] %vm1168, %v1109
      %1188 = vst.msk [vmem:[#allocation3 + $0x98] sm:$0xff] %vm1168, %v1111
      %1189 = vst.msk [vmem:[#allocation3 + $0xa0] sm:$0xff] %vm1168, %v1113
      %1190 = vst.msk [vmem:[#allocation3 + $0xa8] sm:$0xff] %vm1168, %v1115
      %1191 = vst.msk [vmem:[#allocation3 + $0xb0] sm:$0xff] %vm1168, %v1117
      %1192 = vst.msk [vmem:[#allocation3 + $0xb8] sm:$0xff] %vm1168, %v1119
      %1193 = vst.msk [vmem:[#allocation3 + $0xc0] sm:$0xff] %vm1168, %v1121
      %1194 = vst.msk [vmem:[#allocation3 + $0xc8] sm:$0xff] %vm1168, %v1123
      %1195 = vst.msk [vmem:[#allocation3 + $0xd0] sm:$0xff] %vm1168, %v1125
      %1196 = vst.msk [vmem:[#allocation3 + $0xd8] sm:$0xff] %vm1168, %v1127
      %1197 = vst.msk [vmem:[#allocation3 + $0xe0] sm:$0xff] %vm1168, %v1129
      %1198 = vst.msk [vmem:[#allocation3 + $0xe8] sm:$0xff] %vm1168, %v1131
      %1199 = vst.msk [vmem:[#allocation3 + $0xf0] sm:$0xff] %vm1168, %v1133
      %1200 = vst.msk [vmem:[#allocation3 + $0xf8] sm:$0xff] %vm1168, %v1135
      %v1201 = vld [vmem:[%s331 + $0x9] sm:$0xff]
      %v1202 = vld [vmem:[%s331 + $0x11] sm:$0xff]
      %v1203 = vld [vmem:[%s331 + $0x29] sm:$0xff]
      %v1204 = vld [vmem:[%s331 + $0x31] sm:$0xff]
      %v1205 = vld [vmem:[%s331 + $0x49] sm:$0xff]
      %v1206 = vld [vmem:[%s331 + $0x51] sm:$0xff]
      %v1207 = vld [vmem:[%s331 + $0x69] sm:$0xff]
      %v1208 = vld [vmem:[%s331 + $0x71] sm:$0xff]
      %v1209 = vld [vmem:[%s331 + $0x89] sm:$0xff]
      %v1210 = vld [vmem:[%s331 + $0x91] sm:$0xff]
      %v1211 = vld [vmem:[%s331 + $0xa9] sm:$0xff]
      %v1212 = vld [vmem:[%s331 + $0xb1] sm:$0xff]
      %v1213 = vld [vmem:[%s331 + $0xc9] sm:$0xff]
      %v1214 = vld [vmem:[%s331 + $0xd1] sm:$0xff]
      %v1215 = vld [vmem:[%s331 + $0xe9] sm:$0xff]
      %v1216 = vld [vmem:[%s331 + $0xf1] sm:$0xff]
      %v1217 = vld [vmem:[%s331 + $0x109] sm:$0xff]
      %v1218 = vld [vmem:[%s331 + $0x111] sm:$0xff]
      %v1219 = vld [vmem:[%s331 + $0x129] sm:$0xff]
      %v1220 = vld [vmem:[%s331 + $0x131] sm:$0xff]
      %v1221 = vld [vmem:[%s331 + $0x149] sm:$0xff]
      %v1222 = vld [vmem:[%s331 + $0x151] sm:$0xff]
      %v1223 = vld [vmem:[%s331 + $0x169] sm:$0xff]
      %v1224 = vld [vmem:[%s331 + $0x171] sm:$0xff]
      %v1225 = vld [vmem:[%s331 + $0x189] sm:$0xff]
      %v1226 = vld [vmem:[%s331 + $0x191] sm:$0xff]
      %v1227 = vld [vmem:[%s331 + $0x1a9] sm:$0xff]
      %v1228 = vld [vmem:[%s331 + $0x1b1] sm:$0xff]
      %v1229 = vld [vmem:[%s331 + $0x1c9] sm:$0xff]
      %v1230 = vld [vmem:[%s331 + $0x1d1] sm:$0xff]
      %v1231 = vld [vmem:[%s331 + $0x1e9] sm:$0xff]
      %v1232 = vld [vmem:[%s331 + $0x1f1] sm:$0xff]
      %1265 = vrot.lane.b32.xlu0 %v1201, 20
      %v1266 = vpop.permute.xlu0 %1265
      %1267 = vrot.lane.b32.xlu0 %v1202, 20
      %v1268 = vpop.permute.xlu0 %1267
      %1269 = vrot.lane.b32.xlu0 %v1203, 20
      %v1270 = vpop.permute.xlu0 %1269
      %1271 = vrot.lane.b32.xlu0 %v1204, 20
      %v1272 = vpop.permute.xlu0 %1271
      %1273 = vrot.lane.b32.xlu0 %v1205, 20
      %v1274 = vpop.permute.xlu0 %1273
      %1275 = vrot.lane.b32.xlu0 %v1206, 20
      %v1276 = vpop.permute.xlu0 %1275
      %1277 = vrot.lane.b32.xlu0 %v1207, 20
      %v1278 = vpop.permute.xlu0 %1277
      %1279 = vrot.lane.b32.xlu0 %v1208, 20
      %v1280 = vpop.permute.xlu0 %1279
      %1281 = vrot.lane.b32.xlu0 %v1209, 20
      %v1282 = vpop.permute.xlu0 %1281
      %1283 = vrot.lane.b32.xlu0 %v1210, 20
      %v1284 = vpop.permute.xlu0 %1283
      %1285 = vrot.lane.b32.xlu0 %v1211, 20
      %v1286 = vpop.permute.xlu0 %1285
      %1287 = vrot.lane.b32.xlu0 %v1212, 20
      %v1288 = vpop.permute.xlu0 %1287
      %1289 = vrot.lane.b32.xlu0 %v1213, 20
      %v1290 = vpop.permute.xlu0 %1289
      %1291 = vrot.lane.b32.xlu0 %v1214, 20
      %v1292 = vpop.permute.xlu0 %1291
      %1293 = vrot.lane.b32.xlu0 %v1215, 20
      %v1294 = vpop.permute.xlu0 %1293
      %1295 = vrot.lane.b32.xlu0 %v1216, 20
      %v1296 = vpop.permute.xlu0 %1295
      %1297 = vrot.lane.b32.xlu0 %v1217, 20
      %v1298 = vpop.permute.xlu0 %1297
      %1299 = vrot.lane.b32.xlu0 %v1218, 20
      %v1300 = vpop.permute.xlu0 %1299
      %1301 = vrot.lane.b32.xlu0 %v1219, 20
      %v1302 = vpop.permute.xlu0 %1301
      %1303 = vrot.lane.b32.xlu0 %v1220, 20
      %v1304 = vpop.permute.xlu0 %1303
      %1305 = vrot.lane.b32.xlu0 %v1221, 20
      %v1306 = vpop.permute.xlu0 %1305
      %1307 = vrot.lane.b32.xlu0 %v1222, 20
      %v1308 = vpop.permute.xlu0 %1307
      %1309 = vrot.lane.b32.xlu0 %v1223, 20
      %v1310 = vpop.permute.xlu0 %1309
      %1311 = vrot.lane.b32.xlu0 %v1224, 20
      %v1312 = vpop.permute.xlu0 %1311
      %1313 = vrot.lane.b32.xlu0 %v1225, 20
      %v1314 = vpop.permute.xlu0 %1313
      %1315 = vrot.lane.b32.xlu0 %v1226, 20
      %v1316 = vpop.permute.xlu0 %1315
      %1317 = vrot.lane.b32.xlu0 %v1227, 20
      %v1318 = vpop.permute.xlu0 %1317
      %1319 = vrot.lane.b32.xlu0 %v1228, 20
      %v1320 = vpop.permute.xlu0 %1319
      %1321 = vrot.lane.b32.xlu0 %v1229, 20
      %v1322 = vpop.permute.xlu0 %1321
      %1323 = vrot.lane.b32.xlu0 %v1230, 20
      %v1324 = vpop.permute.xlu0 %1323
      %1325 = vrot.lane.b32.xlu0 %v1231, 20
      %v1326 = vpop.permute.xlu0 %1325
      %1327 = vrot.lane.b32.xlu0 %v1232, 20
      %v1328 = vpop.permute.xlu0 %1327
      %vm1361 = vcmask 195744
      %1362 = vst.msk [vmem:[#allocation3] sm:$0xff] %vm1361, %v1266
      %1363 = vst.msk [vmem:[#allocation3 + $0x8] sm:$0xff] %vm1361, %v1268
      %1364 = vst.msk [vmem:[#allocation3 + $0x10] sm:$0xff] %vm1361, %v1270
      %1365 = vst.msk [vmem:[#allocation3 + $0x18] sm:$0xff] %vm1361, %v1272
      %1366 = vst.msk [vmem:[#allocation3 + $0x20] sm:$0xff] %vm1361, %v1274
      %1367 = vst.msk [vmem:[#allocation3 + $0x28] sm:$0xff] %vm1361, %v1276
      %1368 = vst.msk [vmem:[#allocation3 + $0x30] sm:$0xff] %vm1361, %v1278
      %1369 = vst.msk [vmem:[#allocation3 + $0x38] sm:$0xff] %vm1361, %v1280
      %1370 = vst.msk [vmem:[#allocation3 + $0x40] sm:$0xff] %vm1361, %v1282
      %1371 = vst.msk [vmem:[#allocation3 + $0x48] sm:$0xff] %vm1361, %v1284
      %1372 = vst.msk [vmem:[#allocation3 + $0x50] sm:$0xff] %vm1361, %v1286
      %1373 = vst.msk [vmem:[#allocation3 + $0x58] sm:$0xff] %vm1361, %v1288
      %1374 = vst.msk [vmem:[#allocation3 + $0x60] sm:$0xff] %vm1361, %v1290
      %1375 = vst.msk [vmem:[#allocation3 + $0x68] sm:$0xff] %vm1361, %v1292
      %1376 = vst.msk [vmem:[#allocation3 + $0x70] sm:$0xff] %vm1361, %v1294
      %1377 = vst.msk [vmem:[#allocation3 + $0x78] sm:$0xff] %vm1361, %v1296
      %1378 = vst.msk [vmem:[#allocation3 + $0x80] sm:$0xff] %vm1361, %v1298
      %1379 = vst.msk [vmem:[#allocation3 + $0x88] sm:$0xff] %vm1361, %v1300
      %1380 = vst.msk [vmem:[#allocation3 + $0x90] sm:$0xff] %vm1361, %v1302
      %1381 = vst.msk [vmem:[#allocation3 + $0x98] sm:$0xff] %vm1361, %v1304
      %1382 = vst.msk [vmem:[#allocation3 + $0xa0] sm:$0xff] %vm1361, %v1306
      %1383 = vst.msk [vmem:[#allocation3 + $0xa8] sm:$0xff] %vm1361, %v1308
      %1384 = vst.msk [vmem:[#allocation3 + $0xb0] sm:$0xff] %vm1361, %v1310
      %1385 = vst.msk [vmem:[#allocation3 + $0xb8] sm:$0xff] %vm1361, %v1312
      %1386 = vst.msk [vmem:[#allocation3 + $0xc0] sm:$0xff] %vm1361, %v1314
      %1387 = vst.msk [vmem:[#allocation3 + $0xc8] sm:$0xff] %vm1361, %v1316
      %1388 = vst.msk [vmem:[#allocation3 + $0xd0] sm:$0xff] %vm1361, %v1318
      %1389 = vst.msk [vmem:[#allocation3 + $0xd8] sm:$0xff] %vm1361, %v1320
      %1390 = vst.msk [vmem:[#allocation3 + $0xe0] sm:$0xff] %vm1361, %v1322
      %1391 = vst.msk [vmem:[#allocation3 + $0xe8] sm:$0xff] %vm1361, %v1324
      %1392 = vst.msk [vmem:[#allocation3 + $0xf0] sm:$0xff] %vm1361, %v1326
      %1393 = vst.msk [vmem:[#allocation3 + $0xf8] sm:$0xff] %vm1361, %v1328
      %s1394 = scalar_lea.vmem [#allocation2], 64
      %v1395 = vld [vmem:[%s1394 + $0x7] sm:$0xff]
      %v1396 = vld [vmem:[%s1394 + $0xf] sm:$0xff]
      %v1397 = vld [vmem:[%s1394 + $0x27] sm:$0xff]
      %v1398 = vld [vmem:[%s1394 + $0x2f] sm:$0xff]
      %v1399 = vld [vmem:[%s1394 + $0x47] sm:$0xff]
      %v1400 = vld [vmem:[%s1394 + $0x4f] sm:$0xff]
      %v1401 = vld [vmem:[%s1394 + $0x67] sm:$0xff]
      %v1402 = vld [vmem:[%s1394 + $0x6f] sm:$0xff]
      %v1403 = vld [vmem:[%s1394 + $0x87] sm:$0xff]
      %v1404 = vld [vmem:[%s1394 + $0x8f] sm:$0xff]
      %v1405 = vld [vmem:[%s1394 + $0xa7] sm:$0xff]
      %v1406 = vld [vmem:[%s1394 + $0xaf] sm:$0xff]
      %v1407 = vld [vmem:[%s1394 + $0xc7] sm:$0xff]
      %v1408 = vld [vmem:[%s1394 + $0xcf] sm:$0xff]
      %v1409 = vld [vmem:[%s1394 + $0xe7] sm:$0xff]
      %v1410 = vld [vmem:[%s1394 + $0xef] sm:$0xff]
      %v1411 = vld [vmem:[%s1394 + $0x107] sm:$0xff]
      %v1412 = vld [vmem:[%s1394 + $0x10f] sm:$0xff]
      %v1413 = vld [vmem:[%s1394 + $0x127] sm:$0xff]
      %v1414 = vld [vmem:[%s1394 + $0x12f] sm:$0xff]
      %v1415 = vld [vmem:[%s1394 + $0x147] sm:$0xff]
      %v1416 = vld [vmem:[%s1394 + $0x14f] sm:$0xff]
      %v1417 = vld [vmem:[%s1394 + $0x167] sm:$0xff]
      %v1418 = vld [vmem:[%s1394 + $0x16f] sm:$0xff]
      %v1419 = vld [vmem:[%s1394 + $0x187] sm:$0xff]
      %v1420 = vld [vmem:[%s1394 + $0x18f] sm:$0xff]
      %v1421 = vld [vmem:[%s1394 + $0x1a7] sm:$0xff]
      %v1422 = vld [vmem:[%s1394 + $0x1af] sm:$0xff]
      %v1423 = vld [vmem:[%s1394 + $0x1c7] sm:$0xff]
      %v1424 = vld [vmem:[%s1394 + $0x1cf] sm:$0xff]
      %v1425 = vld [vmem:[%s1394 + $0x1e7] sm:$0xff]
      %v1426 = vld [vmem:[%s1394 + $0x1ef] sm:$0xff]
      %1459 = vrot.lane.b32.xlu0 %v1395, 24
      %v1460 = vpop.permute.xlu0 %1459
      %1461 = vrot.lane.b32.xlu0 %v1396, 24
      %v1462 = vpop.permute.xlu0 %1461
      %1463 = vrot.lane.b32.xlu0 %v1397, 24
      %v1464 = vpop.permute.xlu0 %1463
      %1465 = vrot.lane.b32.xlu0 %v1398, 24
      %v1466 = vpop.permute.xlu0 %1465
      %1467 = vrot.lane.b32.xlu0 %v1399, 24
      %v1468 = vpop.permute.xlu0 %1467
      %1469 = vrot.lane.b32.xlu0 %v1400, 24
      %v1470 = vpop.permute.xlu0 %1469
      %1471 = vrot.lane.b32.xlu0 %v1401, 24
      %v1472 = vpop.permute.xlu0 %1471
      %1473 = vrot.lane.b32.xlu0 %v1402, 24
      %v1474 = vpop.permute.xlu0 %1473
      %1475 = vrot.lane.b32.xlu0 %v1403, 24
      %v1476 = vpop.permute.xlu0 %1475
      %1477 = vrot.lane.b32.xlu0 %v1404, 24
      %v1478 = vpop.permute.xlu0 %1477
      %1479 = vrot.lane.b32.xlu0 %v1405, 24
      %v1480 = vpop.permute.xlu0 %1479
      %1481 = vrot.lane.b32.xlu0 %v1406, 24
      %v1482 = vpop.permute.xlu0 %1481
      %1483 = vrot.lane.b32.xlu0 %v1407, 24
      %v1484 = vpop.permute.xlu0 %1483
      %1485 = vrot.lane.b32.xlu0 %v1408, 24
      %v1486 = vpop.permute.xlu0 %1485
      %1487 = vrot.lane.b32.xlu0 %v1409, 24
      %v1488 = vpop.permute.xlu0 %1487
      %1489 = vrot.lane.b32.xlu0 %v1410, 24
      %v1490 = vpop.permute.xlu0 %1489
      %1491 = vrot.lane.b32.xlu0 %v1411, 24
      %v1492 = vpop.permute.xlu0 %1491
      %1493 = vrot.lane.b32.xlu0 %v1412, 24
      %v1494 = vpop.permute.xlu0 %1493
      %1495 = vrot.lane.b32.xlu0 %v1413, 24
      %v1496 = vpop.permute.xlu0 %1495
      %1497 = vrot.lane.b32.xlu0 %v1414, 24
      %v1498 = vpop.permute.xlu0 %1497
      %1499 = vrot.lane.b32.xlu0 %v1415, 24
      %v1500 = vpop.permute.xlu0 %1499
      %1501 = vrot.lane.b32.xlu0 %v1416, 24
      %v1502 = vpop.permute.xlu0 %1501
      %1503 = vrot.lane.b32.xlu0 %v1417, 24
      %v1504 = vpop.permute.xlu0 %1503
      %1505 = vrot.lane.b32.xlu0 %v1418, 24
      %v1506 = vpop.permute.xlu0 %1505
      %1507 = vrot.lane.b32.xlu0 %v1419, 24
      %v1508 = vpop.permute.xlu0 %1507
      %1509 = vrot.lane.b32.xlu0 %v1420, 24
      %v1510 = vpop.permute.xlu0 %1509
      %1511 = vrot.lane.b32.xlu0 %v1421, 24
      %v1512 = vpop.permute.xlu0 %1511
      %1513 = vrot.lane.b32.xlu0 %v1422, 24
      %v1514 = vpop.permute.xlu0 %1513
      %1515 = vrot.lane.b32.xlu0 %v1423, 24
      %v1516 = vpop.permute.xlu0 %1515
      %1517 = vrot.lane.b32.xlu0 %v1424, 24
      %v1518 = vpop.permute.xlu0 %1517
      %1519 = vrot.lane.b32.xlu0 %v1425, 24
      %v1520 = vpop.permute.xlu0 %1519
      %1521 = vrot.lane.b32.xlu0 %v1426, 24
      %v1522 = vpop.permute.xlu0 %1521
      %vm1555 = vcmask 228544
      %1556 = vst.msk [vmem:[#allocation3] sm:$0xff] %vm1555, %v1460
      %1557 = vst.msk [vmem:[#allocation3 + $0x8] sm:$0xff] %vm1555, %v1462
      %1558 = vst.msk [vmem:[#allocation3 + $0x10] sm:$0xff] %vm1555, %v1464
      %1559 = vst.msk [vmem:[#allocation3 + $0x18] sm:$0xff] %vm1555, %v1466
      %1560 = vst.msk [vmem:[#allocation3 + $0x20] sm:$0xff] %vm1555, %v1468
      %1561 = vst.msk [vmem:[#allocation3 + $0x28] sm:$0xff] %vm1555, %v1470
      %1562 = vst.msk [vmem:[#allocation3 + $0x30] sm:$0xff] %vm1555, %v1472
      %1563 = vst.msk [vmem:[#allocation3 + $0x38] sm:$0xff] %vm1555, %v1474
      %1564 = vst.msk [vmem:[#allocation3 + $0x40] sm:$0xff] %vm1555, %v1476
      %1565 = vst.msk [vmem:[#allocation3 + $0x48] sm:$0xff] %vm1555, %v1478
      %1566 = vst.msk [vmem:[#allocation3 + $0x50] sm:$0xff] %vm1555, %v1480
      %1567 = vst.msk [vmem:[#allocation3 + $0x58] sm:$0xff] %vm1555, %v1482
      %1568 = vst.msk [vmem:[#allocation3 + $0x60] sm:$0xff] %vm1555, %v1484
      %1569 = vst.msk [vmem:[#allocation3 + $0x68] sm:$0xff] %vm1555, %v1486
      %1570 = vst.msk [vmem:[#allocation3 + $0x70] sm:$0xff] %vm1555, %v1488
      %1571 = vst.msk [vmem:[#allocation3 + $0x78] sm:$0xff] %vm1555, %v1490
      %1572 = vst.msk [vmem:[#allocation3 + $0x80] sm:$0xff] %vm1555, %v1492
      %1573 = vst.msk [vmem:[#allocation3 + $0x88] sm:$0xff] %vm1555, %v1494
      %1574 = vst.msk [vmem:[#allocation3 + $0x90] sm:$0xff] %vm1555, %v1496
      %1575 = vst.msk [vmem:[#allocation3 + $0x98] sm:$0xff] %vm1555, %v1498
      %1576 = vst.msk [vmem:[#allocation3 + $0xa0] sm:$0xff] %vm1555, %v1500
      %1577 = vst.msk [vmem:[#allocation3 + $0xa8] sm:$0xff] %vm1555, %v1502
      %1578 = vst.msk [vmem:[#allocation3 + $0xb0] sm:$0xff] %vm1555, %v1504
      %1579 = vst.msk [vmem:[#allocation3 + $0xb8] sm:$0xff] %vm1555, %v1506
      %1580 = vst.msk [vmem:[#allocation3 + $0xc0] sm:$0xff] %vm1555, %v1508
      %1581 = vst.msk [vmem:[#allocation3 + $0xc8] sm:$0xff] %vm1555, %v1510
      %1582 = vst.msk [vmem:[#allocation3 + $0xd0] sm:$0xff] %vm1555, %v1512
      %1583 = vst.msk [vmem:[#allocation3 + $0xd8] sm:$0xff] %vm1555, %v1514
      %1584 = vst.msk [vmem:[#allocation3 + $0xe0] sm:$0xff] %vm1555, %v1516
      %1585 = vst.msk [vmem:[#allocation3 + $0xe8] sm:$0xff] %vm1555, %v1518
      %1586 = vst.msk [vmem:[#allocation3 + $0xf0] sm:$0xff] %vm1555, %v1520
      %1587 = vst.msk [vmem:[#allocation3 + $0xf8] sm:$0xff] %vm1555, %v1522
      %v1588 = vld [vmem:[%s1394 + $0x8] sm:$0xff]
      %v1589 = vld [vmem:[%s1394 + $0x10] sm:$0xff]
      %v1590 = vld [vmem:[%s1394 + $0x28] sm:$0xff]
      %v1591 = vld [vmem:[%s1394 + $0x30] sm:$0xff]
      %v1592 = vld [vmem:[%s1394 + $0x48] sm:$0xff]
      %v1593 = vld [vmem:[%s1394 + $0x50] sm:$0xff]
      %v1594 = vld [vmem:[%s1394 + $0x68] sm:$0xff]
      %v1595 = vld [vmem:[%s1394 + $0x70] sm:$0xff]
      %v1596 = vld [vmem:[%s1394 + $0x88] sm:$0xff]
      %v1597 = vld [vmem:[%s1394 + $0x90] sm:$0xff]
      %v1598 = vld [vmem:[%s1394 + $0xa8] sm:$0xff]
      %v1599 = vld [vmem:[%s1394 + $0xb0] sm:$0xff]
      %v1600 = vld [vmem:[%s1394 + $0xc8] sm:$0xff]
      %v1601 = vld [vmem:[%s1394 + $0xd0] sm:$0xff]
      %v1602 = vld [vmem:[%s1394 + $0xe8] sm:$0xff]
      %v1603 = vld [vmem:[%s1394 + $0xf0] sm:$0xff]
      %v1604 = vld [vmem:[%s1394 + $0x108] sm:$0xff]
      %v1605 = vld [vmem:[%s1394 + $0x110] sm:$0xff]
      %v1606 = vld [vmem:[%s1394 + $0x128] sm:$0xff]
      %v1607 = vld [vmem:[%s1394 + $0x130] sm:$0xff]
      %v1608 = vld [vmem:[%s1394 + $0x148] sm:$0xff]
      %v1609 = vld [vmem:[%s1394 + $0x150] sm:$0xff]
      %v1610 = vld [vmem:[%s1394 + $0x168] sm:$0xff]
      %v1611 = vld [vmem:[%s1394 + $0x170] sm:$0xff]
      %v1612 = vld [vmem:[%s1394 + $0x188] sm:$0xff]
      %v1613 = vld [vmem:[%s1394 + $0x190] sm:$0xff]
      %v1614 = vld [vmem:[%s1394 + $0x1a8] sm:$0xff]
      %v1615 = vld [vmem:[%s1394 + $0x1b0] sm:$0xff]
      %v1616 = vld [vmem:[%s1394 + $0x1c8] sm:$0xff]
      %v1617 = vld [vmem:[%s1394 + $0x1d0] sm:$0xff]
      %v1618 = vld [vmem:[%s1394 + $0x1e8] sm:$0xff]
      %v1619 = vld [vmem:[%s1394 + $0x1f0] sm:$0xff]
      %1652 = vrot.lane.b32.xlu0 %v1588, 28
      %v1653 = vpop.permute.xlu0 %1652
      %1654 = vrot.lane.b32.xlu0 %v1589, 28
      %v1655 = vpop.permute.xlu0 %1654
      %1656 = vrot.lane.b32.xlu0 %v1590, 28
      %v1657 = vpop.permute.xlu0 %1656
      %1658 = vrot.lane.b32.xlu0 %v1591, 28
      %v1659 = vpop.permute.xlu0 %1658
      %1660 = vrot.lane.b32.xlu0 %v1592, 28
      %v1661 = vpop.permute.xlu0 %1660
      %1662 = vrot.lane.b32.xlu0 %v1593, 28
      %v1663 = vpop.permute.xlu0 %1662
      %1664 = vrot.lane.b32.xlu0 %v1594, 28
      %v1665 = vpop.permute.xlu0 %1664
      %1666 = vrot.lane.b32.xlu0 %v1595, 28
      %v1667 = vpop.permute.xlu0 %1666
      %1668 = vrot.lane.b32.xlu0 %v1596, 28
      %v1669 = vpop.permute.xlu0 %1668
      %1670 = vrot.lane.b32.xlu0 %v1597, 28
      %v1671 = vpop.permute.xlu0 %1670
      %1672 = vrot.lane.b32.xlu0 %v1598, 28
      %v1673 = vpop.permute.xlu0 %1672
      %1674 = vrot.lane.b32.xlu0 %v1599, 28
      %v1675 = vpop.permute.xlu0 %1674
      %1676 = vrot.lane.b32.xlu0 %v1600, 28
      %v1677 = vpop.permute.xlu0 %1676
      %1678 = vrot.lane.b32.xlu0 %v1601, 28
      %v1679 = vpop.permute.xlu0 %1678
      %1680 = vrot.lane.b32.xlu0 %v1602, 28
      %v1681 = vpop.permute.xlu0 %1680
      %1682 = vrot.lane.b32.xlu0 %v1603, 28
      %v1683 = vpop.permute.xlu0 %1682
      %1684 = vrot.lane.b32.xlu0 %v1604, 28
      %v1685 = vpop.permute.xlu0 %1684
      %1686 = vrot.lane.b32.xlu0 %v1605, 28
      %v1687 = vpop.permute.xlu0 %1686
      %1688 = vrot.lane.b32.xlu0 %v1606, 28
      %v1689 = vpop.permute.xlu0 %1688
      %1690 = vrot.lane.b32.xlu0 %v1607, 28
      %v1691 = vpop.permute.xlu0 %1690
      %1692 = vrot.lane.b32.xlu0 %v1608, 28
      %v1693 = vpop.permute.xlu0 %1692
      %1694 = vrot.lane.b32.xlu0 %v1609, 28
      %v1695 = vpop.permute.xlu0 %1694
      %1696 = vrot.lane.b32.xlu0 %v1610, 28
      %v1697 = vpop.permute.xlu0 %1696
      %1698 = vrot.lane.b32.xlu0 %v1611, 28
      %v1699 = vpop.permute.xlu0 %1698
      %1700 = vrot.lane.b32.xlu0 %v1612, 28
      %v1701 = vpop.permute.xlu0 %1700
      %1702 = vrot.lane.b32.xlu0 %v1613, 28
      %v1703 = vpop.permute.xlu0 %1702
      %1704 = vrot.lane.b32.xlu0 %v1614, 28
      %v1705 = vpop.permute.xlu0 %1704
      %1706 = vrot.lane.b32.xlu0 %v1615, 28
      %v1707 = vpop.permute.xlu0 %1706
      %1708 = vrot.lane.b32.xlu0 %v1616, 28
      %v1709 = vpop.permute.xlu0 %1708
      %1710 = vrot.lane.b32.xlu0 %v1617, 28
      %v1711 = vpop.permute.xlu0 %1710
      %1712 = vrot.lane.b32.xlu0 %v1618, 28
      %v1713 = vpop.permute.xlu0 %1712
      %1714 = vrot.lane.b32.xlu0 %v1619, 28
      %v1715 = vpop.permute.xlu0 %1714
      %vm1748 = vcmask 261344
      %1749 = vst.msk [vmem:[#allocation3] sm:$0xff] %vm1748, %v1653
      %1750 = vst.msk [vmem:[#allocation3 + $0x8] sm:$0xff] %vm1748, %v1655
      %1751 = vst.msk [vmem:[#allocation3 + $0x10] sm:$0xff] %vm1748, %v1657
      %1752 = vst.msk [vmem:[#allocation3 + $0x18] sm:$0xff] %vm1748, %v1659
      %1753 = vst.msk [vmem:[#allocation3 + $0x20] sm:$0xff] %vm1748, %v1661
      %1754 = vst.msk [vmem:[#allocation3 + $0x28] sm:$0xff] %vm1748, %v1663
      %1755 = vst.msk [vmem:[#allocation3 + $0x30] sm:$0xff] %vm1748, %v1665
      %1756 = vst.msk [vmem:[#allocation3 + $0x38] sm:$0xff] %vm1748, %v1667
      %1757 = vst.msk [vmem:[#allocation3 + $0x40] sm:$0xff] %vm1748, %v1669
      %1758 = vst.msk [vmem:[#allocation3 + $0x48] sm:$0xff] %vm1748, %v1671
      %1759 = vst.msk [vmem:[#allocation3 + $0x50] sm:$0xff] %vm1748, %v1673
      %1760 = vst.msk [vmem:[#allocation3 + $0x58] sm:$0xff] %vm1748, %v1675
      %1761 = vst.msk [vmem:[#allocation3 + $0x60] sm:$0xff] %vm1748, %v1677
      %1762 = vst.msk [vmem:[#allocation3 + $0x68] sm:$0xff] %vm1748, %v1679
      %1763 = vst.msk [vmem:[#allocation3 + $0x70] sm:$0xff] %vm1748, %v1681
      %1764 = vst.msk [vmem:[#allocation3 + $0x78] sm:$0xff] %vm1748, %v1683
      %1765 = vst.msk [vmem:[#allocation3 + $0x80] sm:$0xff] %vm1748, %v1685
      %1766 = vst.msk [vmem:[#allocation3 + $0x88] sm:$0xff] %vm1748, %v1687
      %1767 = vst.msk [vmem:[#allocation3 + $0x90] sm:$0xff] %vm1748, %v1689
      %1768 = vst.msk [vmem:[#allocation3 + $0x98] sm:$0xff] %vm1748, %v1691
      %1769 = vst.msk [vmem:[#allocation3 + $0xa0] sm:$0xff] %vm1748, %v1693
      %1770 = vst.msk [vmem:[#allocation3 + $0xa8] sm:$0xff] %vm1748, %v1695
      %1771 = vst.msk [vmem:[#allocation3 + $0xb0] sm:$0xff] %vm1748, %v1697
      %1772 = vst.msk [vmem:[#allocation3 + $0xb8] sm:$0xff] %vm1748, %v1699
      %1773 = vst.msk [vmem:[#allocation3 + $0xc0] sm:$0xff] %vm1748, %v1701
      %1774 = vst.msk [vmem:[#allocation3 + $0xc8] sm:$0xff] %vm1748, %v1703
      %1775 = vst.msk [vmem:[#allocation3 + $0xd0] sm:$0xff] %vm1748, %v1705
      %1776 = vst.msk [vmem:[#allocation3 + $0xd8] sm:$0xff] %vm1748, %v1707
      %1777 = vst.msk [vmem:[#allocation3 + $0xe0] sm:$0xff] %vm1748, %v1709
      %1778 = vst.msk [vmem:[#allocation3 + $0xe8] sm:$0xff] %vm1748, %v1711
      %1779 = vst.msk [vmem:[#allocation3 + $0xf0] sm:$0xff] %vm1748, %v1713
      %1780 = vst.msk [vmem:[#allocation3 + $0xf8] sm:$0xff] %vm1748, %v1715
      %v1781 = vld [vmem:[%s1394 + $0x9] sm:$0xff]
      %v1782 = vld [vmem:[%s1394 + $0x11] sm:$0xff]
      %v1783 = vld [vmem:[%s1394 + $0x29] sm:$0xff]
      %v1784 = vld [vmem:[%s1394 + $0x31] sm:$0xff]
      %v1785 = vld [vmem:[%s1394 + $0x49] sm:$0xff]
      %v1786 = vld [vmem:[%s1394 + $0x51] sm:$0xff]
      %v1787 = vld [vmem:[%s1394 + $0x69] sm:$0xff]
      %v1788 = vld [vmem:[%s1394 + $0x71] sm:$0xff]
      %v1789 = vld [vmem:[%s1394 + $0x89] sm:$0xff]
      %v1790 = vld [vmem:[%s1394 + $0x91] sm:$0xff]
      %v1791 = vld [vmem:[%s1394 + $0xa9] sm:$0xff]
      %v1792 = vld [vmem:[%s1394 + $0xb1] sm:$0xff]
      %v1793 = vld [vmem:[%s1394 + $0xc9] sm:$0xff]
      %v1794 = vld [vmem:[%s1394 + $0xd1] sm:$0xff]
      %v1795 = vld [vmem:[%s1394 + $0xe9] sm:$0xff]
      %v1796 = vld [vmem:[%s1394 + $0xf1] sm:$0xff]
      %v1797 = vld [vmem:[%s1394 + $0x109] sm:$0xff]
      %v1798 = vld [vmem:[%s1394 + $0x111] sm:$0xff]
      %v1799 = vld [vmem:[%s1394 + $0x129] sm:$0xff]
      %v1800 = vld [vmem:[%s1394 + $0x131] sm:$0xff]
      %v1801 = vld [vmem:[%s1394 + $0x149] sm:$0xff]
      %v1802 = vld [vmem:[%s1394 + $0x151] sm:$0xff]
      %v1803 = vld [vmem:[%s1394 + $0x169] sm:$0xff]
      %v1804 = vld [vmem:[%s1394 + $0x171] sm:$0xff]
      %v1805 = vld [vmem:[%s1394 + $0x189] sm:$0xff]
      %v1806 = vld [vmem:[%s1394 + $0x191] sm:$0xff]
      %v1807 = vld [vmem:[%s1394 + $0x1a9] sm:$0xff]
      %v1808 = vld [vmem:[%s1394 + $0x1b1] sm:$0xff]
      %v1809 = vld [vmem:[%s1394 + $0x1c9] sm:$0xff]
      %v1810 = vld [vmem:[%s1394 + $0x1d1] sm:$0xff]
      %v1811 = vld [vmem:[%s1394 + $0x1e9] sm:$0xff]
      %v1812 = vld [vmem:[%s1394 + $0x1f1] sm:$0xff]
      %1845 = vrot.lane.b32.xlu0 %v1781, 32
      %v1846 = vpop.permute.xlu0 %1845
      %1847 = vrot.lane.b32.xlu0 %v1782, 32
      %v1848 = vpop.permute.xlu0 %1847
      %1849 = vrot.lane.b32.xlu0 %v1783, 32
      %v1850 = vpop.permute.xlu0 %1849
      %1851 = vrot.lane.b32.xlu0 %v1784, 32
      %v1852 = vpop.permute.xlu0 %1851
      %1853 = vrot.lane.b32.xlu0 %v1785, 32
      %v1854 = vpop.permute.xlu0 %1853
      %1855 = vrot.lane.b32.xlu0 %v1786, 32
      %v1856 = vpop.permute.xlu0 %1855
      %1857 = vrot.lane.b32.xlu0 %v1787, 32
      %v1858 = vpop.permute.xlu0 %1857
      %1859 = vrot.lane.b32.xlu0 %v1788, 32
      %v1860 = vpop.permute.xlu0 %1859
      %1861 = vrot.lane.b32.xlu0 %v1789, 32
      %v1862 = vpop.permute.xlu0 %1861
      %1863 = vrot.lane.b32.xlu0 %v1790, 32
      %v1864 = vpop.permute.xlu0 %1863
      %1865 = vrot.lane.b32.xlu0 %v1791, 32
      %v1866 = vpop.permute.xlu0 %1865
      %1867 = vrot.lane.b32.xlu0 %v1792, 32
      %v1868 = vpop.permute.xlu0 %1867
      %1869 = vrot.lane.b32.xlu0 %v1793, 32
      %v1870 = vpop.permute.xlu0 %1869
      %1871 = vrot.lane.b32.xlu0 %v1794, 32
      %v1872 = vpop.permute.xlu0 %1871
      %1873 = vrot.lane.b32.xlu0 %v1795, 32
      %v1874 = vpop.permute.xlu0 %1873
      %1875 = vrot.lane.b32.xlu0 %v1796, 32
      %v1876 = vpop.permute.xlu0 %1875
      %1877 = vrot.lane.b32.xlu0 %v1797, 32
      %v1878 = vpop.permute.xlu0 %1877
      %1879 = vrot.lane.b32.xlu0 %v1798, 32
      %v1880 = vpop.permute.xlu0 %1879
      %1881 = vrot.lane.b32.xlu0 %v1799, 32
      %v1882 = vpop.permute.xlu0 %1881
      %1883 = vrot.lane.b32.xlu0 %v1800, 32
      %v1884 = vpop.permute.xlu0 %1883
      %1885 = vrot.lane.b32.xlu0 %v1801, 32
      %v1886 = vpop.permute.xlu0 %1885
      %1887 = vrot.lane.b32.xlu0 %v1802, 32
      %v1888 = vpop.permute.xlu0 %1887
      %1889 = vrot.lane.b32.xlu0 %v1803, 32
      %v1890 = vpop.permute.xlu0 %1889
      %1891 = vrot.lane.b32.xlu0 %v1804, 32
      %v1892 = vpop.permute.xlu0 %1891
      %1893 = vrot.lane.b32.xlu0 %v1805, 32
      %v1894 = vpop.permute.xlu0 %1893
      %1895 = vrot.lane.b32.xlu0 %v1806, 32
      %v1896 = vpop.permute.xlu0 %1895
      %1897 = vrot.lane.b32.xlu0 %v1807, 32
      %v1898 = vpop.permute.xlu0 %1897
      %1899 = vrot.lane.b32.xlu0 %v1808, 32
      %v1900 = vpop.permute.xlu0 %1899
      %1901 = vrot.lane.b32.xlu0 %v1809, 32
      %v1902 = vpop.permute.xlu0 %1901
      %1903 = vrot.lane.b32.xlu0 %v1810, 32
      %v1904 = vpop.permute.xlu0 %1903
      %1905 = vrot.lane.b32.xlu0 %v1811, 32
      %v1906 = vpop.permute.xlu0 %1905
      %1907 = vrot.lane.b32.xlu0 %v1812, 32
      %v1908 = vpop.permute.xlu0 %1907
      %vm1941 = vcmask 294144
      %1942 = vst.msk [vmem:[#allocation3] sm:$0xff] %vm1941, %v1846
      %1943 = vst.msk [vmem:[#allocation3 + $0x8] sm:$0xff] %vm1941, %v1848
      %1944 = vst.msk [vmem:[#allocation3 + $0x10] sm:$0xff] %vm1941, %v1850
      %1945 = vst.msk [vmem:[#allocation3 + $0x18] sm:$0xff] %vm1941, %v1852
      %1946 = vst.msk [vmem:[#allocation3 + $0x20] sm:$0xff] %vm1941, %v1854
      %1947 = vst.msk [vmem:[#allocation3 + $0x28] sm:$0xff] %vm1941, %v1856
      %1948 = vst.msk [vmem:[#allocation3 + $0x30] sm:$0xff] %vm1941, %v1858
      %1949 = vst.msk [vmem:[#allocation3 + $0x38] sm:$0xff] %vm1941, %v1860
      %1950 = vst.msk [vmem:[#allocation3 + $0x40] sm:$0xff] %vm1941, %v1862
      %1951 = vst.msk [vmem:[#allocation3 + $0x48] sm:$0xff] %vm1941, %v1864
      %1952 = vst.msk [vmem:[#allocation3 + $0x50] sm:$0xff] %vm1941, %v1866
      %1953 = vst.msk [vmem:[#allocation3 + $0x58] sm:$0xff] %vm1941, %v1868
      %1954 = vst.msk [vmem:[#allocation3 + $0x60] sm:$0xff] %vm1941, %v1870
      %1955 = vst.msk [vmem:[#allocation3 + $0x68] sm:$0xff] %vm1941, %v1872
      %1956 = vst.msk [vmem:[#allocation3 + $0x70] sm:$0xff] %vm1941, %v1874
      %1957 = vst.msk [vmem:[#allocation3 + $0x78] sm:$0xff] %vm1941, %v1876
      %1958 = vst.msk [vmem:[#allocation3 + $0x80] sm:$0xff] %vm1941, %v1878
      %1959 = vst.msk [vmem:[#allocation3 + $0x88] sm:$0xff] %vm1941, %v1880
      %1960 = vst.msk [vmem:[#allocation3 + $0x90] sm:$0xff] %vm1941, %v1882
      %1961 = vst.msk [vmem:[#allocation3 + $0x98] sm:$0xff] %vm1941, %v1884
      %1962 = vst.msk [vmem:[#allocation3 + $0xa0] sm:$0xff] %vm1941, %v1886
      %1963 = vst.msk [vmem:[#allocation3 + $0xa8] sm:$0xff] %vm1941, %v1888
      %1964 = vst.msk [vmem:[#allocation3 + $0xb0] sm:$0xff] %vm1941, %v1890
      %1965 = vst.msk [vmem:[#allocation3 + $0xb8] sm:$0xff] %vm1941, %v1892
      %1966 = vst.msk [vmem:[#allocation3 + $0xc0] sm:$0xff] %vm1941, %v1894
      %1967 = vst.msk [vmem:[#allocation3 + $0xc8] sm:$0xff] %vm1941, %v1896
      %1968 = vst.msk [vmem:[#allocation3 + $0xd0] sm:$0xff] %vm1941, %v1898
      %1969 = vst.msk [vmem:[#allocation3 + $0xd8] sm:$0xff] %vm1941, %v1900
      %1970 = vst.msk [vmem:[#allocation3 + $0xe0] sm:$0xff] %vm1941, %v1902
      %1971 = vst.msk [vmem:[#allocation3 + $0xe8] sm:$0xff] %vm1941, %v1904
      %1972 = vst.msk [vmem:[#allocation3 + $0xf0] sm:$0xff] %vm1941, %v1906
      %1973 = vst.msk [vmem:[#allocation3 + $0xf8] sm:$0xff] %vm1941, %v1908
      %v1974 = vld [vmem:[#allocation3] sm:$0xff]
      %v1975 = vld [vmem:[#allocation3 + $0x8] sm:$0xff]
      %v1976 = vld [vmem:[#allocation3 + $0x10] sm:$0xff]
      %v1977 = vld [vmem:[#allocation3 + $0x18] sm:$0xff]
      %v1978 = vld [vmem:[#allocation3 + $0x20] sm:$0xff]
      %v1979 = vld [vmem:[#allocation3 + $0x28] sm:$0xff]
      %v1980 = vld [vmem:[#allocation3 + $0x30] sm:$0xff]
      %v1981 = vld [vmem:[#allocation3 + $0x38] sm:$0xff]
      %v1982 = vld [vmem:[#allocation3 + $0x40] sm:$0xff]
      %v1983 = vld [vmem:[#allocation3 + $0x48] sm:$0xff]
      %v1984 = vld [vmem:[#allocation3 + $0x50] sm:$0xff]
      %v1985 = vld [vmem:[#allocation3 + $0x58] sm:$0xff]
      %v1986 = vld [vmem:[#allocation3 + $0x60] sm:$0xff]
      %v1987 = vld [vmem:[#allocation3 + $0x68] sm:$0xff]
      %v1988 = vld [vmem:[#allocation3 + $0x70] sm:$0xff]
      %v1989 = vld [vmem:[#allocation3 + $0x78] sm:$0xff]
      %v1990 = vld [vmem:[#allocation3 + $0x80] sm:$0xff]
      %v1991 = vld [vmem:[#allocation3 + $0x88] sm:$0xff]
      %v1992 = vld [vmem:[#allocation3 + $0x90] sm:$0xff]
      %v1993 = vld [vmem:[#allocation3 + $0x98] sm:$0xff]
      %v1994 = vld [vmem:[#allocation3 + $0xa0] sm:$0xff]
      %v1995 = vld [vmem:[#allocation3 + $0xa8] sm:$0xff]
      %v1996 = vld [vmem:[#allocation3 + $0xb0] sm:$0xff]
      %v1997 = vld [vmem:[#allocation3 + $0xb8] sm:$0xff]
      %v1998 = vld [vmem:[#allocation3 + $0xc0] sm:$0xff]
      %v1999 = vld [vmem:[#allocation3 + $0xc8] sm:$0xff]
      %v2000 = vld [vmem:[#allocation3 + $0xd0] sm:$0xff]
      %v2001 = vld [vmem:[#allocation3 + $0xd8] sm:$0xff]
      %v2002 = vld [vmem:[#allocation3 + $0xe0] sm:$0xff]
      %v2003 = vld [vmem:[#allocation3 + $0xe8] sm:$0xff]
      %v2004 = vld [vmem:[#allocation3 + $0xf0] sm:$0xff]
      %v2005 = vld [vmem:[#allocation3 + $0xf8] sm:$0xff]
      %v2006 = vld [vmem:[%s1] sm:$0xff]
      %v2007 = vld [vmem:[%s1 + $0x8] sm:$0xff]
      %v2008 = vld [vmem:[%s1 + $0x10] sm:$0xff]
      %v2009 = vld [vmem:[%s1 + $0x18] sm:$0xff]
      %v2010 = vld [vmem:[%s1 + $0x20] sm:$0xf]
      %v2011 = vld [vmem:[%s2] sm:$0x1]
      %v2013 = vlaneseq
      %v2014 = vshrl.u32 %v2013, 7
      %v2015 = vsub.s32 0, %v2014
      %v2016 = vrot.slane %v2011, %v2015
      %vm2018 = vcmask 293888
      %v2020 = vsel %vm2018, %v1974, 0
      %v2023 = vsel %vm2018, %v1975, 0
      %v2026 = vsel %vm2018, %v1976, 0
      %v2029 = vsel %vm2018, %v1977, 0
      %v2032 = vsel %vm2018, %v1978, 0
      %v2035 = vsel %vm2018, %v1979, 0
      %v2038 = vsel %vm2018, %v1980, 0
      %v2041 = vsel %vm2018, %v1981, 0
      %v2044 = vsel %vm2018, %v1982, 0
      %v2047 = vsel %vm2018, %v1983, 0
      %v2050 = vsel %vm2018, %v1984, 0
      %v2053 = vsel %vm2018, %v1985, 0
      %v2056 = vsel %vm2018, %v1986, 0
      %v2059 = vsel %vm2018, %v1987, 0
      %v2062 = vsel %vm2018, %v1988, 0
      %v2065 = vsel %vm2018, %v1989, 0
      %v2068 = vsel %vm2018, %v1990, 0
      %v2071 = vsel %vm2018, %v1991, 0
      %v2074 = vsel %vm2018, %v1992, 0
      %v2077 = vsel %vm2018, %v1993, 0
      %v2080 = vsel %vm2018, %v1994, 0
      %v2083 = vsel %vm2018, %v1995, 0
      %v2086 = vsel %vm2018, %v1996, 0
      %v2089 = vsel %vm2018, %v1997, 0
      %v2092 = vsel %vm2018, %v1998, 0
      %v2095 = vsel %vm2018, %v1999, 0
      %v2098 = vsel %vm2018, %v2000, 0
      %v2101 = vsel %vm2018, %v2001, 0
      %v2104 = vsel %vm2018, %v2002, 0
      %v2107 = vsel %vm2018, %v2003, 0
      %v2110 = vsel %vm2018, %v2004, 0
      %v2113 = vsel %vm2018, %v2005, 0
      %vm2115 = vcmask 1043456
      %v2117 = vsel %vm2115, %v2010, 0
      %2119 = vmatprep.subr.mxu0 0.0
      %2120 = vmatpush1.msra.mxu0 %v2006
      %2121 = vmatprep.subr.mxu0 0.0
      %2122 = vmatpush1.msra.mxu0 %v2007
      %2123 = vmatprep.subr.mxu0 0.0
      %2124 = vmatpush1.msra.mxu0 %v2008
      %2125 = vmatprep.subr.mxu0 0.0
      %2126 = vmatpush1.msra.mxu0 %v2009
      %2127 = vmatprep.subr.mxu0 0.0
      %2128 = vmatpush1.msra.mxu0 %v2117
      %2129 = vmatprep.subr.mxu0 0.0
      %2130 = vmatpush1.msra.mxu0 0.0
      %2131 = vmatprep.subr.mxu0 0.0
      %2132 = vmatpush1.msra.mxu0 0.0
      %2133 = vmatprep.subr.mxu0 0.0
      %2134 = vmatpush1.msra.mxu0 0.0
      %2135 = vmatprep.subr.mxu0 0.0
      %2136 = vmatpush1.msra.mxu0 0.0
      %2137 = vmatprep.subr.mxu0 0.0
      %2138 = vmatpush1.msra.mxu0 0.0
      %2139 = vmatprep.subr.mxu0 0.0
      %2140 = vmatpush1.msra.mxu0 0.0
      %2141 = vmatprep.subr.mxu0 0.0
      %2142 = vmatpush1.msra.mxu0 0.0
      %2143 = vmatprep.subr.mxu0 0.0
      %2144 = vmatpush1.msra.mxu0 0.0
      %2145 = vmatprep.subr.mxu0 0.0
      %2146 = vmatpush1.msra.mxu0 0.0
      %2147 = vmatprep.subr.mxu0 0.0
      %2148 = vmatpush1.msra.mxu0 0.0
      %2149 = vmatprep.subr.mxu0 0.0
      %2150 = vmatpush1.msra.mxu0 0.0
      %2151 = vmatprep.subr.mxu0 0.0
      %2152 = vmatpush1.msra.mxu0 0.0
      %2153 = vmatprep.subr.mxu0 0.0
      %2154 = vmatpush1.msra.mxu0 0.0
      %2155 = vmatprep.subr.mxu0 0.0
      %2156 = vmatpush1.msra.mxu0 0.0
      %2157 = vmatprep.subr.mxu0 0.0
      %2158 = vmatpush1.msra.mxu0 0.0
      %2159 = vmatprep.subr.mxu0 0.0
      %2160 = vmatpush1.msra.mxu0 0.0
      %2161 = vmatprep.subr.mxu0 0.0
      %2162 = vmatpush1.msra.mxu0 0.0
      %2163 = vmatprep.subr.mxu0 0.0
      %2164 = vmatpush1.msra.mxu0 0.0
      %2165 = vmatprep.subr.mxu0 0.0
      %2166 = vmatpush1.msra.mxu0 0.0
      %2167 = vmatprep.subr.mxu0 0.0
      %2168 = vmatpush1.msra.mxu0 0.0
      %2169 = vmatprep.subr.mxu0 0.0
      %2170 = vmatpush1.msra.mxu0 0.0
      %2171 = vmatprep.subr.mxu0 0.0
      %2172 = vmatpush1.msra.mxu0 0.0
      %2173 = vmatprep.subr.mxu0 0.0
      %2174 = vmatpush1.msra.mxu0 0.0
      %2175 = vmatprep.subr.mxu0 0.0
      %2176 = vmatpush1.msra.mxu0 0.0
      %2177 = vmatprep.subr.mxu0 0.0
      %2178 = vmatpush1.msra.mxu0 0.0
      %2179 = vmatprep.subr.mxu0 0.0
      %2180 = vmatpush1.msra.mxu0 0.0
      %2181 = vmatprep.subr.mxu0 0.0
      %2182 = vmatpush1.msra.mxu0 0.0
      %2183 = vmatprep.mubr.f32.mxu0 0.0
      %2184 = vmatmul.mubr.f32.gmra.mrb[0].mxu0 %v2020
      %v2185 = vpop.f32.mrb[0].mxu0
      %v2186 = vadd.f32 %v2016, %v2185
      %v2187 = vpop.f32.mrb[0].mxu0
      %2188 = vmatprep.mubr.f32.mxu0 0.0
      %2189 = vmatmul.mubr.f32.gmra.mrb[0].mxu0 %v2023
      %v2190 = vpop.f32.mrb[0].mxu0
      %v2191 = vadd.f32 %v2016, %v2190
      %v2192 = vpop.f32.mrb[0].mxu0
      %2193 = vmatprep.mubr.f32.mxu0 0.0
      %2194 = vmatmul.mubr.f32.gmra.mrb[0].mxu0 %v2026
      %v2195 = vpop.f32.mrb[0].mxu0
      %v2196 = vadd.f32 %v2016, %v2195
      %v2197 = vpop.f32.mrb[0].mxu0
      %2198 = vmatprep.mubr.f32.mxu0 0.0
      %2199 = vmatmul.mubr.f32.gmra.mrb[0].mxu0 %v2029
      %v2200 = vpop.f32.mrb[0].mxu0
      %v2201 = vadd.f32 %v2016, %v2200
      %v2202 = vpop.f32.mrb[0].mxu0
      %2203 = vmatprep.mubr.f32.mxu0 0.0
      %2204 = vmatmul.mubr.f32.gmra.mrb[0].mxu0 %v2032
      %v2205 = vpop.f32.mrb[0].mxu0
      %v2206 = vadd.f32 %v2016, %v2205
      %v2207 = vpop.f32.mrb[0].mxu0
      %2208 = vmatprep.mubr.f32.mxu0 0.0
      %2209 = vmatmul.mubr.f32.gmra.mrb[0].mxu0 %v2035
      %v2210 = vpop.f32.mrb[0].mxu0
      %v2211 = vadd.f32 %v2016, %v2210
      %v2212 = vpop.f32.mrb[0].mxu0
      %2213 = vmatprep.mubr.f32.mxu0 0.0
      %2214 = vmatmul.mubr.f32.gmra.mrb[0].mxu0 %v2038
      %v2215 = vpop.f32.mrb[0].mxu0
      %v2216 = vadd.f32 %v2016, %v2215
      %v2217 = vpop.f32.mrb[0].mxu0
      %2218 = vmatprep.mubr.f32.mxu0 0.0
      %2219 = vmatmul.mubr.f32.gmra.mrb[0].mxu0 %v2041
      %v2220 = vpop.f32.mrb[0].mxu0
      %v2221 = vadd.f32 %v2016, %v2220
      %v2222 = vpop.f32.mrb[0].mxu0
      %2223 = vmatprep.mubr.f32.mxu0 0.0
      %2224 = vmatmul.mubr.f32.gmra.mrb[0].mxu0 %v2044
      %v2225 = vpop.f32.mrb[0].mxu0
      %v2226 = vadd.f32 %v2016, %v2225
      %v2227 = vpop.f32.mrb[0].mxu0
      %2228 = vmatprep.mubr.f32.mxu0 0.0
      %2229 = vmatmul.mubr.f32.gmra.mrb[0].mxu0 %v2047
      %v2230 = vpop.f32.mrb[0].mxu0
      %v2231 = vadd.f32 %v2016, %v2230
      %v2232 = vpop.f32.mrb[0].mxu0
      %2233 = vmatprep.mubr.f32.mxu0 0.0
      %2234 = vmatmul.mubr.f32.gmra.mrb[0].mxu0 %v2050
      %v2235 = vpop.f32.mrb[0].mxu0
      %v2236 = vadd.f32 %v2016, %v2235
      %v2237 = vpop.f32.mrb[0].mxu0
      %2238 = vmatprep.mubr.f32.mxu0 0.0
      %2239 = vmatmul.mubr.f32.gmra.mrb[0].mxu0 %v2053
      %v2240 = vpop.f32.mrb[0].mxu0
      %v2241 = vadd.f32 %v2016, %v2240
      %v2242 = vpop.f32.mrb[0].mxu0
      %2243 = vmatprep.mubr.f32.mxu0 0.0
      %2244 = vmatmul.mubr.f32.gmra.mrb[0].mxu0 %v2056
      %v2245 = vpop.f32.mrb[0].mxu0
      %v2246 = vadd.f32 %v2016, %v2245
      %v2247 = vpop.f32.mrb[0].mxu0
      %2248 = vmatprep.mubr.f32.mxu0 0.0
      %2249 = vmatmul.mubr.f32.gmra.mrb[0].mxu0 %v2059
      %v2250 = vpop.f32.mrb[0].mxu0
      %v2251 = vadd.f32 %v2016, %v2250
      %v2252 = vpop.f32.mrb[0].mxu0
      %2253 = vmatprep.mubr.f32.mxu0 0.0
      %2254 = vmatmul.mubr.f32.gmra.mrb[0].mxu0 %v2062
      %v2255 = vpop.f32.mrb[0].mxu0
      %v2256 = vadd.f32 %v2016, %v2255
      %v2257 = vpop.f32.mrb[0].mxu0
      %2258 = vmatprep.mubr.f32.mxu0 0.0
      %2259 = vmatmul.mubr.f32.gmra.mrb[0].mxu0 %v2065
      %v2260 = vpop.f32.mrb[0].mxu0
      %v2261 = vadd.f32 %v2016, %v2260
      %v2262 = vpop.f32.mrb[0].mxu0
      %2263 = vmatprep.mubr.f32.mxu0 0.0
      %2264 = vmatmul.mubr.f32.gmra.mrb[0].mxu0 %v2068
      %v2265 = vpop.f32.mrb[0].mxu0
      %v2266 = vadd.f32 %v2016, %v2265
      %v2267 = vpop.f32.mrb[0].mxu0
      %2268 = vmatprep.mubr.f32.mxu0 0.0
      %2269 = vmatmul.mubr.f32.gmra.mrb[0].mxu0 %v2071
      %v2270 = vpop.f32.mrb[0].mxu0
      %v2271 = vadd.f32 %v2016, %v2270
      %v2272 = vpop.f32.mrb[0].mxu0
      %2273 = vmatprep.mubr.f32.mxu0 0.0
      %2274 = vmatmul.mubr.f32.gmra.mrb[0].mxu0 %v2074
      %v2275 = vpop.f32.mrb[0].mxu0
      %v2276 = vadd.f32 %v2016, %v2275
      %v2277 = vpop.f32.mrb[0].mxu0
      %2278 = vmatprep.mubr.f32.mxu0 0.0
      %2279 = vmatmul.mubr.f32.gmra.mrb[0].mxu0 %v2077
      %v2280 = vpop.f32.mrb[0].mxu0
      %v2281 = vadd.f32 %v2016, %v2280
      %v2282 = vpop.f32.mrb[0].mxu0
      %2283 = vmatprep.mubr.f32.mxu0 0.0
      %2284 = vmatmul.mubr.f32.gmra.mrb[0].mxu0 %v2080
      %v2285 = vpop.f32.mrb[0].mxu0
      %v2286 = vadd.f32 %v2016, %v2285
      %v2287 = vpop.f32.mrb[0].mxu0
      %2288 = vmatprep.mubr.f32.mxu0 0.0
      %2289 = vmatmul.mubr.f32.gmra.mrb[0].mxu0 %v2083
      %v2290 = vpop.f32.mrb[0].mxu0
      %v2291 = vadd.f32 %v2016, %v2290
      %v2292 = vpop.f32.mrb[0].mxu0
      %2293 = vmatprep.mubr.f32.mxu0 0.0
      %2294 = vmatmul.mubr.f32.gmra.mrb[0].mxu0 %v2086
      %v2295 = vpop.f32.mrb[0].mxu0
      %v2296 = vadd.f32 %v2016, %v2295
      %v2297 = vpop.f32.mrb[0].mxu0
      %2298 = vmatprep.mubr.f32.mxu0 0.0
      %2299 = vmatmul.mubr.f32.gmra.mrb[0].mxu0 %v2089
      %v2300 = vpop.f32.mrb[0].mxu0
      %v2301 = vadd.f32 %v2016, %v2300
      %v2302 = vpop.f32.mrb[0].mxu0
      %2303 = vmatprep.mubr.f32.mxu0 0.0
      %2304 = vmatmul.mubr.f32.gmra.mrb[0].mxu0 %v2092
      %v2305 = vpop.f32.mrb[0].mxu0
      %v2306 = vadd.f32 %v2016, %v2305
      %v2307 = vpop.f32.mrb[0].mxu0
      %2308 = vmatprep.mubr.f32.mxu0 0.0
      %2309 = vmatmul.mubr.f32.gmra.mrb[0].mxu0 %v2095
      %v2310 = vpop.f32.mrb[0].mxu0
      %v2311 = vadd.f32 %v2016, %v2310
      %v2312 = vpop.f32.mrb[0].mxu0
      %2313 = vmatprep.mubr.f32.mxu0 0.0
      %2314 = vmatmul.mubr.f32.gmra.mrb[0].mxu0 %v2098
      %v2315 = vpop.f32.mrb[0].mxu0
      %v2316 = vadd.f32 %v2016, %v2315
      %v2317 = vpop.f32.mrb[0].mxu0
      %2318 = vmatprep.mubr.f32.mxu0 0.0
      %2319 = vmatmul.mubr.f32.gmra.mrb[0].mxu0 %v2101
      %v2320 = vpop.f32.mrb[0].mxu0
      %v2321 = vadd.f32 %v2016, %v2320
      %v2322 = vpop.f32.mrb[0].mxu0
      %2323 = vmatprep.mubr.f32.mxu0 0.0
      %2324 = vmatmul.mubr.f32.gmra.mrb[0].mxu0 %v2104
      %v2325 = vpop.f32.mrb[0].mxu0
      %v2326 = vadd.f32 %v2016, %v2325
      %v2327 = vpop.f32.mrb[0].mxu0
      %2328 = vmatprep.mubr.f32.mxu0 0.0
      %2329 = vmatmul.mubr.f32.gmra.mrb[0].mxu0 %v2107
      %v2330 = vpop.f32.mrb[0].mxu0
      %v2331 = vadd.f32 %v2016, %v2330
      %v2332 = vpop.f32.mrb[0].mxu0
      %2333 = vmatprep.mubr.f32.mxu0 0.0
      %2334 = vmatmul.mubr.f32.gmra.mrb[0].mxu0 %v2110
      %v2335 = vpop.f32.mrb[0].mxu0
      %v2336 = vadd.f32 %v2016, %v2335
      %v2337 = vpop.f32.mrb[0].mxu0
      %2338 = vmatprep.mubr.f32.mxu0 0.0
      %2339 = vmatmul.mubr.f32.gmra.mrb[0].mxu0 %v2113
      %v2340 = vpop.f32.mrb[0].mxu0
      %v2341 = vadd.f32 %v2016, %v2340
      %v2342 = vpop.f32.mrb[0].mxu0
      %2343 = vdwg.mxu0
      %v2344 = vmax.f32 %v2186, 0.0
      %v2345 = vmax.f32 %v2191, 0.0
      %v2346 = vmax.f32 %v2196, 0.0
      %v2347 = vmax.f32 %v2201, 0.0
      %v2348 = vmax.f32 %v2206, 0.0
      %v2349 = vmax.f32 %v2211, 0.0
      %v2350 = vmax.f32 %v2216, 0.0
      %v2351 = vmax.f32 %v2221, 0.0
      %v2352 = vmax.f32 %v2226, 0.0
      %v2353 = vmax.f32 %v2231, 0.0
      %v2354 = vmax.f32 %v2236, 0.0
      %v2355 = vmax.f32 %v2241, 0.0
      %v2356 = vmax.f32 %v2246, 0.0
      %v2357 = vmax.f32 %v2251, 0.0
      %v2358 = vmax.f32 %v2256, 0.0
      %v2359 = vmax.f32 %v2261, 0.0
      %v2360 = vmax.f32 %v2266, 0.0
      %v2361 = vmax.f32 %v2271, 0.0
      %v2362 = vmax.f32 %v2276, 0.0
      %v2363 = vmax.f32 %v2281, 0.0
      %v2364 = vmax.f32 %v2286, 0.0
      %v2365 = vmax.f32 %v2291, 0.0
      %v2366 = vmax.f32 %v2296, 0.0
      %v2367 = vmax.f32 %v2301, 0.0
      %v2368 = vmax.f32 %v2306, 0.0
      %v2369 = vmax.f32 %v2311, 0.0
      %v2370 = vmax.f32 %v2316, 0.0
      %v2371 = vmax.f32 %v2321, 0.0
      %v2372 = vmax.f32 %v2326, 0.0
      %v2373 = vmax.f32 %v2331, 0.0
      %v2374 = vmax.f32 %v2336, 0.0
      %v2375 = vmax.f32 %v2341, 0.0
      %2376 = vst.msk [vmem:[%s331 + $0x8] sm:$0xff] %vm225, %v2344
      %2377 = vst.msk [vmem:[%s331 + $0x10] sm:$0xff] %vm225, %v2345
      %2378 = vst.msk [vmem:[%s331 + $0x28] sm:$0xff] %vm225, %v2346
      %2379 = vst.msk [vmem:[%s331 + $0x30] sm:$0xff] %vm225, %v2347
      %2380 = vst.msk [vmem:[%s331 + $0x48] sm:$0xff] %vm225, %v2348
      %2381 = vst.msk [vmem:[%s331 + $0x50] sm:$0xff] %vm225, %v2349
      %2382 = vst.msk [vmem:[%s331 + $0x68] sm:$0xff] %vm225, %v2350
      %2383 = vst.msk [vmem:[%s331 + $0x70] sm:$0xff] %vm225, %v2351
      %2384 = vst.msk [vmem:[%s331 + $0x88] sm:$0xff] %vm225, %v2352
      %2385 = vst.msk [vmem:[%s331 + $0x90] sm:$0xff] %vm225, %v2353
      %2386 = vst.msk [vmem:[%s331 + $0xa8] sm:$0xff] %vm225, %v2354
      %2387 = vst.msk [vmem:[%s331 + $0xb0] sm:$0xff] %vm225, %v2355
      %2388 = vst.msk [vmem:[%s331 + $0xc8] sm:$0xff] %vm225, %v2356
      %2389 = vst.msk [vmem:[%s331 + $0xd0] sm:$0xff] %vm225, %v2357
      %2390 = vst.msk [vmem:[%s331 + $0xe8] sm:$0xff] %vm225, %v2358
      %2391 = vst.msk [vmem:[%s331 + $0xf0] sm:$0xff] %vm225, %v2359
      %2392 = vst.msk [vmem:[%s331 + $0x108] sm:$0xff] %vm225, %v2360
      %2393 = vst.msk [vmem:[%s331 + $0x110] sm:$0xff] %vm225, %v2361
      %2394 = vst.msk [vmem:[%s331 + $0x128] sm:$0xff] %vm225, %v2362
      %2395 = vst.msk [vmem:[%s331 + $0x130] sm:$0xff] %vm225, %v2363
      %2396 = vst.msk [vmem:[%s331 + $0x148] sm:$0xff] %vm225, %v2364
      %2397 = vst.msk [vmem:[%s331 + $0x150] sm:$0xff] %vm225, %v2365
      %2398 = vst.msk [vmem:[%s331 + $0x168] sm:$0xff] %vm225, %v2366
      %2399 = vst.msk [vmem:[%s331 + $0x170] sm:$0xff] %vm225, %v2367
      %2400 = vst.msk [vmem:[%s331 + $0x188] sm:$0xff] %vm225, %v2368
      %2401 = vst.msk [vmem:[%s331 + $0x190] sm:$0xff] %vm225, %v2369
      %2402 = vst.msk [vmem:[%s331 + $0x1a8] sm:$0xff] %vm225, %v2370
      %2403 = vst.msk [vmem:[%s331 + $0x1b0] sm:$0xff] %vm225, %v2371
      %2404 = vst.msk [vmem:[%s331 + $0x1c8] sm:$0xff] %vm225, %v2372
      %2405 = vst.msk [vmem:[%s331 + $0x1d0] sm:$0xff] %vm225, %v2373
      %2406 = vst.msk [vmem:[%s331 + $0x1e8] sm:$0xff] %vm225, %v2374
      %2407 = vst.msk [vmem:[%s331 + $0x1f0] sm:$0xff] %vm225, %v2375
      %v2408 = vld [vmem:[#allocation2 + $0x7] sm:$0xff]
      %v2409 = vld [vmem:[#allocation2 + $0xf] sm:$0xff]
      %v2410 = vld [vmem:[#allocation2 + $0x27] sm:$0xff]
      %v2411 = vld [vmem:[#allocation2 + $0x2f] sm:$0xff]
      %v2412 = vld [vmem:[#allocation2 + $0x47] sm:$0xff]
      %v2413 = vld [vmem:[#allocation2 + $0x4f] sm:$0xff]
      %v2414 = vld [vmem:[#allocation2 + $0x67] sm:$0xff]
      %v2415 = vld [vmem:[#allocation2 + $0x6f] sm:$0xff]
      %v2416 = vld [vmem:[#allocation2 + $0x87] sm:$0xff]
      %v2417 = vld [vmem:[#allocation2 + $0x8f] sm:$0xff]
      %v2418 = vld [vmem:[#allocation2 + $0xa7] sm:$0xff]
      %v2419 = vld [vmem:[#allocation2 + $0xaf] sm:$0xff]
      %v2420 = vld [vmem:[#allocation2 + $0xc7] sm:$0xff]
      %v2421 = vld [vmem:[#allocation2 + $0xcf] sm:$0xff]
      %v2422 = vld [vmem:[#allocation2 + $0xe7] sm:$0xff]
      %v2423 = vld [vmem:[#allocation2 + $0xef] sm:$0xff]
      %v2424 = vld [vmem:[#allocation2 + $0x107] sm:$0xff]
      %v2425 = vld [vmem:[#allocation2 + $0x10f] sm:$0xff]
      %v2426 = vld [vmem:[#allocation2 + $0x127] sm:$0xff]
      %v2427 = vld [vmem:[#allocation2 + $0x12f] sm:$0xff]
      %v2428 = vld [vmem:[#allocation2 + $0x147] sm:$0xff]
      %v2429 = vld [vmem:[#allocation2 + $0x14f] sm:$0xff]
      %v2430 = vld [vmem:[#allocation2 + $0x167] sm:$0xff]
      %v2431 = vld [vmem:[#allocation2 + $0x16f] sm:$0xff]
      %v2432 = vld [vmem:[#allocation2 + $0x187] sm:$0xff]
      %v2433 = vld [vmem:[#allocation2 + $0x18f] sm:$0xff]
      %v2434 = vld [vmem:[#allocation2 + $0x1a7] sm:$0xff]
      %v2435 = vld [vmem:[#allocation2 + $0x1af] sm:$0xff]
      %v2436 = vld [vmem:[#allocation2 + $0x1c7] sm:$0xff]
      %v2437 = vld [vmem:[#allocation2 + $0x1cf] sm:$0xff]
      %v2438 = vld [vmem:[#allocation2 + $0x1e7] sm:$0xff]
      %v2439 = vld [vmem:[#allocation2 + $0x1ef] sm:$0xff]
      %2440 = vst.msk [vmem:[#allocation3] sm:$0xff] %vm225, %v2408
      %2441 = vst.msk [vmem:[#allocation3 + $0x8] sm:$0xff] %vm225, %v2409
      %2442 = vst.msk [vmem:[#allocation3 + $0x10] sm:$0xff] %vm225, %v2410
      %2443 = vst.msk [vmem:[#allocation3 + $0x18] sm:$0xff] %vm225, %v2411
      %2444 = vst.msk [vmem:[#allocation3 + $0x20] sm:$0xff] %vm225, %v2412
      %2445 = vst.msk [vmem:[#allocation3 + $0x28] sm:$0xff] %vm225, %v2413
      %2446 = vst.msk [vmem:[#allocation3 + $0x30] sm:$0xff] %vm225, %v2414
      %2447 = vst.msk [vmem:[#allocation3 + $0x38] sm:$0xff] %vm225, %v2415
      %2448 = vst.msk [vmem:[#allocation3 + $0x40] sm:$0xff] %vm225, %v2416
      %2449 = vst.msk [vmem:[#allocation3 + $0x48] sm:$0xff] %vm225, %v2417
      %2450 = vst.msk [vmem:[#allocation3 + $0x50] sm:$0xff] %vm225, %v2418
      %2451 = vst.msk [vmem:[#allocation3 + $0x58] sm:$0xff] %vm225, %v2419
      %2452 = vst.msk [vmem:[#allocation3 + $0x60] sm:$0xff] %vm225, %v2420
      %2453 = vst.msk [vmem:[#allocation3 + $0x68] sm:$0xff] %vm225, %v2421
      %2454 = vst.msk [vmem:[#allocation3 + $0x70] sm:$0xff] %vm225, %v2422
      %2455 = vst.msk [vmem:[#allocation3 + $0x78] sm:$0xff] %vm225, %v2423
      %2456 = vst.msk [vmem:[#allocation3 + $0x80] sm:$0xff] %vm225, %v2424
      %2457 = vst.msk [vmem:[#allocation3 + $0x88] sm:$0xff] %vm225, %v2425
      %2458 = vst.msk [vmem:[#allocation3 + $0x90] sm:$0xff] %vm225, %v2426
      %2459 = vst.msk [vmem:[#allocation3 + $0x98] sm:$0xff] %vm225, %v2427
      %2460 = vst.msk [vmem:[#allocation3 + $0xa0] sm:$0xff] %vm225, %v2428
      %2461 = vst.msk [vmem:[#allocation3 + $0xa8] sm:$0xff] %vm225, %v2429
      %2462 = vst.msk [vmem:[#allocation3 + $0xb0] sm:$0xff] %vm225, %v2430
      %2463 = vst.msk [vmem:[#allocation3 + $0xb8] sm:$0xff] %vm225, %v2431
      %2464 = vst.msk [vmem:[#allocation3 + $0xc0] sm:$0xff] %vm225, %v2432
      %2465 = vst.msk [vmem:[#allocation3 + $0xc8] sm:$0xff] %vm225, %v2433
      %2466 = vst.msk [vmem:[#allocation3 + $0xd0] sm:$0xff] %vm225, %v2434
      %2467 = vst.msk [vmem:[#allocation3 + $0xd8] sm:$0xff] %vm225, %v2435
      %2468 = vst.msk [vmem:[#allocation3 + $0xe0] sm:$0xff] %vm225, %v2436
      %2469 = vst.msk [vmem:[#allocation3 + $0xe8] sm:$0xff] %vm225, %v2437
      %2470 = vst.msk [vmem:[#allocation3 + $0xf0] sm:$0xff] %vm225, %v2438
      %2471 = vst.msk [vmem:[#allocation3 + $0xf8] sm:$0xff] %vm225, %v2439
      %v2472 = vld [vmem:[#allocation2 + $0x8] sm:$0xff]
      %v2473 = vld [vmem:[#allocation2 + $0x10] sm:$0xff]
      %v2474 = vld [vmem:[#allocation2 + $0x28] sm:$0xff]
      %v2475 = vld [vmem:[#allocation2 + $0x30] sm:$0xff]
      %v2476 = vld [vmem:[#allocation2 + $0x48] sm:$0xff]
      %v2477 = vld [vmem:[#allocation2 + $0x50] sm:$0xff]
      %v2478 = vld [vmem:[#allocation2 + $0x68] sm:$0xff]
      %v2479 = vld [vmem:[#allocation2 + $0x70] sm:$0xff]
      %v2480 = vld [vmem:[#allocation2 + $0x88] sm:$0xff]
      %v2481 = vld [vmem:[#allocation2 + $0x90] sm:$0xff]
      %v2482 = vld [vmem:[#allocation2 + $0xa8] sm:$0xff]
      %v2483 = vld [vmem:[#allocation2 + $0xb0] sm:$0xff]
      %v2484 = vld [vmem:[#allocation2 + $0xc8] sm:$0xff]
      %v2485 = vld [vmem:[#allocation2 + $0xd0] sm:$0xff]
      %v2486 = vld [vmem:[#allocation2 + $0xe8] sm:$0xff]
      %v2487 = vld [vmem:[#allocation2 + $0xf0] sm:$0xff]
      %v2488 = vld [vmem:[#allocation2 + $0x108] sm:$0xff]
      %v2489 = vld [vmem:[#allocation2 + $0x110] sm:$0xff]
      %v2490 = vld [vmem:[#allocation2 + $0x128] sm:$0xff]
      %v2491 = vld [vmem:[#allocation2 + $0x130] sm:$0xff]
      %v2492 = vld [vmem:[#allocation2 + $0x148] sm:$0xff]
      %v2493 = vld [vmem:[#allocation2 + $0x150] sm:$0xff]
      %v2494 = vld [vmem:[#allocation2 + $0x168] sm:$0xff]
      %v2495 = vld [vmem:[#allocation2 + $0x170] sm:$0xff]
      %v2496 = vld [vmem:[#allocation2 + $0x188] sm:$0xff]
      %v2497 = vld [vmem:[#allocation2 + $0x190] sm:$0xff]
      %v2498 = vld [vmem:[#allocation2 + $0x1a8] sm:$0xff]
      %v2499 = vld [vmem:[#allocation2 + $0x1b0] sm:$0xff]
      %v2500 = vld [vmem:[#allocation2 + $0x1c8] sm:$0xff]
      %v2501 = vld [vmem:[#allocation2 + $0x1d0] sm:$0xff]
      %v2502 = vld [vmem:[#allocation2 + $0x1e8] sm:$0xff]
      %v2503 = vld [vmem:[#allocation2 + $0x1f0] sm:$0xff]
      %2536 = vrot.lane.b32.xlu0 %v2472, 8
      %v2537 = vpop.permute.xlu0 %2536
      %2538 = vrot.lane.b32.xlu0 %v2473, 8
      %v2539 = vpop.permute.xlu0 %2538
      %2540 = vrot.lane.b32.xlu0 %v2474, 8
      %v2541 = vpop.permute.xlu0 %2540
      %2542 = vrot.lane.b32.xlu0 %v2475, 8
      %v2543 = vpop.permute.xlu0 %2542
      %2544 = vrot.lane.b32.xlu0 %v2476, 8
      %v2545 = vpop.permute.xlu0 %2544
      %2546 = vrot.lane.b32.xlu0 %v2477, 8
      %v2547 = vpop.permute.xlu0 %2546
      %2548 = vrot.lane.b32.xlu0 %v2478, 8
      %v2549 = vpop.permute.xlu0 %2548
      %2550 = vrot.lane.b32.xlu0 %v2479, 8
      %v2551 = vpop.permute.xlu0 %2550
      %2552 = vrot.lane.b32.xlu0 %v2480, 8
      %v2553 = vpop.permute.xlu0 %2552
      %2554 = vrot.lane.b32.xlu0 %v2481, 8
      %v2555 = vpop.permute.xlu0 %2554
      %2556 = vrot.lane.b32.xlu0 %v2482, 8
      %v2557 = vpop.permute.xlu0 %2556
      %2558 = vrot.lane.b32.xlu0 %v2483, 8
      %v2559 = vpop.permute.xlu0 %2558
      %2560 = vrot.lane.b32.xlu0 %v2484, 8
      %v2561 = vpop.permute.xlu0 %2560
      %2562 = vrot.lane.b32.xlu0 %v2485, 8
      %v2563 = vpop.permute.xlu0 %2562
      %2564 = vrot.lane.b32.xlu0 %v2486, 8
      %v2565 = vpop.permute.xlu0 %2564
      %2566 = vrot.lane.b32.xlu0 %v2487, 8
      %v2567 = vpop.permute.xlu0 %2566
      %2568 = vrot.lane.b32.xlu0 %v2488, 8
      %v2569 = vpop.permute.xlu0 %2568
      %2570 = vrot.lane.b32.xlu0 %v2489, 8
      %v2571 = vpop.permute.xlu0 %2570
      %2572 = vrot.lane.b32.xlu0 %v2490, 8
      %v2573 = vpop.permute.xlu0 %2572
      %2574 = vrot.lane.b32.xlu0 %v2491, 8
      %v2575 = vpop.permute.xlu0 %2574
      %2576 = vrot.lane.b32.xlu0 %v2492, 8
      %v2577 = vpop.permute.xlu0 %2576
      %2578 = vrot.lane.b32.xlu0 %v2493, 8
      %v2579 = vpop.permute.xlu0 %2578
      %2580 = vrot.lane.b32.xlu0 %v2494, 8
      %v2581 = vpop.permute.xlu0 %2580
      %2582 = vrot.lane.b32.xlu0 %v2495, 8
      %v2583 = vpop.permute.xlu0 %2582
      %2584 = vrot.lane.b32.xlu0 %v2496, 8
      %v2585 = vpop.permute.xlu0 %2584
      %2586 = vrot.lane.b32.xlu0 %v2497, 8
      %v2587 = vpop.permute.xlu0 %2586
      %2588 = vrot.lane.b32.xlu0 %v2498, 8
      %v2589 = vpop.permute.xlu0 %2588
      %2590 = vrot.lane.b32.xlu0 %v2499, 8
      %v2591 = vpop.permute.xlu0 %2590
      %2592 = vrot.lane.b32.xlu0 %v2500, 8
      %v2593 = vpop.permute.xlu0 %2592
      %2594 = vrot.lane.b32.xlu0 %v2501, 8
      %v2595 = vpop.permute.xlu0 %2594
      %2596 = vrot.lane.b32.xlu0 %v2502, 8
      %v2597 = vpop.permute.xlu0 %2596
      %2598 = vrot.lane.b32.xlu0 %v2503, 8
      %v2599 = vpop.permute.xlu0 %2598
      %vm2632 = vcmask 130112
      %2633 = vst.msk [vmem:[#allocation3] sm:$0xff] %vm2632, %v2537
      %2634 = vst.msk [vmem:[#allocation3 + $0x8] sm:$0xff] %vm2632, %v2539
      %2635 = vst.msk [vmem:[#allocation3 + $0x10] sm:$0xff] %vm2632, %v2541
      %2636 = vst.msk [vmem:[#allocation3 + $0x18] sm:$0xff] %vm2632, %v2543
      %2637 = vst.msk [vmem:[#allocation3 + $0x20] sm:$0xff] %vm2632, %v2545
      %2638 = vst.msk [vmem:[#allocation3 + $0x28] sm:$0xff] %vm2632, %v2547
      %2639 = vst.msk [vmem:[#allocation3 + $0x30] sm:$0xff] %vm2632, %v2549
      %2640 = vst.msk [vmem:[#allocation3 + $0x38] sm:$0xff] %vm2632, %v2551
      %2641 = vst.msk [vmem:[#allocation3 + $0x40] sm:$0xff] %vm2632, %v2553
      %2642 = vst.msk [vmem:[#allocation3 + $0x48] sm:$0xff] %vm2632, %v2555
      %2643 = vst.msk [vmem:[#allocation3 + $0x50] sm:$0xff] %vm2632, %v2557
      %2644 = vst.msk [vmem:[#allocation3 + $0x58] sm:$0xff] %vm2632, %v2559
      %2645 = vst.msk [vmem:[#allocation3 + $0x60] sm:$0xff] %vm2632, %v2561
      %2646 = vst.msk [vmem:[#allocation3 + $0x68] sm:$0xff] %vm2632, %v2563
      %2647 = vst.msk [vmem:[#allocation3 + $0x70] sm:$0xff] %vm2632, %v2565
      %2648 = vst.msk [vmem:[#allocation3 + $0x78] sm:$0xff] %vm2632, %v2567
      %2649 = vst.msk [vmem:[#allocation3 + $0x80] sm:$0xff] %vm2632, %v2569
      %2650 = vst.msk [vmem:[#allocation3 + $0x88] sm:$0xff] %vm2632, %v2571
      %2651 = vst.msk [vmem:[#allocation3 + $0x90] sm:$0xff] %vm2632, %v2573
      %2652 = vst.msk [vmem:[#allocation3 + $0x98] sm:$0xff] %vm2632, %v2575
      %2653 = vst.msk [vmem:[#allocation3 + $0xa0] sm:$0xff] %vm2632, %v2577
      %2654 = vst.msk [vmem:[#allocation3 + $0xa8] sm:$0xff] %vm2632, %v2579
      %2655 = vst.msk [vmem:[#allocation3 + $0xb0] sm:$0xff] %vm2632, %v2581
      %2656 = vst.msk [vmem:[#allocation3 + $0xb8] sm:$0xff] %vm2632, %v2583
      %2657 = vst.msk [vmem:[#allocation3 + $0xc0] sm:$0xff] %vm2632, %v2585
      %2658 = vst.msk [vmem:[#allocation3 + $0xc8] sm:$0xff] %vm2632, %v2587
      %2659 = vst.msk [vmem:[#allocation3 + $0xd0] sm:$0xff] %vm2632, %v2589
      %2660 = vst.msk [vmem:[#allocation3 + $0xd8] sm:$0xff] %vm2632, %v2591
      %2661 = vst.msk [vmem:[#allocation3 + $0xe0] sm:$0xff] %vm2632, %v2593
      %2662 = vst.msk [vmem:[#allocation3 + $0xe8] sm:$0xff] %vm2632, %v2595
      %2663 = vst.msk [vmem:[#allocation3 + $0xf0] sm:$0xff] %vm2632, %v2597
      %2664 = vst.msk [vmem:[#allocation3 + $0xf8] sm:$0xff] %vm2632, %v2599
      %v2665 = vld [vmem:[#allocation2 + $0x9] sm:$0xff]
      %v2666 = vld [vmem:[#allocation2 + $0x11] sm:$0xff]
      %v2667 = vld [vmem:[#allocation2 + $0x29] sm:$0xff]
      %v2668 = vld [vmem:[#allocation2 + $0x31] sm:$0xff]
      %v2669 = vld [vmem:[#allocation2 + $0x49] sm:$0xff]
      %v2670 = vld [vmem:[#allocation2 + $0x51] sm:$0xff]
      %v2671 = vld [vmem:[#allocation2 + $0x69] sm:$0xff]
      %v2672 = vld [vmem:[#allocation2 + $0x71] sm:$0xff]
      %v2673 = vld [vmem:[#allocation2 + $0x89] sm:$0xff]
      %v2674 = vld [vmem:[#allocation2 + $0x91] sm:$0xff]
      %v2675 = vld [vmem:[#allocation2 + $0xa9] sm:$0xff]
      %v2676 = vld [vmem:[#allocation2 + $0xb1] sm:$0xff]
      %v2677 = vld [vmem:[#allocation2 + $0xc9] sm:$0xff]
      %v2678 = vld [vmem:[#allocation2 + $0xd1] sm:$0xff]
      %v2679 = vld [vmem:[#allocation2 + $0xe9] sm:$0xff]
      %v2680 = vld [vmem:[#allocation2 + $0xf1] sm:$0xff]
      %v2681 = vld [vmem:[#allocation2 + $0x109] sm:$0xff]
      %v2682 = vld [vmem:[#allocation2 + $0x111] sm:$0xff]
      %v2683 = vld [vmem:[#allocation2 + $0x129] sm:$0xff]
      %v2684 = vld [vmem:[#allocation2 + $0x131] sm:$0xff]
      %v2685 = vld [vmem:[#allocation2 + $0x149] sm:$0xff]
      %v2686 = vld [vmem:[#allocation2 + $0x151] sm:$0xff]
      %v2687 = vld [vmem:[#allocation2 + $0x169] sm:$0xff]
      %v2688 = vld [vmem:[#allocation2 + $0x171] sm:$0xff]
      %v2689 = vld [vmem:[#allocation2 + $0x189] sm:$0xff]
      %v2690 = vld [vmem:[#allocation2 + $0x191] sm:$0xff]
      %v2691 = vld [vmem:[#allocation2 + $0x1a9] sm:$0xff]
      %v2692 = vld [vmem:[#allocation2 + $0x1b1] sm:$0xff]
      %v2693 = vld [vmem:[#allocation2 + $0x1c9] sm:$0xff]
      %v2694 = vld [vmem:[#allocation2 + $0x1d1] sm:$0xff]
      %v2695 = vld [vmem:[#allocation2 + $0x1e9] sm:$0xff]
      %v2696 = vld [vmem:[#allocation2 + $0x1f1] sm:$0xff]
      %2729 = vrot.lane.b32.xlu0 %v2665, 16
      %v2730 = vpop.permute.xlu0 %2729
      %2731 = vrot.lane.b32.xlu0 %v2666, 16
      %v2732 = vpop.permute.xlu0 %2731
      %2733 = vrot.lane.b32.xlu0 %v2667, 16
      %v2734 = vpop.permute.xlu0 %2733
      %2735 = vrot.lane.b32.xlu0 %v2668, 16
      %v2736 = vpop.permute.xlu0 %2735
      %2737 = vrot.lane.b32.xlu0 %v2669, 16
      %v2738 = vpop.permute.xlu0 %2737
      %2739 = vrot.lane.b32.xlu0 %v2670, 16
      %v2740 = vpop.permute.xlu0 %2739
      %2741 = vrot.lane.b32.xlu0 %v2671, 16
      %v2742 = vpop.permute.xlu0 %2741
      %2743 = vrot.lane.b32.xlu0 %v2672, 16
      %v2744 = vpop.permute.xlu0 %2743
      %2745 = vrot.lane.b32.xlu0 %v2673, 16
      %v2746 = vpop.permute.xlu0 %2745
      %2747 = vrot.lane.b32.xlu0 %v2674, 16
      %v2748 = vpop.permute.xlu0 %2747
      %2749 = vrot.lane.b32.xlu0 %v2675, 16
      %v2750 = vpop.permute.xlu0 %2749
      %2751 = vrot.lane.b32.xlu0 %v2676, 16
      %v2752 = vpop.permute.xlu0 %2751
      %2753 = vrot.lane.b32.xlu0 %v2677, 16
      %v2754 = vpop.permute.xlu0 %2753
      %2755 = vrot.lane.b32.xlu0 %v2678, 16
      %v2756 = vpop.permute.xlu0 %2755
      %2757 = vrot.lane.b32.xlu0 %v2679, 16
      %v2758 = vpop.permute.xlu0 %2757
      %2759 = vrot.lane.b32.xlu0 %v2680, 16
      %v2760 = vpop.permute.xlu0 %2759
      %2761 = vrot.lane.b32.xlu0 %v2681, 16
      %v2762 = vpop.permute.xlu0 %2761
      %2763 = vrot.lane.b32.xlu0 %v2682, 16
      %v2764 = vpop.permute.xlu0 %2763
      %2765 = vrot.lane.b32.xlu0 %v2683, 16
      %v2766 = vpop.permute.xlu0 %2765
      %2767 = vrot.lane.b32.xlu0 %v2684, 16
      %v2768 = vpop.permute.xlu0 %2767
      %2769 = vrot.lane.b32.xlu0 %v2685, 16
      %v2770 = vpop.permute.xlu0 %2769
      %2771 = vrot.lane.b32.xlu0 %v2686, 16
      %v2772 = vpop.permute.xlu0 %2771
      %2773 = vrot.lane.b32.xlu0 %v2687, 16
      %v2774 = vpop.permute.xlu0 %2773
      %2775 = vrot.lane.b32.xlu0 %v2688, 16
      %v2776 = vpop.permute.xlu0 %2775
      %2777 = vrot.lane.b32.xlu0 %v2689, 16
      %v2778 = vpop.permute.xlu0 %2777
      %2779 = vrot.lane.b32.xlu0 %v2690, 16
      %v2780 = vpop.permute.xlu0 %2779
      %2781 = vrot.lane.b32.xlu0 %v2691, 16
      %v2782 = vpop.permute.xlu0 %2781
      %2783 = vrot.lane.b32.xlu0 %v2692, 16
      %v2784 = vpop.permute.xlu0 %2783
      %2785 = vrot.lane.b32.xlu0 %v2693, 16
      %v2786 = vpop.permute.xlu0 %2785
      %2787 = vrot.lane.b32.xlu0 %v2694, 16
      %v2788 = vpop.permute.xlu0 %2787
      %2789 = vrot.lane.b32.xlu0 %v2695, 16
      %v2790 = vpop.permute.xlu0 %2789
      %2791 = vrot.lane.b32.xlu0 %v2696, 16
      %v2792 = vpop.permute.xlu0 %2791
      %vm2825 = vcmask 195712
      %2826 = vst.msk [vmem:[#allocation3] sm:$0xff] %vm2825, %v2730
      %2827 = vst.msk [vmem:[#allocation3 + $0x8] sm:$0xff] %vm2825, %v2732
      %2828 = vst.msk [vmem:[#allocation3 + $0x10] sm:$0xff] %vm2825, %v2734
      %2829 = vst.msk [vmem:[#allocation3 + $0x18] sm:$0xff] %vm2825, %v2736
      %2830 = vst.msk [vmem:[#allocation3 + $0x20] sm:$0xff] %vm2825, %v2738
      %2831 = vst.msk [vmem:[#allocation3 + $0x28] sm:$0xff] %vm2825, %v2740
      %2832 = vst.msk [vmem:[#allocation3 + $0x30] sm:$0xff] %vm2825, %v2742
      %2833 = vst.msk [vmem:[#allocation3 + $0x38] sm:$0xff] %vm2825, %v2744
      %2834 = vst.msk [vmem:[#allocation3 + $0x40] sm:$0xff] %vm2825, %v2746
      %2835 = vst.msk [vmem:[#allocation3 + $0x48] sm:$0xff] %vm2825, %v2748
      %2836 = vst.msk [vmem:[#allocation3 + $0x50] sm:$0xff] %vm2825, %v2750
      %2837 = vst.msk [vmem:[#allocation3 + $0x58] sm:$0xff] %vm2825, %v2752
      %2838 = vst.msk [vmem:[#allocation3 + $0x60] sm:$0xff] %vm2825, %v2754
      %2839 = vst.msk [vmem:[#allocation3 + $0x68] sm:$0xff] %vm2825, %v2756
      %2840 = vst.msk [vmem:[#allocation3 + $0x70] sm:$0xff] %vm2825, %v2758
      %2841 = vst.msk [vmem:[#allocation3 + $0x78] sm:$0xff] %vm2825, %v2760
      %2842 = vst.msk [vmem:[#allocation3 + $0x80] sm:$0xff] %vm2825, %v2762
      %2843 = vst.msk [vmem:[#allocation3 + $0x88] sm:$0xff] %vm2825, %v2764
      %2844 = vst.msk [vmem:[#allocation3 + $0x90] sm:$0xff] %vm2825, %v2766
      %2845 = vst.msk [vmem:[#allocation3 + $0x98] sm:$0xff] %vm2825, %v2768
      %2846 = vst.msk [vmem:[#allocation3 + $0xa0] sm:$0xff] %vm2825, %v2770
      %2847 = vst.msk [vmem:[#allocation3 + $0xa8] sm:$0xff] %vm2825, %v2772
      %2848 = vst.msk [vmem:[#allocation3 + $0xb0] sm:$0xff] %vm2825, %v2774
      %2849 = vst.msk [vmem:[#allocation3 + $0xb8] sm:$0xff] %vm2825, %v2776
      %2850 = vst.msk [vmem:[#allocation3 + $0xc0] sm:$0xff] %vm2825, %v2778
      %2851 = vst.msk [vmem:[#allocation3 + $0xc8] sm:$0xff] %vm2825, %v2780
      %2852 = vst.msk [vmem:[#allocation3 + $0xd0] sm:$0xff] %vm2825, %v2782
      %2853 = vst.msk [vmem:[#allocation3 + $0xd8] sm:$0xff] %vm2825, %v2784
      %2854 = vst.msk [vmem:[#allocation3 + $0xe0] sm:$0xff] %vm2825, %v2786
      %2855 = vst.msk [vmem:[#allocation3 + $0xe8] sm:$0xff] %vm2825, %v2788
      %2856 = vst.msk [vmem:[#allocation3 + $0xf0] sm:$0xff] %vm2825, %v2790
      %2857 = vst.msk [vmem:[#allocation3 + $0xf8] sm:$0xff] %vm2825, %v2792
      %v2858 = vld [vmem:[%s331 + $0x7] sm:$0xff]
      %v2859 = vld [vmem:[%s331 + $0xf] sm:$0xff]
      %v2860 = vld [vmem:[%s331 + $0x27] sm:$0xff]
      %v2861 = vld [vmem:[%s331 + $0x2f] sm:$0xff]
      %v2862 = vld [vmem:[%s331 + $0x47] sm:$0xff]
      %v2863 = vld [vmem:[%s331 + $0x4f] sm:$0xff]
      %v2864 = vld [vmem:[%s331 + $0x67] sm:$0xff]
      %v2865 = vld [vmem:[%s331 + $0x6f] sm:$0xff]
      %v2866 = vld [vmem:[%s331 + $0x87] sm:$0xff]
      %v2867 = vld [vmem:[%s331 + $0x8f] sm:$0xff]
      %v2868 = vld [vmem:[%s331 + $0xa7] sm:$0xff]
      %v2869 = vld [vmem:[%s331 + $0xaf] sm:$0xff]
      %v2870 = vld [vmem:[%s331 + $0xc7] sm:$0xff]
      %v2871 = vld [vmem:[%s331 + $0xcf] sm:$0xff]
      %v2872 = vld [vmem:[%s331 + $0xe7] sm:$0xff]
      %v2873 = vld [vmem:[%s331 + $0xef] sm:$0xff]
      %v2874 = vld [vmem:[%s331 + $0x107] sm:$0xff]
      %v2875 = vld [vmem:[%s331 + $0x10f] sm:$0xff]
      %v2876 = vld [vmem:[%s331 + $0x127] sm:$0xff]
      %v2877 = vld [vmem:[%s331 + $0x12f] sm:$0xff]
      %v2878 = vld [vmem:[%s331 + $0x147] sm:$0xff]
      %v2879 = vld [vmem:[%s331 + $0x14f] sm:$0xff]
      %v2880 = vld [vmem:[%s331 + $0x167] sm:$0xff]
      %v2881 = vld [vmem:[%s331 + $0x16f] sm:$0xff]
      %v2882 = vld [vmem:[%s331 + $0x187] sm:$0xff]
      %v2883 = vld [vmem:[%s331 + $0x18f] sm:$0xff]
      %v2884 = vld [vmem:[%s331 + $0x1a7] sm:$0xff]
      %v2885 = vld [vmem:[%s331 + $0x1af] sm:$0xff]
      %v2886 = vld [vmem:[%s331 + $0x1c7] sm:$0xff]
      %v2887 = vld [vmem:[%s331 + $0x1cf] sm:$0xff]
      %v2888 = vld [vmem:[%s331 + $0x1e7] sm:$0xff]
      %v2889 = vld [vmem:[%s331 + $0x1ef] sm:$0xff]
      %2922 = vrot.lane.b32.xlu0 %v2858, 24
      %v2923 = vpop.permute.xlu0 %2922
      %2924 = vrot.lane.b32.xlu0 %v2859, 24
      %v2925 = vpop.permute.xlu0 %2924
      %2926 = vrot.lane.b32.xlu0 %v2860, 24
      %v2927 = vpop.permute.xlu0 %2926
      %2928 = vrot.lane.b32.xlu0 %v2861, 24
      %v2929 = vpop.permute.xlu0 %2928
      %2930 = vrot.lane.b32.xlu0 %v2862, 24
      %v2931 = vpop.permute.xlu0 %2930
      %2932 = vrot.lane.b32.xlu0 %v2863, 24
      %v2933 = vpop.permute.xlu0 %2932
      %2934 = vrot.lane.b32.xlu0 %v2864, 24
      %v2935 = vpop.permute.xlu0 %2934
      %2936 = vrot.lane.b32.xlu0 %v2865, 24
      %v2937 = vpop.permute.xlu0 %2936
      %2938 = vrot.lane.b32.xlu0 %v2866, 24
      %v2939 = vpop.permute.xlu0 %2938
      %2940 = vrot.lane.b32.xlu0 %v2867, 24
      %v2941 = vpop.permute.xlu0 %2940
      %2942 = vrot.lane.b32.xlu0 %v2868, 24
      %v2943 = vpop.permute.xlu0 %2942
      %2944 = vrot.lane.b32.xlu0 %v2869, 24
      %v2945 = vpop.permute.xlu0 %2944
      %2946 = vrot.lane.b32.xlu0 %v2870, 24
      %v2947 = vpop.permute.xlu0 %2946
      %2948 = vrot.lane.b32.xlu0 %v2871, 24
      %v2949 = vpop.permute.xlu0 %2948
      %2950 = vrot.lane.b32.xlu0 %v2872, 24
      %v2951 = vpop.permute.xlu0 %2950
      %2952 = vrot.lane.b32.xlu0 %v2873, 24
      %v2953 = vpop.permute.xlu0 %2952
      %2954 = vrot.lane.b32.xlu0 %v2874, 24
      %v2955 = vpop.permute.xlu0 %2954
      %2956 = vrot.lane.b32.xlu0 %v2875, 24
      %v2957 = vpop.permute.xlu0 %2956
      %2958 = vrot.lane.b32.xlu0 %v2876, 24
      %v2959 = vpop.permute.xlu0 %2958
      %2960 = vrot.lane.b32.xlu0 %v2877, 24
      %v2961 = vpop.permute.xlu0 %2960
      %2962 = vrot.lane.b32.xlu0 %v2878, 24
      %v2963 = vpop.permute.xlu0 %2962
      %2964 = vrot.lane.b32.xlu0 %v2879, 24
      %v2965 = vpop.permute.xlu0 %2964
      %2966 = vrot.lane.b32.xlu0 %v2880, 24
      %v2967 = vpop.permute.xlu0 %2966
      %2968 = vrot.lane.b32.xlu0 %v2881, 24
      %v2969 = vpop.permute.xlu0 %2968
      %2970 = vrot.lane.b32.xlu0 %v2882, 24
      %v2971 = vpop.permute.xlu0 %2970
      %2972 = vrot.lane.b32.xlu0 %v2883, 24
      %v2973 = vpop.permute.xlu0 %2972
      %2974 = vrot.lane.b32.xlu0 %v2884, 24
      %v2975 = vpop.permute.xlu0 %2974
      %2976 = vrot.lane.b32.xlu0 %v2885, 24
      %v2977 = vpop.permute.xlu0 %2976
      %2978 = vrot.lane.b32.xlu0 %v2886, 24
      %v2979 = vpop.permute.xlu0 %2978
      %2980 = vrot.lane.b32.xlu0 %v2887, 24
      %v2981 = vpop.permute.xlu0 %2980
      %2982 = vrot.lane.b32.xlu0 %v2888, 24
      %v2983 = vpop.permute.xlu0 %2982
      %2984 = vrot.lane.b32.xlu0 %v2889, 24
      %v2985 = vpop.permute.xlu0 %2984
      %vm3018 = vcmask 261312
      %3019 = vst.msk [vmem:[#allocation3] sm:$0xff] %vm3018, %v2923
      %3020 = vst.msk [vmem:[#allocation3 + $0x8] sm:$0xff] %vm3018, %v2925
      %3021 = vst.msk [vmem:[#allocation3 + $0x10] sm:$0xff] %vm3018, %v2927
      %3022 = vst.msk [vmem:[#allocation3 + $0x18] sm:$0xff] %vm3018, %v2929
      %3023 = vst.msk [vmem:[#allocation3 + $0x20] sm:$0xff] %vm3018, %v2931
      %3024 = vst.msk [vmem:[#allocation3 + $0x28] sm:$0xff] %vm3018, %v2933
      %3025 = vst.msk [vmem:[#allocation3 + $0x30] sm:$0xff] %vm3018, %v2935
      %3026 = vst.msk [vmem:[#allocation3 + $0x38] sm:$0xff] %vm3018, %v2937
      %3027 = vst.msk [vmem:[#allocation3 + $0x40] sm:$0xff] %vm3018, %v2939
      %3028 = vst.msk [vmem:[#allocation3 + $0x48] sm:$0xff] %vm3018, %v2941
      %3029 = vst.msk [vmem:[#allocation3 + $0x50] sm:$0xff] %vm3018, %v2943
      %3030 = vst.msk [vmem:[#allocation3 + $0x58] sm:$0xff] %vm3018, %v2945
      %3031 = vst.msk [vmem:[#allocation3 + $0x60] sm:$0xff] %vm3018, %v2947
      %3032 = vst.msk [vmem:[#allocation3 + $0x68] sm:$0xff] %vm3018, %v2949
      %3033 = vst.msk [vmem:[#allocation3 + $0x70] sm:$0xff] %vm3018, %v2951
      %3034 = vst.msk [vmem:[#allocation3 + $0x78] sm:$0xff] %vm3018, %v2953
      %3035 = vst.msk [vmem:[#allocation3 + $0x80] sm:$0xff] %vm3018, %v2955
      %3036 = vst.msk [vmem:[#allocation3 + $0x88] sm:$0xff] %vm3018, %v2957
      %3037 = vst.msk [vmem:[#allocation3 + $0x90] sm:$0xff] %vm3018, %v2959
      %3038 = vst.msk [vmem:[#allocation3 + $0x98] sm:$0xff] %vm3018, %v2961
      %3039 = vst.msk [vmem:[#allocation3 + $0xa0] sm:$0xff] %vm3018, %v2963
      %3040 = vst.msk [vmem:[#allocation3 + $0xa8] sm:$0xff] %vm3018, %v2965
      %3041 = vst.msk [vmem:[#allocation3 + $0xb0] sm:$0xff] %vm3018, %v2967
      %3042 = vst.msk [vmem:[#allocation3 + $0xb8] sm:$0xff] %vm3018, %v2969
      %3043 = vst.msk [vmem:[#allocation3 + $0xc0] sm:$0xff] %vm3018, %v2971
      %3044 = vst.msk [vmem:[#allocation3 + $0xc8] sm:$0xff] %vm3018, %v2973
      %3045 = vst.msk [vmem:[#allocation3 + $0xd0] sm:$0xff] %vm3018, %v2975
      %3046 = vst.msk [vmem:[#allocation3 + $0xd8] sm:$0xff] %vm3018, %v2977
      %3047 = vst.msk [vmem:[#allocation3 + $0xe0] sm:$0xff] %vm3018, %v2979
      %3048 = vst.msk [vmem:[#allocation3 + $0xe8] sm:$0xff] %vm3018, %v2981
      %3049 = vst.msk [vmem:[#allocation3 + $0xf0] sm:$0xff] %vm3018, %v2983
      %3050 = vst.msk [vmem:[#allocation3 + $0xf8] sm:$0xff] %vm3018, %v2985
      %v3051 = vld [vmem:[%s331 + $0x8] sm:$0xff]
      %v3052 = vld [vmem:[%s331 + $0x10] sm:$0xff]
      %v3053 = vld [vmem:[%s331 + $0x28] sm:$0xff]
      %v3054 = vld [vmem:[%s331 + $0x30] sm:$0xff]
      %v3055 = vld [vmem:[%s331 + $0x48] sm:$0xff]
      %v3056 = vld [vmem:[%s331 + $0x50] sm:$0xff]
      %v3057 = vld [vmem:[%s331 + $0x68] sm:$0xff]
      %v3058 = vld [vmem:[%s331 + $0x70] sm:$0xff]
      %v3059 = vld [vmem:[%s331 + $0x88] sm:$0xff]
      %v3060 = vld [vmem:[%s331 + $0x90] sm:$0xff]
      %v3061 = vld [vmem:[%s331 + $0xa8] sm:$0xff]
      %v3062 = vld [vmem:[%s331 + $0xb0] sm:$0xff]
      %v3063 = vld [vmem:[%s331 + $0xc8] sm:$0xff]
      %v3064 = vld [vmem:[%s331 + $0xd0] sm:$0xff]
      %v3065 = vld [vmem:[%s331 + $0xe8] sm:$0xff]
      %v3066 = vld [vmem:[%s331 + $0xf0] sm:$0xff]
      %v3067 = vld [vmem:[%s331 + $0x108] sm:$0xff]
      %v3068 = vld [vmem:[%s331 + $0x110] sm:$0xff]
      %v3069 = vld [vmem:[%s331 + $0x128] sm:$0xff]
      %v3070 = vld [vmem:[%s331 + $0x130] sm:$0xff]
      %v3071 = vld [vmem:[%s331 + $0x148] sm:$0xff]
      %v3072 = vld [vmem:[%s331 + $0x150] sm:$0xff]
      %v3073 = vld [vmem:[%s331 + $0x168] sm:$0xff]
      %v3074 = vld [vmem:[%s331 + $0x170] sm:$0xff]
      %v3075 = vld [vmem:[%s331 + $0x188] sm:$0xff]
      %v3076 = vld [vmem:[%s331 + $0x190] sm:$0xff]
      %v3077 = vld [vmem:[%s331 + $0x1a8] sm:$0xff]
      %v3078 = vld [vmem:[%s331 + $0x1b0] sm:$0xff]
      %v3079 = vld [vmem:[%s331 + $0x1c8] sm:$0xff]
      %v3080 = vld [vmem:[%s331 + $0x1d0] sm:$0xff]
      %v3081 = vld [vmem:[%s331 + $0x1e8] sm:$0xff]
      %v3082 = vld [vmem:[%s331 + $0x1f0] sm:$0xff]
      %3115 = vrot.lane.b32.xlu0 %v3051, 32
      %v3116 = vpop.permute.xlu0 %3115
      %3117 = vrot.lane.b32.xlu0 %v3052, 32
      %v3118 = vpop.permute.xlu0 %3117
      %3119 = vrot.lane.b32.xlu0 %v3053, 32
      %v3120 = vpop.permute.xlu0 %3119
      %3121 = vrot.lane.b32.xlu0 %v3054, 32
      %v3122 = vpop.permute.xlu0 %3121
      %3123 = vrot.lane.b32.xlu0 %v3055, 32
      %v3124 = vpop.permute.xlu0 %3123
      %3125 = vrot.lane.b32.xlu0 %v3056, 32
      %v3126 = vpop.permute.xlu0 %3125
      %3127 = vrot.lane.b32.xlu0 %v3057, 32
      %v3128 = vpop.permute.xlu0 %3127
      %3129 = vrot.lane.b32.xlu0 %v3058, 32
      %v3130 = vpop.permute.xlu0 %3129
      %3131 = vrot.lane.b32.xlu0 %v3059, 32
      %v3132 = vpop.permute.xlu0 %3131
      %3133 = vrot.lane.b32.xlu0 %v3060, 32
      %v3134 = vpop.permute.xlu0 %3133
      %3135 = vrot.lane.b32.xlu0 %v3061, 32
      %v3136 = vpop.permute.xlu0 %3135
      %3137 = vrot.lane.b32.xlu0 %v3062, 32
      %v3138 = vpop.permute.xlu0 %3137
      %3139 = vrot.lane.b32.xlu0 %v3063, 32
      %v3140 = vpop.permute.xlu0 %3139
      %3141 = vrot.lane.b32.xlu0 %v3064, 32
      %v3142 = vpop.permute.xlu0 %3141
      %3143 = vrot.lane.b32.xlu0 %v3065, 32
      %v3144 = vpop.permute.xlu0 %3143
      %3145 = vrot.lane.b32.xlu0 %v3066, 32
      %v3146 = vpop.permute.xlu0 %3145
      %3147 = vrot.lane.b32.xlu0 %v3067, 32
      %v3148 = vpop.permute.xlu0 %3147
      %3149 = vrot.lane.b32.xlu0 %v3068, 32
      %v3150 = vpop.permute.xlu0 %3149
      %3151 = vrot.lane.b32.xlu0 %v3069, 32
      %v3152 = vpop.permute.xlu0 %3151
      %3153 = vrot.lane.b32.xlu0 %v3070, 32
      %v3154 = vpop.permute.xlu0 %3153
      %3155 = vrot.lane.b32.xlu0 %v3071, 32
      %v3156 = vpop.permute.xlu0 %3155
      %3157 = vrot.lane.b32.xlu0 %v3072, 32
      %v3158 = vpop.permute.xlu0 %3157
      %3159 = vrot.lane.b32.xlu0 %v3073, 32
      %v3160 = vpop.permute.xlu0 %3159
      %3161 = vrot.lane.b32.xlu0 %v3074, 32
      %v3162 = vpop.permute.xlu0 %3161
      %3163 = vrot.lane.b32.xlu0 %v3075, 32
      %v3164 = vpop.permute.xlu0 %3163
      %3165 = vrot.lane.b32.xlu0 %v3076, 32
      %v3166 = vpop.permute.xlu0 %3165
      %3167 = vrot.lane.b32.xlu0 %v3077, 32
      %v3168 = vpop.permute.xlu0 %3167
      %3169 = vrot.lane.b32.xlu0 %v3078, 32
      %v3170 = vpop.permute.xlu0 %3169
      %3171 = vrot.lane.b32.xlu0 %v3079, 32
      %v3172 = vpop.permute.xlu0 %3171
      %3173 = vrot.lane.b32.xlu0 %v3080, 32
      %v3174 = vpop.permute.xlu0 %3173
      %3175 = vrot.lane.b32.xlu0 %v3081, 32
      %v3176 = vpop.permute.xlu0 %3175
      %3177 = vrot.lane.b32.xlu0 %v3082, 32
      %v3178 = vpop.permute.xlu0 %3177
      %vm3211 = vcmask 326912
      %3212 = vst.msk [vmem:[#allocation3] sm:$0xff] %vm3211, %v3116
      %3213 = vst.msk [vmem:[#allocation3 + $0x8] sm:$0xff] %vm3211, %v3118
      %3214 = vst.msk [vmem:[#allocation3 + $0x10] sm:$0xff] %vm3211, %v3120
      %3215 = vst.msk [vmem:[#allocation3 + $0x18] sm:$0xff] %vm3211, %v3122
      %3216 = vst.msk [vmem:[#allocation3 + $0x20] sm:$0xff] %vm3211, %v3124
      %3217 = vst.msk [vmem:[#allocation3 + $0x28] sm:$0xff] %vm3211, %v3126
      %3218 = vst.msk [vmem:[#allocation3 + $0x30] sm:$0xff] %vm3211, %v3128
      %3219 = vst.msk [vmem:[#allocation3 + $0x38] sm:$0xff] %vm3211, %v3130
      %3220 = vst.msk [vmem:[#allocation3 + $0x40] sm:$0xff] %vm3211, %v3132
      %3221 = vst.msk [vmem:[#allocation3 + $0x48] sm:$0xff] %vm3211, %v3134
      %3222 = vst.msk [vmem:[#allocation3 + $0x50] sm:$0xff] %vm3211, %v3136
      %3223 = vst.msk [vmem:[#allocation3 + $0x58] sm:$0xff] %vm3211, %v3138
      %3224 = vst.msk [vmem:[#allocation3 + $0x60] sm:$0xff] %vm3211, %v3140
      %3225 = vst.msk [vmem:[#allocation3 + $0x68] sm:$0xff] %vm3211, %v3142
      %3226 = vst.msk [vmem:[#allocation3 + $0x70] sm:$0xff] %vm3211, %v3144
      %3227 = vst.msk [vmem:[#allocation3 + $0x78] sm:$0xff] %vm3211, %v3146
      %3228 = vst.msk [vmem:[#allocation3 + $0x80] sm:$0xff] %vm3211, %v3148
      %3229 = vst.msk [vmem:[#allocation3 + $0x88] sm:$0xff] %vm3211, %v3150
      %3230 = vst.msk [vmem:[#allocation3 + $0x90] sm:$0xff] %vm3211, %v3152
      %3231 = vst.msk [vmem:[#allocation3 + $0x98] sm:$0xff] %vm3211, %v3154
      %3232 = vst.msk [vmem:[#allocation3 + $0xa0] sm:$0xff] %vm3211, %v3156
      %3233 = vst.msk [vmem:[#allocation3 + $0xa8] sm:$0xff] %vm3211, %v3158
      %3234 = vst.msk [vmem:[#allocation3 + $0xb0] sm:$0xff] %vm3211, %v3160
      %3235 = vst.msk [vmem:[#allocation3 + $0xb8] sm:$0xff] %vm3211, %v3162
      %3236 = vst.msk [vmem:[#allocation3 + $0xc0] sm:$0xff] %vm3211, %v3164
      %3237 = vst.msk [vmem:[#allocation3 + $0xc8] sm:$0xff] %vm3211, %v3166
      %3238 = vst.msk [vmem:[#allocation3 + $0xd0] sm:$0xff] %vm3211, %v3168
      %3239 = vst.msk [vmem:[#allocation3 + $0xd8] sm:$0xff] %vm3211, %v3170
      %3240 = vst.msk [vmem:[#allocation3 + $0xe0] sm:$0xff] %vm3211, %v3172
      %3241 = vst.msk [vmem:[#allocation3 + $0xe8] sm:$0xff] %vm3211, %v3174
      %3242 = vst.msk [vmem:[#allocation3 + $0xf0] sm:$0xff] %vm3211, %v3176
      %3243 = vst.msk [vmem:[#allocation3 + $0xf8] sm:$0xff] %vm3211, %v3178
      %v3244 = vld [vmem:[%s331 + $0x9] sm:$0xff]
      %v3245 = vld [vmem:[%s331 + $0x11] sm:$0xff]
      %v3246 = vld [vmem:[%s331 + $0x29] sm:$0xff]
      %v3247 = vld [vmem:[%s331 + $0x31] sm:$0xff]
      %v3248 = vld [vmem:[%s331 + $0x49] sm:$0xff]
      %v3249 = vld [vmem:[%s331 + $0x51] sm:$0xff]
      %v3250 = vld [vmem:[%s331 + $0x69] sm:$0xff]
      %v3251 = vld [vmem:[%s331 + $0x71] sm:$0xff]
      %v3252 = vld [vmem:[%s331 + $0x89] sm:$0xff]
      %v3253 = vld [vmem:[%s331 + $0x91] sm:$0xff]
      %v3254 = vld [vmem:[%s331 + $0xa9] sm:$0xff]
      %v3255 = vld [vmem:[%s331 + $0xb1] sm:$0xff]
      %v3256 = vld [vmem:[%s331 + $0xc9] sm:$0xff]
      %v3257 = vld [vmem:[%s331 + $0xd1] sm:$0xff]
      %v3258 = vld [vmem:[%s331 + $0xe9] sm:$0xff]
      %v3259 = vld [vmem:[%s331 + $0xf1] sm:$0xff]
      %v3260 = vld [vmem:[%s331 + $0x109] sm:$0xff]
      %v3261 = vld [vmem:[%s331 + $0x111] sm:$0xff]
      %v3262 = vld [vmem:[%s331 + $0x129] sm:$0xff]
      %v3263 = vld [vmem:[%s331 + $0x131] sm:$0xff]
      %v3264 = vld [vmem:[%s331 + $0x149] sm:$0xff]
      %v3265 = vld [vmem:[%s331 + $0x151] sm:$0xff]
      %v3266 = vld [vmem:[%s331 + $0x169] sm:$0xff]
      %v3267 = vld [vmem:[%s331 + $0x171] sm:$0xff]
      %v3268 = vld [vmem:[%s331 + $0x189] sm:$0xff]
      %v3269 = vld [vmem:[%s331 + $0x191] sm:$0xff]
      %v3270 = vld [vmem:[%s331 + $0x1a9] sm:$0xff]
      %v3271 = vld [vmem:[%s331 + $0x1b1] sm:$0xff]
      %v3272 = vld [vmem:[%s331 + $0x1c9] sm:$0xff]
      %v3273 = vld [vmem:[%s331 + $0x1d1] sm:$0xff]
      %v3274 = vld [vmem:[%s331 + $0x1e9] sm:$0xff]
      %v3275 = vld [vmem:[%s331 + $0x1f1] sm:$0xff]
      %3308 = vrot.lane.b32.xlu0 %v3244, 40
      %v3309 = vpop.permute.xlu0 %3308
      %3310 = vrot.lane.b32.xlu0 %v3245, 40
      %v3311 = vpop.permute.xlu0 %3310
      %3312 = vrot.lane.b32.xlu0 %v3246, 40
      %v3313 = vpop.permute.xlu0 %3312
      %3314 = vrot.lane.b32.xlu0 %v3247, 40
      %v3315 = vpop.permute.xlu0 %3314
      %3316 = vrot.lane.b32.xlu0 %v3248, 40
      %v3317 = vpop.permute.xlu0 %3316
      %3318 = vrot.lane.b32.xlu0 %v3249, 40
      %v3319 = vpop.permute.xlu0 %3318
      %3320 = vrot.lane.b32.xlu0 %v3250, 40
      %v3321 = vpop.permute.xlu0 %3320
      %3322 = vrot.lane.b32.xlu0 %v3251, 40
      %v3323 = vpop.permute.xlu0 %3322
      %3324 = vrot.lane.b32.xlu0 %v3252, 40
      %v3325 = vpop.permute.xlu0 %3324
      %3326 = vrot.lane.b32.xlu0 %v3253, 40
      %v3327 = vpop.permute.xlu0 %3326
      %3328 = vrot.lane.b32.xlu0 %v3254, 40
      %v3329 = vpop.permute.xlu0 %3328
      %3330 = vrot.lane.b32.xlu0 %v3255, 40
      %v3331 = vpop.permute.xlu0 %3330
      %3332 = vrot.lane.b32.xlu0 %v3256, 40
      %v3333 = vpop.permute.xlu0 %3332
      %3334 = vrot.lane.b32.xlu0 %v3257, 40
      %v3335 = vpop.permute.xlu0 %3334
      %3336 = vrot.lane.b32.xlu0 %v3258, 40
      %v3337 = vpop.permute.xlu0 %3336
      %3338 = vrot.lane.b32.xlu0 %v3259, 40
      %v3339 = vpop.permute.xlu0 %3338
      %3340 = vrot.lane.b32.xlu0 %v3260, 40
      %v3341 = vpop.permute.xlu0 %3340
      %3342 = vrot.lane.b32.xlu0 %v3261, 40
      %v3343 = vpop.permute.xlu0 %3342
      %3344 = vrot.lane.b32.xlu0 %v3262, 40
      %v3345 = vpop.permute.xlu0 %3344
      %3346 = vrot.lane.b32.xlu0 %v3263, 40
      %v3347 = vpop.permute.xlu0 %3346
      %3348 = vrot.lane.b32.xlu0 %v3264, 40
      %v3349 = vpop.permute.xlu0 %3348
      %3350 = vrot.lane.b32.xlu0 %v3265, 40
      %v3351 = vpop.permute.xlu0 %3350
      %3352 = vrot.lane.b32.xlu0 %v3266, 40
      %v3353 = vpop.permute.xlu0 %3352
      %3354 = vrot.lane.b32.xlu0 %v3267, 40
      %v3355 = vpop.permute.xlu0 %3354
      %3356 = vrot.lane.b32.xlu0 %v3268, 40
      %v3357 = vpop.permute.xlu0 %3356
      %3358 = vrot.lane.b32.xlu0 %v3269, 40
      %v3359 = vpop.permute.xlu0 %3358
      %3360 = vrot.lane.b32.xlu0 %v3270, 40
      %v3361 = vpop.permute.xlu0 %3360
      %3362 = vrot.lane.b32.xlu0 %v3271, 40
      %v3363 = vpop.permute.xlu0 %3362
      %3364 = vrot.lane.b32.xlu0 %v3272, 40
      %v3365 = vpop.permute.xlu0 %3364
      %3366 = vrot.lane.b32.xlu0 %v3273, 40
      %v3367 = vpop.permute.xlu0 %3366
      %3368 = vrot.lane.b32.xlu0 %v3274, 40
      %v3369 = vpop.permute.xlu0 %3368
      %3370 = vrot.lane.b32.xlu0 %v3275, 40
      %v3371 = vpop.permute.xlu0 %3370
      %vm3404 = vcmask 392512
      %3405 = vst.msk [vmem:[#allocation3] sm:$0xff] %vm3404, %v3309
      %3406 = vst.msk [vmem:[#allocation3 + $0x8] sm:$0xff] %vm3404, %v3311
      %3407 = vst.msk [vmem:[#allocation3 + $0x10] sm:$0xff] %vm3404, %v3313
      %3408 = vst.msk [vmem:[#allocation3 + $0x18] sm:$0xff] %vm3404, %v3315
      %3409 = vst.msk [vmem:[#allocation3 + $0x20] sm:$0xff] %vm3404, %v3317
      %3410 = vst.msk [vmem:[#allocation3 + $0x28] sm:$0xff] %vm3404, %v3319
      %3411 = vst.msk [vmem:[#allocation3 + $0x30] sm:$0xff] %vm3404, %v3321
      %3412 = vst.msk [vmem:[#allocation3 + $0x38] sm:$0xff] %vm3404, %v3323
      %3413 = vst.msk [vmem:[#allocation3 + $0x40] sm:$0xff] %vm3404, %v3325
      %3414 = vst.msk [vmem:[#allocation3 + $0x48] sm:$0xff] %vm3404, %v3327
      %3415 = vst.msk [vmem:[#allocation3 + $0x50] sm:$0xff] %vm3404, %v3329
      %3416 = vst.msk [vmem:[#allocation3 + $0x58] sm:$0xff] %vm3404, %v3331
      %3417 = vst.msk [vmem:[#allocation3 + $0x60] sm:$0xff] %vm3404, %v3333
      %3418 = vst.msk [vmem:[#allocation3 + $0x68] sm:$0xff] %vm3404, %v3335
      %3419 = vst.msk [vmem:[#allocation3 + $0x70] sm:$0xff] %vm3404, %v3337
      %3420 = vst.msk [vmem:[#allocation3 + $0x78] sm:$0xff] %vm3404, %v3339
      %3421 = vst.msk [vmem:[#allocation3 + $0x80] sm:$0xff] %vm3404, %v3341
      %3422 = vst.msk [vmem:[#allocation3 + $0x88] sm:$0xff] %vm3404, %v3343
      %3423 = vst.msk [vmem:[#allocation3 + $0x90] sm:$0xff] %vm3404, %v3345
      %3424 = vst.msk [vmem:[#allocation3 + $0x98] sm:$0xff] %vm3404, %v3347
      %3425 = vst.msk [vmem:[#allocation3 + $0xa0] sm:$0xff] %vm3404, %v3349
      %3426 = vst.msk [vmem:[#allocation3 + $0xa8] sm:$0xff] %vm3404, %v3351
      %3427 = vst.msk [vmem:[#allocation3 + $0xb0] sm:$0xff] %vm3404, %v3353
      %3428 = vst.msk [vmem:[#allocation3 + $0xb8] sm:$0xff] %vm3404, %v3355
      %3429 = vst.msk [vmem:[#allocation3 + $0xc0] sm:$0xff] %vm3404, %v3357
      %3430 = vst.msk [vmem:[#allocation3 + $0xc8] sm:$0xff] %vm3404, %v3359
      %3431 = vst.msk [vmem:[#allocation3 + $0xd0] sm:$0xff] %vm3404, %v3361
      %3432 = vst.msk [vmem:[#allocation3 + $0xd8] sm:$0xff] %vm3404, %v3363
      %3433 = vst.msk [vmem:[#allocation3 + $0xe0] sm:$0xff] %vm3404, %v3365
      %3434 = vst.msk [vmem:[#allocation3 + $0xe8] sm:$0xff] %vm3404, %v3367
      %3435 = vst.msk [vmem:[#allocation3 + $0xf0] sm:$0xff] %vm3404, %v3369
      %3436 = vst.msk [vmem:[#allocation3 + $0xf8] sm:$0xff] %vm3404, %v3371
      %v3437 = vld [vmem:[%s1394 + $0x7] sm:$0xff]
      %v3438 = vld [vmem:[%s1394 + $0xf] sm:$0xff]
      %v3439 = vld [vmem:[%s1394 + $0x27] sm:$0xff]
      %v3440 = vld [vmem:[%s1394 + $0x2f] sm:$0xff]
      %v3441 = vld [vmem:[%s1394 + $0x47] sm:$0xff]
      %v3442 = vld [vmem:[%s1394 + $0x4f] sm:$0xff]
      %v3443 = vld [vmem:[%s1394 + $0x67] sm:$0xff]
      %v3444 = vld [vmem:[%s1394 + $0x6f] sm:$0xff]
      %v3445 = vld [vmem:[%s1394 + $0x87] sm:$0xff]
      %v3446 = vld [vmem:[%s1394 + $0x8f] sm:$0xff]
      %v3447 = vld [vmem:[%s1394 + $0xa7] sm:$0xff]
      %v3448 = vld [vmem:[%s1394 + $0xaf] sm:$0xff]
      %v3449 = vld [vmem:[%s1394 + $0xc7] sm:$0xff]
      %v3450 = vld [vmem:[%s1394 + $0xcf] sm:$0xff]
      %v3451 = vld [vmem:[%s1394 + $0xe7] sm:$0xff]
      %v3452 = vld [vmem:[%s1394 + $0xef] sm:$0xff]
      %v3453 = vld [vmem:[%s1394 + $0x107] sm:$0xff]
      %v3454 = vld [vmem:[%s1394 + $0x10f] sm:$0xff]
      %v3455 = vld [vmem:[%s1394 + $0x127] sm:$0xff]
      %v3456 = vld [vmem:[%s1394 + $0x12f] sm:$0xff]
      %v3457 = vld [vmem:[%s1394 + $0x147] sm:$0xff]
      %v3458 = vld [vmem:[%s1394 + $0x14f] sm:$0xff]
      %v3459 = vld [vmem:[%s1394 + $0x167] sm:$0xff]
      %v3460 = vld [vmem:[%s1394 + $0x16f] sm:$0xff]
      %v3461 = vld [vmem:[%s1394 + $0x187] sm:$0xff]
      %v3462 = vld [vmem:[%s1394 + $0x18f] sm:$0xff]
      %v3463 = vld [vmem:[%s1394 + $0x1a7] sm:$0xff]
      %v3464 = vld [vmem:[%s1394 + $0x1af] sm:$0xff]
      %v3465 = vld [vmem:[%s1394 + $0x1c7] sm:$0xff]
      %v3466 = vld [vmem:[%s1394 + $0x1cf] sm:$0xff]
      %v3467 = vld [vmem:[%s1394 + $0x1e7] sm:$0xff]
      %v3468 = vld [vmem:[%s1394 + $0x1ef] sm:$0xff]
      %3501 = vrot.lane.b32.xlu0 %v3437, 48
      %v3502 = vpop.permute.xlu0 %3501
      %3503 = vrot.lane.b32.xlu0 %v3438, 48
      %v3504 = vpop.permute.xlu0 %3503
      %3505 = vrot.lane.b32.xlu0 %v3439, 48
      %v3506 = vpop.permute.xlu0 %3505
      %3507 = vrot.lane.b32.xlu0 %v3440, 48
      %v3508 = vpop.permute.xlu0 %3507
      %3509 = vrot.lane.b32.xlu0 %v3441, 48
      %v3510 = vpop.permute.xlu0 %3509
      %3511 = vrot.lane.b32.xlu0 %v3442, 48
      %v3512 = vpop.permute.xlu0 %3511
      %3513 = vrot.lane.b32.xlu0 %v3443, 48
      %v3514 = vpop.permute.xlu0 %3513
      %3515 = vrot.lane.b32.xlu0 %v3444, 48
      %v3516 = vpop.permute.xlu0 %3515
      %3517 = vrot.lane.b32.xlu0 %v3445, 48
      %v3518 = vpop.permute.xlu0 %3517
      %3519 = vrot.lane.b32.xlu0 %v3446, 48
      %v3520 = vpop.permute.xlu0 %3519
      %3521 = vrot.lane.b32.xlu0 %v3447, 48
      %v3522 = vpop.permute.xlu0 %3521
      %3523 = vrot.lane.b32.xlu0 %v3448, 48
      %v3524 = vpop.permute.xlu0 %3523
      %3525 = vrot.lane.b32.xlu0 %v3449, 48
      %v3526 = vpop.permute.xlu0 %3525
      %3527 = vrot.lane.b32.xlu0 %v3450, 48
      %v3528 = vpop.permute.xlu0 %3527
      %3529 = vrot.lane.b32.xlu0 %v3451, 48
      %v3530 = vpop.permute.xlu0 %3529
      %3531 = vrot.lane.b32.xlu0 %v3452, 48
      %v3532 = vpop.permute.xlu0 %3531
      %3533 = vrot.lane.b32.xlu0 %v3453, 48
      %v3534 = vpop.permute.xlu0 %3533
      %3535 = vrot.lane.b32.xlu0 %v3454, 48
      %v3536 = vpop.permute.xlu0 %3535
      %3537 = vrot.lane.b32.xlu0 %v3455, 48
      %v3538 = vpop.permute.xlu0 %3537
      %3539 = vrot.lane.b32.xlu0 %v3456, 48
      %v3540 = vpop.permute.xlu0 %3539
      %3541 = vrot.lane.b32.xlu0 %v3457, 48
      %v3542 = vpop.permute.xlu0 %3541
      %3543 = vrot.lane.b32.xlu0 %v3458, 48
      %v3544 = vpop.permute.xlu0 %3543
      %3545 = vrot.lane.b32.xlu0 %v3459, 48
      %v3546 = vpop.permute.xlu0 %3545
      %3547 = vrot.lane.b32.xlu0 %v3460, 48
      %v3548 = vpop.permute.xlu0 %3547
      %3549 = vrot.lane.b32.xlu0 %v3461, 48
      %v3550 = vpop.permute.xlu0 %3549
      %3551 = vrot.lane.b32.xlu0 %v3462, 48
      %v3552 = vpop.permute.xlu0 %3551
      %3553 = vrot.lane.b32.xlu0 %v3463, 48
      %v3554 = vpop.permute.xlu0 %3553
      %3555 = vrot.lane.b32.xlu0 %v3464, 48
      %v3556 = vpop.permute.xlu0 %3555
      %3557 = vrot.lane.b32.xlu0 %v3465, 48
      %v3558 = vpop.permute.xlu0 %3557
      %3559 = vrot.lane.b32.xlu0 %v3466, 48
      %v3560 = vpop.permute.xlu0 %3559
      %3561 = vrot.lane.b32.xlu0 %v3467, 48
      %v3562 = vpop.permute.xlu0 %3561
      %3563 = vrot.lane.b32.xlu0 %v3468, 48
      %v3564 = vpop.permute.xlu0 %3563
      %vm3597 = vcmask 458112
      %3598 = vst.msk [vmem:[#allocation3] sm:$0xff] %vm3597, %v3502
      %3599 = vst.msk [vmem:[#allocation3 + $0x8] sm:$0xff] %vm3597, %v3504
      %3600 = vst.msk [vmem:[#allocation3 + $0x10] sm:$0xff] %vm3597, %v3506
      %3601 = vst.msk [vmem:[#allocation3 + $0x18] sm:$0xff] %vm3597, %v3508
      %3602 = vst.msk [vmem:[#allocation3 + $0x20] sm:$0xff] %vm3597, %v3510
      %3603 = vst.msk [vmem:[#allocation3 + $0x28] sm:$0xff] %vm3597, %v3512
      %3604 = vst.msk [vmem:[#allocation3 + $0x30] sm:$0xff] %vm3597, %v3514
      %3605 = vst.msk [vmem:[#allocation3 + $0x38] sm:$0xff] %vm3597, %v3516
      %3606 = vst.msk [vmem:[#allocation3 + $0x40] sm:$0xff] %vm3597, %v3518
      %3607 = vst.msk [vmem:[#allocation3 + $0x48] sm:$0xff] %vm3597, %v3520
      %3608 = vst.msk [vmem:[#allocation3 + $0x50] sm:$0xff] %vm3597, %v3522
      %3609 = vst.msk [vmem:[#allocation3 + $0x58] sm:$0xff] %vm3597, %v3524
      %3610 = vst.msk [vmem:[#allocation3 + $0x60] sm:$0xff] %vm3597, %v3526
      %3611 = vst.msk [vmem:[#allocation3 + $0x68] sm:$0xff] %vm3597, %v3528
      %3612 = vst.msk [vmem:[#allocation3 + $0x70] sm:$0xff] %vm3597, %v3530
      %3613 = vst.msk [vmem:[#allocation3 + $0x78] sm:$0xff] %vm3597, %v3532
      %3614 = vst.msk [vmem:[#allocation3 + $0x80] sm:$0xff] %vm3597, %v3534
      %3615 = vst.msk [vmem:[#allocation3 + $0x88] sm:$0xff] %vm3597, %v3536
      %3616 = vst.msk [vmem:[#allocation3 + $0x90] sm:$0xff] %vm3597, %v3538
      %3617 = vst.msk [vmem:[#allocation3 + $0x98] sm:$0xff] %vm3597, %v3540
      %3618 = vst.msk [vmem:[#allocation3 + $0xa0] sm:$0xff] %vm3597, %v3542
      %3619 = vst.msk [vmem:[#allocation3 + $0xa8] sm:$0xff] %vm3597, %v3544
      %3620 = vst.msk [vmem:[#allocation3 + $0xb0] sm:$0xff] %vm3597, %v3546
      %3621 = vst.msk [vmem:[#allocation3 + $0xb8] sm:$0xff] %vm3597, %v3548
      %3622 = vst.msk [vmem:[#allocation3 + $0xc0] sm:$0xff] %vm3597, %v3550
      %3623 = vst.msk [vmem:[#allocation3 + $0xc8] sm:$0xff] %vm3597, %v3552
      %3624 = vst.msk [vmem:[#allocation3 + $0xd0] sm:$0xff] %vm3597, %v3554
      %3625 = vst.msk [vmem:[#allocation3 + $0xd8] sm:$0xff] %vm3597, %v3556
      %3626 = vst.msk [vmem:[#allocation3 + $0xe0] sm:$0xff] %vm3597, %v3558
      %3627 = vst.msk [vmem:[#allocation3 + $0xe8] sm:$0xff] %vm3597, %v3560
      %3628 = vst.msk [vmem:[#allocation3 + $0xf0] sm:$0xff] %vm3597, %v3562
      %3629 = vst.msk [vmem:[#allocation3 + $0xf8] sm:$0xff] %vm3597, %v3564
      %v3630 = vld [vmem:[%s1394 + $0x8] sm:$0xff]
      %v3631 = vld [vmem:[%s1394 + $0x10] sm:$0xff]
      %v3632 = vld [vmem:[%s1394 + $0x28] sm:$0xff]
      %v3633 = vld [vmem:[%s1394 + $0x30] sm:$0xff]
      %v3634 = vld [vmem:[%s1394 + $0x48] sm:$0xff]
      %v3635 = vld [vmem:[%s1394 + $0x50] sm:$0xff]
      %v3636 = vld [vmem:[%s1394 + $0x68] sm:$0xff]
      %v3637 = vld [vmem:[%s1394 + $0x70] sm:$0xff]
      %v3638 = vld [vmem:[%s1394 + $0x88] sm:$0xff]
      %v3639 = vld [vmem:[%s1394 + $0x90] sm:$0xff]
      %v3640 = vld [vmem:[%s1394 + $0xa8] sm:$0xff]
      %v3641 = vld [vmem:[%s1394 + $0xb0] sm:$0xff]
      %v3642 = vld [vmem:[%s1394 + $0xc8] sm:$0xff]
      %v3643 = vld [vmem:[%s1394 + $0xd0] sm:$0xff]
      %v3644 = vld [vmem:[%s1394 + $0xe8] sm:$0xff]
      %v3645 = vld [vmem:[%s1394 + $0xf0] sm:$0xff]
      %v3646 = vld [vmem:[%s1394 + $0x108] sm:$0xff]
      %v3647 = vld [vmem:[%s1394 + $0x110] sm:$0xff]
      %v3648 = vld [vmem:[%s1394 + $0x128] sm:$0xff]
      %v3649 = vld [vmem:[%s1394 + $0x130] sm:$0xff]
      %v3650 = vld [vmem:[%s1394 + $0x148] sm:$0xff]
      %v3651 = vld [vmem:[%s1394 + $0x150] sm:$0xff]
      %v3652 = vld [vmem:[%s1394 + $0x168] sm:$0xff]
      %v3653 = vld [vmem:[%s1394 + $0x170] sm:$0xff]
      %v3654 = vld [vmem:[%s1394 + $0x188] sm:$0xff]
      %v3655 = vld [vmem:[%s1394 + $0x190] sm:$0xff]
      %v3656 = vld [vmem:[%s1394 + $0x1a8] sm:$0xff]
      %v3657 = vld [vmem:[%s1394 + $0x1b0] sm:$0xff]
      %v3658 = vld [vmem:[%s1394 + $0x1c8] sm:$0xff]
      %v3659 = vld [vmem:[%s1394 + $0x1d0] sm:$0xff]
      %v3660 = vld [vmem:[%s1394 + $0x1e8] sm:$0xff]
      %v3661 = vld [vmem:[%s1394 + $0x1f0] sm:$0xff]
      %3694 = vrot.lane.b32.xlu0 %v3630, 56
      %v3695 = vpop.permute.xlu0 %3694
      %3696 = vrot.lane.b32.xlu0 %v3631, 56
      %v3697 = vpop.permute.xlu0 %3696
      %3698 = vrot.lane.b32.xlu0 %v3632, 56
      %v3699 = vpop.permute.xlu0 %3698
      %3700 = vrot.lane.b32.xlu0 %v3633, 56
      %v3701 = vpop.permute.xlu0 %3700
      %3702 = vrot.lane.b32.xlu0 %v3634, 56
      %v3703 = vpop.permute.xlu0 %3702
      %3704 = vrot.lane.b32.xlu0 %v3635, 56
      %v3705 = vpop.permute.xlu0 %3704
      %3706 = vrot.lane.b32.xlu0 %v3636, 56
      %v3707 = vpop.permute.xlu0 %3706
      %3708 = vrot.lane.b32.xlu0 %v3637, 56
      %v3709 = vpop.permute.xlu0 %3708
      %3710 = vrot.lane.b32.xlu0 %v3638, 56
      %v3711 = vpop.permute.xlu0 %3710
      %3712 = vrot.lane.b32.xlu0 %v3639, 56
      %v3713 = vpop.permute.xlu0 %3712
      %3714 = vrot.lane.b32.xlu0 %v3640, 56
      %v3715 = vpop.permute.xlu0 %3714
      %3716 = vrot.lane.b32.xlu0 %v3641, 56
      %v3717 = vpop.permute.xlu0 %3716
      %3718 = vrot.lane.b32.xlu0 %v3642, 56
      %v3719 = vpop.permute.xlu0 %3718
      %3720 = vrot.lane.b32.xlu0 %v3643, 56
      %v3721 = vpop.permute.xlu0 %3720
      %3722 = vrot.lane.b32.xlu0 %v3644, 56
      %v3723 = vpop.permute.xlu0 %3722
      %3724 = vrot.lane.b32.xlu0 %v3645, 56
      %v3725 = vpop.permute.xlu0 %3724
      %3726 = vrot.lane.b32.xlu0 %v3646, 56
      %v3727 = vpop.permute.xlu0 %3726
      %3728 = vrot.lane.b32.xlu0 %v3647, 56
      %v3729 = vpop.permute.xlu0 %3728
      %3730 = vrot.lane.b32.xlu0 %v3648, 56
      %v3731 = vpop.permute.xlu0 %3730
      %3732 = vrot.lane.b32.xlu0 %v3649, 56
      %v3733 = vpop.permute.xlu0 %3732
      %3734 = vrot.lane.b32.xlu0 %v3650, 56
      %v3735 = vpop.permute.xlu0 %3734
      %3736 = vrot.lane.b32.xlu0 %v3651, 56
      %v3737 = vpop.permute.xlu0 %3736
      %3738 = vrot.lane.b32.xlu0 %v3652, 56
      %v3739 = vpop.permute.xlu0 %3738
      %3740 = vrot.lane.b32.xlu0 %v3653, 56
      %v3741 = vpop.permute.xlu0 %3740
      %3742 = vrot.lane.b32.xlu0 %v3654, 56
      %v3743 = vpop.permute.xlu0 %3742
      %3744 = vrot.lane.b32.xlu0 %v3655, 56
      %v3745 = vpop.permute.xlu0 %3744
      %3746 = vrot.lane.b32.xlu0 %v3656, 56
      %v3747 = vpop.permute.xlu0 %3746
      %3748 = vrot.lane.b32.xlu0 %v3657, 56
      %v3749 = vpop.permute.xlu0 %3748
      %3750 = vrot.lane.b32.xlu0 %v3658, 56
      %v3751 = vpop.permute.xlu0 %3750
      %3752 = vrot.lane.b32.xlu0 %v3659, 56
      %v3753 = vpop.permute.xlu0 %3752
      %3754 = vrot.lane.b32.xlu0 %v3660, 56
      %v3755 = vpop.permute.xlu0 %3754
      %3756 = vrot.lane.b32.xlu0 %v3661, 56
      %v3757 = vpop.permute.xlu0 %3756
      %vm3790 = vcmask 523712
      %3791 = vst.msk [vmem:[#allocation3] sm:$0xff] %vm3790, %v3695
      %3792 = vst.msk [vmem:[#allocation3 + $0x8] sm:$0xff] %vm3790, %v3697
      %3793 = vst.msk [vmem:[#allocation3 + $0x10] sm:$0xff] %vm3790, %v3699
      %3794 = vst.msk [vmem:[#allocation3 + $0x18] sm:$0xff] %vm3790, %v3701
      %3795 = vst.msk [vmem:[#allocation3 + $0x20] sm:$0xff] %vm3790, %v3703
      %3796 = vst.msk [vmem:[#allocation3 + $0x28] sm:$0xff] %vm3790, %v3705
      %3797 = vst.msk [vmem:[#allocation3 + $0x30] sm:$0xff] %vm3790, %v3707
      %3798 = vst.msk [vmem:[#allocation3 + $0x38] sm:$0xff] %vm3790, %v3709
      %3799 = vst.msk [vmem:[#allocation3 + $0x40] sm:$0xff] %vm3790, %v3711
      %3800 = vst.msk [vmem:[#allocation3 + $0x48] sm:$0xff] %vm3790, %v3713
      %3801 = vst.msk [vmem:[#allocation3 + $0x50] sm:$0xff] %vm3790, %v3715
      %3802 = vst.msk [vmem:[#allocation3 + $0x58] sm:$0xff] %vm3790, %v3717
      %3803 = vst.msk [vmem:[#allocation3 + $0x60] sm:$0xff] %vm3790, %v3719
      %3804 = vst.msk [vmem:[#allocation3 + $0x68] sm:$0xff] %vm3790, %v3721
      %3805 = vst.msk [vmem:[#allocation3 + $0x70] sm:$0xff] %vm3790, %v3723
      %3806 = vst.msk [vmem:[#allocation3 + $0x78] sm:$0xff] %vm3790, %v3725
      %3807 = vst.msk [vmem:[#allocation3 + $0x80] sm:$0xff] %vm3790, %v3727
      %3808 = vst.msk [vmem:[#allocation3 + $0x88] sm:$0xff] %vm3790, %v3729
      %3809 = vst.msk [vmem:[#allocation3 + $0x90] sm:$0xff] %vm3790, %v3731
      %3810 = vst.msk [vmem:[#allocation3 + $0x98] sm:$0xff] %vm3790, %v3733
      %3811 = vst.msk [vmem:[#allocation3 + $0xa0] sm:$0xff] %vm3790, %v3735
      %3812 = vst.msk [vmem:[#allocation3 + $0xa8] sm:$0xff] %vm3790, %v3737
      %3813 = vst.msk [vmem:[#allocation3 + $0xb0] sm:$0xff] %vm3790, %v3739
      %3814 = vst.msk [vmem:[#allocation3 + $0xb8] sm:$0xff] %vm3790, %v3741
      %3815 = vst.msk [vmem:[#allocation3 + $0xc0] sm:$0xff] %vm3790, %v3743
      %3816 = vst.msk [vmem:[#allocation3 + $0xc8] sm:$0xff] %vm3790, %v3745
      %3817 = vst.msk [vmem:[#allocation3 + $0xd0] sm:$0xff] %vm3790, %v3747
      %3818 = vst.msk [vmem:[#allocation3 + $0xd8] sm:$0xff] %vm3790, %v3749
      %3819 = vst.msk [vmem:[#allocation3 + $0xe0] sm:$0xff] %vm3790, %v3751
      %3820 = vst.msk [vmem:[#allocation3 + $0xe8] sm:$0xff] %vm3790, %v3753
      %3821 = vst.msk [vmem:[#allocation3 + $0xf0] sm:$0xff] %vm3790, %v3755
      %3822 = vst.msk [vmem:[#allocation3 + $0xf8] sm:$0xff] %vm3790, %v3757
      %v3823 = vld [vmem:[%s1394 + $0x9] sm:$0xff]
      %v3824 = vld [vmem:[%s1394 + $0x11] sm:$0xff]
      %v3825 = vld [vmem:[%s1394 + $0x29] sm:$0xff]
      %v3826 = vld [vmem:[%s1394 + $0x31] sm:$0xff]
      %v3827 = vld [vmem:[%s1394 + $0x49] sm:$0xff]
      %v3828 = vld [vmem:[%s1394 + $0x51] sm:$0xff]
      %v3829 = vld [vmem:[%s1394 + $0x69] sm:$0xff]
      %v3830 = vld [vmem:[%s1394 + $0x71] sm:$0xff]
      %v3831 = vld [vmem:[%s1394 + $0x89] sm:$0xff]
      %v3832 = vld [vmem:[%s1394 + $0x91] sm:$0xff]
      %v3833 = vld [vmem:[%s1394 + $0xa9] sm:$0xff]
      %v3834 = vld [vmem:[%s1394 + $0xb1] sm:$0xff]
      %v3835 = vld [vmem:[%s1394 + $0xc9] sm:$0xff]
      %v3836 = vld [vmem:[%s1394 + $0xd1] sm:$0xff]
      %v3837 = vld [vmem:[%s1394 + $0xe9] sm:$0xff]
      %v3838 = vld [vmem:[%s1394 + $0xf1] sm:$0xff]
      %v3839 = vld [vmem:[%s1394 + $0x109] sm:$0xff]
      %v3840 = vld [vmem:[%s1394 + $0x111] sm:$0xff]
      %v3841 = vld [vmem:[%s1394 + $0x129] sm:$0xff]
      %v3842 = vld [vmem:[%s1394 + $0x131] sm:$0xff]
      %v3843 = vld [vmem:[%s1394 + $0x149] sm:$0xff]
      %v3844 = vld [vmem:[%s1394 + $0x151] sm:$0xff]
      %v3845 = vld [vmem:[%s1394 + $0x169] sm:$0xff]
      %v3846 = vld [vmem:[%s1394 + $0x171] sm:$0xff]
      %v3847 = vld [vmem:[%s1394 + $0x189] sm:$0xff]
      %v3848 = vld [vmem:[%s1394 + $0x191] sm:$0xff]
      %v3849 = vld [vmem:[%s1394 + $0x1a9] sm:$0xff]
      %v3850 = vld [vmem:[%s1394 + $0x1b1] sm:$0xff]
      %v3851 = vld [vmem:[%s1394 + $0x1c9] sm:$0xff]
      %v3852 = vld [vmem:[%s1394 + $0x1d1] sm:$0xff]
      %v3853 = vld [vmem:[%s1394 + $0x1e9] sm:$0xff]
      %v3854 = vld [vmem:[%s1394 + $0x1f1] sm:$0xff]
      %3887 = vrot.lane.b32.xlu0 %v3823, 64
      %v3888 = vpop.permute.xlu0 %3887
      %3889 = vrot.lane.b32.xlu0 %v3824, 64
      %v3890 = vpop.permute.xlu0 %3889
      %3891 = vrot.lane.b32.xlu0 %v3825, 64
      %v3892 = vpop.permute.xlu0 %3891
      %3893 = vrot.lane.b32.xlu0 %v3826, 64
      %v3894 = vpop.permute.xlu0 %3893
      %3895 = vrot.lane.b32.xlu0 %v3827, 64
      %v3896 = vpop.permute.xlu0 %3895
      %3897 = vrot.lane.b32.xlu0 %v3828, 64
      %v3898 = vpop.permute.xlu0 %3897
      %3899 = vrot.lane.b32.xlu0 %v3829, 64
      %v3900 = vpop.permute.xlu0 %3899
      %3901 = vrot.lane.b32.xlu0 %v3830, 64
      %v3902 = vpop.permute.xlu0 %3901
      %3903 = vrot.lane.b32.xlu0 %v3831, 64
      %v3904 = vpop.permute.xlu0 %3903
      %3905 = vrot.lane.b32.xlu0 %v3832, 64
      %v3906 = vpop.permute.xlu0 %3905
      %3907 = vrot.lane.b32.xlu0 %v3833, 64
      %v3908 = vpop.permute.xlu0 %3907
      %3909 = vrot.lane.b32.xlu0 %v3834, 64
      %v3910 = vpop.permute.xlu0 %3909
      %3911 = vrot.lane.b32.xlu0 %v3835, 64
      %v3912 = vpop.permute.xlu0 %3911
      %3913 = vrot.lane.b32.xlu0 %v3836, 64
      %v3914 = vpop.permute.xlu0 %3913
      %3915 = vrot.lane.b32.xlu0 %v3837, 64
      %v3916 = vpop.permute.xlu0 %3915
      %3917 = vrot.lane.b32.xlu0 %v3838, 64
      %v3918 = vpop.permute.xlu0 %3917
      %3919 = vrot.lane.b32.xlu0 %v3839, 64
      %v3920 = vpop.permute.xlu0 %3919
      %3921 = vrot.lane.b32.xlu0 %v3840, 64
      %v3922 = vpop.permute.xlu0 %3921
      %3923 = vrot.lane.b32.xlu0 %v3841, 64
      %v3924 = vpop.permute.xlu0 %3923
      %3925 = vrot.lane.b32.xlu0 %v3842, 64
      %v3926 = vpop.permute.xlu0 %3925
      %3927 = vrot.lane.b32.xlu0 %v3843, 64
      %v3928 = vpop.permute.xlu0 %3927
      %3929 = vrot.lane.b32.xlu0 %v3844, 64
      %v3930 = vpop.permute.xlu0 %3929
      %3931 = vrot.lane.b32.xlu0 %v3845, 64
      %v3932 = vpop.permute.xlu0 %3931
      %3933 = vrot.lane.b32.xlu0 %v3846, 64
      %v3934 = vpop.permute.xlu0 %3933
      %3935 = vrot.lane.b32.xlu0 %v3847, 64
      %v3936 = vpop.permute.xlu0 %3935
      %3937 = vrot.lane.b32.xlu0 %v3848, 64
      %v3938 = vpop.permute.xlu0 %3937
      %3939 = vrot.lane.b32.xlu0 %v3849, 64
      %v3940 = vpop.permute.xlu0 %3939
      %3941 = vrot.lane.b32.xlu0 %v3850, 64
      %v3942 = vpop.permute.xlu0 %3941
      %3943 = vrot.lane.b32.xlu0 %v3851, 64
      %v3944 = vpop.permute.xlu0 %3943
      %3945 = vrot.lane.b32.xlu0 %v3852, 64
      %v3946 = vpop.permute.xlu0 %3945
      %3947 = vrot.lane.b32.xlu0 %v3853, 64
      %v3948 = vpop.permute.xlu0 %3947
      %3949 = vrot.lane.b32.xlu0 %v3854, 64
      %v3950 = vpop.permute.xlu0 %3949
      %vm3983 = vcmask 589312
      %3984 = vst.msk [vmem:[#allocation3] sm:$0xff] %vm3983, %v3888
      %3985 = vst.msk [vmem:[#allocation3 + $0x8] sm:$0xff] %vm3983, %v3890
      %3986 = vst.msk [vmem:[#allocation3 + $0x10] sm:$0xff] %vm3983, %v3892
      %3987 = vst.msk [vmem:[#allocation3 + $0x18] sm:$0xff] %vm3983, %v3894
      %3988 = vst.msk [vmem:[#allocation3 + $0x20] sm:$0xff] %vm3983, %v3896
      %3989 = vst.msk [vmem:[#allocation3 + $0x28] sm:$0xff] %vm3983, %v3898
      %3990 = vst.msk [vmem:[#allocation3 + $0x30] sm:$0xff] %vm3983, %v3900
      %3991 = vst.msk [vmem:[#allocation3 + $0x38] sm:$0xff] %vm3983, %v3902
      %3992 = vst.msk [vmem:[#allocation3 + $0x40] sm:$0xff] %vm3983, %v3904
      %3993 = vst.msk [vmem:[#allocation3 + $0x48] sm:$0xff] %vm3983, %v3906
      %3994 = vst.msk [vmem:[#allocation3 + $0x50] sm:$0xff] %vm3983, %v3908
      %3995 = vst.msk [vmem:[#allocation3 + $0x58] sm:$0xff] %vm3983, %v3910
      %3996 = vst.msk [vmem:[#allocation3 + $0x60] sm:$0xff] %vm3983, %v3912
      %3997 = vst.msk [vmem:[#allocation3 + $0x68] sm:$0xff] %vm3983, %v3914
      %3998 = vst.msk [vmem:[#allocation3 + $0x70] sm:$0xff] %vm3983, %v3916
      %3999 = vst.msk [vmem:[#allocation3 + $0x78] sm:$0xff] %vm3983, %v3918
      %4000 = vst.msk [vmem:[#allocation3 + $0x80] sm:$0xff] %vm3983, %v3920
      %4001 = vst.msk [vmem:[#allocation3 + $0x88] sm:$0xff] %vm3983, %v3922
      %4002 = vst.msk [vmem:[#allocation3 + $0x90] sm:$0xff] %vm3983, %v3924
      %4003 = vst.msk [vmem:[#allocation3 + $0x98] sm:$0xff] %vm3983, %v3926
      %4004 = vst.msk [vmem:[#allocation3 + $0xa0] sm:$0xff] %vm3983, %v3928
      %4005 = vst.msk [vmem:[#allocation3 + $0xa8] sm:$0xff] %vm3983, %v3930
      %4006 = vst.msk [vmem:[#allocation3 + $0xb0] sm:$0xff] %vm3983, %v3932
      %4007 = vst.msk [vmem:[#allocation3 + $0xb8] sm:$0xff] %vm3983, %v3934
      %4008 = vst.msk [vmem:[#allocation3 + $0xc0] sm:$0xff] %vm3983, %v3936
      %4009 = vst.msk [vmem:[#allocation3 + $0xc8] sm:$0xff] %vm3983, %v3938
      %4010 = vst.msk [vmem:[#allocation3 + $0xd0] sm:$0xff] %vm3983, %v3940
      %4011 = vst.msk [vmem:[#allocation3 + $0xd8] sm:$0xff] %vm3983, %v3942
      %4012 = vst.msk [vmem:[#allocation3 + $0xe0] sm:$0xff] %vm3983, %v3944
      %4013 = vst.msk [vmem:[#allocation3 + $0xe8] sm:$0xff] %vm3983, %v3946
      %4014 = vst.msk [vmem:[#allocation3 + $0xf0] sm:$0xff] %vm3983, %v3948
      %4015 = vst.msk [vmem:[#allocation3 + $0xf8] sm:$0xff] %vm3983, %v3950
      %v4016 = vld [vmem:[#allocation3] sm:$0xff]
      %v4017 = vld [vmem:[#allocation3 + $0x8] sm:$0xff]
      %v4018 = vld [vmem:[#allocation3 + $0x10] sm:$0xff]
      %v4019 = vld [vmem:[#allocation3 + $0x18] sm:$0xff]
      %v4020 = vld [vmem:[#allocation3 + $0x20] sm:$0xff]
      %v4021 = vld [vmem:[#allocation3 + $0x28] sm:$0xff]
      %v4022 = vld [vmem:[#allocation3 + $0x30] sm:$0xff]
      %v4023 = vld [vmem:[#allocation3 + $0x38] sm:$0xff]
      %v4024 = vld [vmem:[#allocation3 + $0x40] sm:$0xff]
      %v4025 = vld [vmem:[#allocation3 + $0x48] sm:$0xff]
      %v4026 = vld [vmem:[#allocation3 + $0x50] sm:$0xff]
      %v4027 = vld [vmem:[#allocation3 + $0x58] sm:$0xff]
      %v4028 = vld [vmem:[#allocation3 + $0x60] sm:$0xff]
      %v4029 = vld [vmem:[#allocation3 + $0x68] sm:$0xff]
      %v4030 = vld [vmem:[#allocation3 + $0x70] sm:$0xff]
      %v4031 = vld [vmem:[#allocation3 + $0x78] sm:$0xff]
      %v4032 = vld [vmem:[#allocation3 + $0x80] sm:$0xff]
      %v4033 = vld [vmem:[#allocation3 + $0x88] sm:$0xff]
      %v4034 = vld [vmem:[#allocation3 + $0x90] sm:$0xff]
      %v4035 = vld [vmem:[#allocation3 + $0x98] sm:$0xff]
      %v4036 = vld [vmem:[#allocation3 + $0xa0] sm:$0xff]
      %v4037 = vld [vmem:[#allocation3 + $0xa8] sm:$0xff]
      %v4038 = vld [vmem:[#allocation3 + $0xb0] sm:$0xff]
      %v4039 = vld [vmem:[#allocation3 + $0xb8] sm:$0xff]
      %v4040 = vld [vmem:[#allocation3 + $0xc0] sm:$0xff]
      %v4041 = vld [vmem:[#allocation3 + $0xc8] sm:$0xff]
      %v4042 = vld [vmem:[#allocation3 + $0xd0] sm:$0xff]
      %v4043 = vld [vmem:[#allocation3 + $0xd8] sm:$0xff]
      %v4044 = vld [vmem:[#allocation3 + $0xe0] sm:$0xff]
      %v4045 = vld [vmem:[#allocation3 + $0xe8] sm:$0xff]
      %v4046 = vld [vmem:[#allocation3 + $0xf0] sm:$0xff]
      %v4047 = vld [vmem:[#allocation3 + $0xf8] sm:$0xff]
      %v4048 = vld [vmem:[%s3] sm:$0xff]
      %v4049 = vld [vmem:[%s3 + $0x8] sm:$0xff]
      %v4050 = vld [vmem:[%s3 + $0x10] sm:$0xff]
      %v4051 = vld [vmem:[%s3 + $0x18] sm:$0xff]
      %v4052 = vld [vmem:[%s3 + $0x20] sm:$0xff]
      %v4053 = vld [vmem:[%s3 + $0x28] sm:$0xff]
      %v4054 = vld [vmem:[%s3 + $0x30] sm:$0xff]
      %v4055 = vld [vmem:[%s3 + $0x38] sm:$0xff]
      %v4056 = vld [vmem:[%s3 + $0x40] sm:$0xff]
      %v4057 = vld [vmem:[%s4] sm:$0x1]
      %v4059 = vlaneseq
      %v4060 = vshrl.u32 %v4059, 7
      %v4061 = vsub.s32 0, %v4060
      %v4062 = vrot.slane %v4057, %v4061
      %vm4064 = vcmask 588800
      %v4066 = vsel %vm4064, %v4016, 0
      %v4069 = vsel %vm4064, %v4017, 0
      %v4072 = vsel %vm4064, %v4018, 0
      %v4075 = vsel %vm4064, %v4019, 0
      %v4078 = vsel %vm4064, %v4020, 0
      %v4081 = vsel %vm4064, %v4021, 0
      %v4084 = vsel %vm4064, %v4022, 0
      %v4087 = vsel %vm4064, %v4023, 0
      %v4090 = vsel %vm4064, %v4024, 0
      %v4093 = vsel %vm4064, %v4025, 0
      %v4096 = vsel %vm4064, %v4026, 0
      %v4099 = vsel %vm4064, %v4027, 0
      %v4102 = vsel %vm4064, %v4028, 0
      %v4105 = vsel %vm4064, %v4029, 0
      %v4108 = vsel %vm4064, %v4030, 0
      %v4111 = vsel %vm4064, %v4031, 0
      %v4114 = vsel %vm4064, %v4032, 0
      %v4117 = vsel %vm4064, %v4033, 0
      %v4120 = vsel %vm4064, %v4034, 0
      %v4123 = vsel %vm4064, %v4035, 0
      %v4126 = vsel %vm4064, %v4036, 0
      %v4129 = vsel %vm4064, %v4037, 0
      %v4132 = vsel %vm4064, %v4038, 0
      %v4135 = vsel %vm4064, %v4039, 0
      %v4138 = vsel %vm4064, %v4040, 0
      %v4141 = vsel %vm4064, %v4041, 0
      %v4144 = vsel %vm4064, %v4042, 0
      %v4147 = vsel %vm4064, %v4043, 0
      %v4150 = vsel %vm4064, %v4044, 0
      %v4153 = vsel %vm4064, %v4045, 0
      %v4156 = vsel %vm4064, %v4046, 0
      %v4159 = vsel %vm4064, %v4047, 0
      %4161 = vmatprep.subr.mxu0 0.0
      %4162 = vmatpush1.msra.mxu0 %v4048
      %4163 = vmatprep.subr.mxu0 0.0
      %4164 = vmatpush1.msra.mxu0 %v4049
      %4165 = vmatprep.subr.mxu0 0.0
      %4166 = vmatpush1.msra.mxu0 %v4050
      %4167 = vmatprep.subr.mxu0 0.0
      %4168 = vmatpush1.msra.mxu0 %v4051
      %4169 = vmatprep.subr.mxu0 0.0
      %4170 = vmatpush1.msra.mxu0 %v4052
      %4171 = vmatprep.subr.mxu0 0.0
      %4172 = vmatpush1.msra.mxu0 %v4053
      %4173 = vmatprep.subr.mxu0 0.0
      %4174 = vmatpush1.msra.mxu0 %v4054
      %4175 = vmatprep.subr.mxu0 0.0
      %4176 = vmatpush1.msra.mxu0 %v4055
      %4177 = vmatprep.subr.mxu0 0.0
      %4178 = vmatpush1.msra.mxu0 %v4056
      %4179 = vmatprep.subr.mxu0 0.0
      %4180 = vmatpush1.msra.mxu0 0.0
      %4181 = vmatprep.subr.mxu0 0.0
      %4182 = vmatpush1.msra.mxu0 0.0
      %4183 = vmatprep.subr.mxu0 0.0
      %4184 = vmatpush1.msra.mxu0 0.0
      %4185 = vmatprep.subr.mxu0 0.0
      %4186 = vmatpush1.msra.mxu0 0.0
      %4187 = vmatprep.subr.mxu0 0.0
      %4188 = vmatpush1.msra.mxu0 0.0
      %4189 = vmatprep.subr.mxu0 0.0
      %4190 = vmatpush1.msra.mxu0 0.0
      %4191 = vmatprep.subr.mxu0 0.0
      %4192 = vmatpush1.msra.mxu0 0.0
      %4193 = vmatprep.subr.mxu0 0.0
      %4194 = vmatpush1.msra.mxu0 0.0
      %4195 = vmatprep.subr.mxu0 0.0
      %4196 = vmatpush1.msra.mxu0 0.0
      %4197 = vmatprep.subr.mxu0 0.0
      %4198 = vmatpush1.msra.mxu0 0.0
      %4199 = vmatprep.subr.mxu0 0.0
      %4200 = vmatpush1.msra.mxu0 0.0
      %4201 = vmatprep.subr.mxu0 0.0
      %4202 = vmatpush1.msra.mxu0 0.0
      %4203 = vmatprep.subr.mxu0 0.0
      %4204 = vmatpush1.msra.mxu0 0.0
      %4205 = vmatprep.subr.mxu0 0.0
      %4206 = vmatpush1.msra.mxu0 0.0
      %4207 = vmatprep.subr.mxu0 0.0
      %4208 = vmatpush1.msra.mxu0 0.0
      %4209 = vmatprep.subr.mxu0 0.0
      %4210 = vmatpush1.msra.mxu0 0.0
      %4211 = vmatprep.subr.mxu0 0.0
      %4212 = vmatpush1.msra.mxu0 0.0
      %4213 = vmatprep.subr.mxu0 0.0
      %4214 = vmatpush1.msra.mxu0 0.0
      %4215 = vmatprep.subr.mxu0 0.0
      %4216 = vmatpush1.msra.mxu0 0.0
      %4217 = vmatprep.subr.mxu0 0.0
      %4218 = vmatpush1.msra.mxu0 0.0
      %4219 = vmatprep.subr.mxu0 0.0
      %4220 = vmatpush1.msra.mxu0 0.0
      %4221 = vmatprep.subr.mxu0 0.0
      %4222 = vmatpush1.msra.mxu0 0.0
      %4223 = vmatprep.subr.mxu0 0.0
      %4224 = vmatpush1.msra.mxu0 0.0
      %4225 = vmatprep.mubr.f32.mxu0 0.0
      %4226 = vmatmul.mubr.f32.gmra.mrb[0].mxu0 %v4066
      %v4227 = vpop.f32.mrb[0].mxu0
      %v4228 = vadd.f32 %v4062, %v4227
      %v4229 = vpop.f32.mrb[0].mxu0
      %4230 = vmatprep.mubr.f32.mxu0 0.0
      %4231 = vmatmul.mubr.f32.gmra.mrb[0].mxu0 %v4069
      %v4232 = vpop.f32.mrb[0].mxu0
      %v4233 = vadd.f32 %v4062, %v4232
      %v4234 = vpop.f32.mrb[0].mxu0
      %4235 = vmatprep.mubr.f32.mxu0 0.0
      %4236 = vmatmul.mubr.f32.gmra.mrb[0].mxu0 %v4072
      %v4237 = vpop.f32.mrb[0].mxu0
      %v4238 = vadd.f32 %v4062, %v4237
      %v4239 = vpop.f32.mrb[0].mxu0
      %4240 = vmatprep.mubr.f32.mxu0 0.0
      %4241 = vmatmul.mubr.f32.gmra.mrb[0].mxu0 %v4075
      %v4242 = vpop.f32.mrb[0].mxu0
      %v4243 = vadd.f32 %v4062, %v4242
      %v4244 = vpop.f32.mrb[0].mxu0
      %4245 = vmatprep.mubr.f32.mxu0 0.0
      %4246 = vmatmul.mubr.f32.gmra.mrb[0].mxu0 %v4078
      %v4247 = vpop.f32.mrb[0].mxu0
      %v4248 = vadd.f32 %v4062, %v4247
      %v4249 = vpop.f32.mrb[0].mxu0
      %4250 = vmatprep.mubr.f32.mxu0 0.0
      %4251 = vmatmul.mubr.f32.gmra.mrb[0].mxu0 %v4081
      %v4252 = vpop.f32.mrb[0].mxu0
      %v4253 = vadd.f32 %v4062, %v4252
      %v4254 = vpop.f32.mrb[0].mxu0
      %4255 = vmatprep.mubr.f32.mxu0 0.0
      %4256 = vmatmul.mubr.f32.gmra.mrb[0].mxu0 %v4084
      %v4257 = vpop.f32.mrb[0].mxu0
      %v4258 = vadd.f32 %v4062, %v4257
      %v4259 = vpop.f32.mrb[0].mxu0
      %4260 = vmatprep.mubr.f32.mxu0 0.0
      %4261 = vmatmul.mubr.f32.gmra.mrb[0].mxu0 %v4087
      %v4262 = vpop.f32.mrb[0].mxu0
      %v4263 = vadd.f32 %v4062, %v4262
      %v4264 = vpop.f32.mrb[0].mxu0
      %4265 = vmatprep.mubr.f32.mxu0 0.0
      %4266 = vmatmul.mubr.f32.gmra.mrb[0].mxu0 %v4090
      %v4267 = vpop.f32.mrb[0].mxu0
      %v4268 = vadd.f32 %v4062, %v4267
      %v4269 = vpop.f32.mrb[0].mxu0
      %4270 = vmatprep.mubr.f32.mxu0 0.0
      %4271 = vmatmul.mubr.f32.gmra.mrb[0].mxu0 %v4093
      %v4272 = vpop.f32.mrb[0].mxu0
      %v4273 = vadd.f32 %v4062, %v4272
      %v4274 = vpop.f32.mrb[0].mxu0
      %4275 = vmatprep.mubr.f32.mxu0 0.0
      %4276 = vmatmul.mubr.f32.gmra.mrb[0].mxu0 %v4096
      %v4277 = vpop.f32.mrb[0].mxu0
      %v4278 = vadd.f32 %v4062, %v4277
      %v4279 = vpop.f32.mrb[0].mxu0
      %4280 = vmatprep.mubr.f32.mxu0 0.0
      %4281 = vmatmul.mubr.f32.gmra.mrb[0].mxu0 %v4099
      %v4282 = vpop.f32.mrb[0].mxu0
      %v4283 = vadd.f32 %v4062, %v4282
      %v4284 = vpop.f32.mrb[0].mxu0
      %4285 = vmatprep.mubr.f32.mxu0 0.0
      %4286 = vmatmul.mubr.f32.gmra.mrb[0].mxu0 %v4102
      %v4287 = vpop.f32.mrb[0].mxu0
      %v4288 = vadd.f32 %v4062, %v4287
      %v4289 = vpop.f32.mrb[0].mxu0
      %4290 = vmatprep.mubr.f32.mxu0 0.0
      %4291 = vmatmul.mubr.f32.gmra.mrb[0].mxu0 %v4105
      %v4292 = vpop.f32.mrb[0].mxu0
      %v4293 = vadd.f32 %v4062, %v4292
      %v4294 = vpop.f32.mrb[0].mxu0
      %4295 = vmatprep.mubr.f32.mxu0 0.0
      %4296 = vmatmul.mubr.f32.gmra.mrb[0].mxu0 %v4108
      %v4297 = vpop.f32.mrb[0].mxu0
      %v4298 = vadd.f32 %v4062, %v4297
      %v4299 = vpop.f32.mrb[0].mxu0
      %4300 = vmatprep.mubr.f32.mxu0 0.0
      %4301 = vmatmul.mubr.f32.gmra.mrb[0].mxu0 %v4111
      %v4302 = vpop.f32.mrb[0].mxu0
      %v4303 = vadd.f32 %v4062, %v4302
      %v4304 = vpop.f32.mrb[0].mxu0
      %4305 = vmatprep.mubr.f32.mxu0 0.0
      %4306 = vmatmul.mubr.f32.gmra.mrb[0].mxu0 %v4114
      %v4307 = vpop.f32.mrb[0].mxu0
      %v4308 = vadd.f32 %v4062, %v4307
      %v4309 = vpop.f32.mrb[0].mxu0
      %4310 = vmatprep.mubr.f32.mxu0 0.0
      %4311 = vmatmul.mubr.f32.gmra.mrb[0].mxu0 %v4117
      %v4312 = vpop.f32.mrb[0].mxu0
      %v4313 = vadd.f32 %v4062, %v4312
      %v4314 = vpop.f32.mrb[0].mxu0
      %4315 = vmatprep.mubr.f32.mxu0 0.0
      %4316 = vmatmul.mubr.f32.gmra.mrb[0].mxu0 %v4120
      %v4317 = vpop.f32.mrb[0].mxu0
      %v4318 = vadd.f32 %v4062, %v4317
      %v4319 = vpop.f32.mrb[0].mxu0
      %4320 = vmatprep.mubr.f32.mxu0 0.0
      %4321 = vmatmul.mubr.f32.gmra.mrb[0].mxu0 %v4123
      %v4322 = vpop.f32.mrb[0].mxu0
      %v4323 = vadd.f32 %v4062, %v4322
      %v4324 = vpop.f32.mrb[0].mxu0
      %4325 = vmatprep.mubr.f32.mxu0 0.0
      %4326 = vmatmul.mubr.f32.gmra.mrb[0].mxu0 %v4126
      %v4327 = vpop.f32.mrb[0].mxu0
      %v4328 = vadd.f32 %v4062, %v4327
      %v4329 = vpop.f32.mrb[0].mxu0
      %4330 = vmatprep.mubr.f32.mxu0 0.0
      %4331 = vmatmul.mubr.f32.gmra.mrb[0].mxu0 %v4129
      %v4332 = vpop.f32.mrb[0].mxu0
      %v4333 = vadd.f32 %v4062, %v4332
      %v4334 = vpop.f32.mrb[0].mxu0
      %4335 = vmatprep.mubr.f32.mxu0 0.0
      %4336 = vmatmul.mubr.f32.gmra.mrb[0].mxu0 %v4132
      %v4337 = vpop.f32.mrb[0].mxu0
      %v4338 = vadd.f32 %v4062, %v4337
      %v4339 = vpop.f32.mrb[0].mxu0
      %4340 = vmatprep.mubr.f32.mxu0 0.0
      %4341 = vmatmul.mubr.f32.gmra.mrb[0].mxu0 %v4135
      %v4342 = vpop.f32.mrb[0].mxu0
      %v4343 = vadd.f32 %v4062, %v4342
      %v4344 = vpop.f32.mrb[0].mxu0
      %4345 = vmatprep.mubr.f32.mxu0 0.0
      %4346 = vmatmul.mubr.f32.gmra.mrb[0].mxu0 %v4138
      %v4347 = vpop.f32.mrb[0].mxu0
      %v4348 = vadd.f32 %v4062, %v4347
      %v4349 = vpop.f32.mrb[0].mxu0
      %4350 = vmatprep.mubr.f32.mxu0 0.0
      %4351 = vmatmul.mubr.f32.gmra.mrb[0].mxu0 %v4141
      %v4352 = vpop.f32.mrb[0].mxu0
      %v4353 = vadd.f32 %v4062, %v4352
      %v4354 = vpop.f32.mrb[0].mxu0
      %4355 = vmatprep.mubr.f32.mxu0 0.0
      %4356 = vmatmul.mubr.f32.gmra.mrb[0].mxu0 %v4144
      %v4357 = vpop.f32.mrb[0].mxu0
      %v4358 = vadd.f32 %v4062, %v4357
      %v4359 = vpop.f32.mrb[0].mxu0
      %4360 = vmatprep.mubr.f32.mxu0 0.0
      %4361 = vmatmul.mubr.f32.gmra.mrb[0].mxu0 %v4147
      %v4362 = vpop.f32.mrb[0].mxu0
      %v4363 = vadd.f32 %v4062, %v4362
      %v4364 = vpop.f32.mrb[0].mxu0
      %4365 = vmatprep.mubr.f32.mxu0 0.0
      %4366 = vmatmul.mubr.f32.gmra.mrb[0].mxu0 %v4150
      %v4367 = vpop.f32.mrb[0].mxu0
      %v4368 = vadd.f32 %v4062, %v4367
      %v4369 = vpop.f32.mrb[0].mxu0
      %4370 = vmatprep.mubr.f32.mxu0 0.0
      %4371 = vmatmul.mubr.f32.gmra.mrb[0].mxu0 %v4153
      %v4372 = vpop.f32.mrb[0].mxu0
      %v4373 = vadd.f32 %v4062, %v4372
      %v4374 = vpop.f32.mrb[0].mxu0
      %4375 = vmatprep.mubr.f32.mxu0 0.0
      %4376 = vmatmul.mubr.f32.gmra.mrb[0].mxu0 %v4156
      %v4377 = vpop.f32.mrb[0].mxu0
      %v4378 = vadd.f32 %v4062, %v4377
      %v4379 = vpop.f32.mrb[0].mxu0
      %4380 = vmatprep.mubr.f32.mxu0 0.0
      %4381 = vmatmul.mubr.f32.gmra.mrb[0].mxu0 %v4159
      %v4382 = vpop.f32.mrb[0].mxu0
      %v4383 = vadd.f32 %v4062, %v4382
      %v4384 = vpop.f32.mrb[0].mxu0
      %4385 = vdwg.mxu0
      %v4386 = vmax.f32 %v4228, 0.0
      %v4387 = vmax.f32 %v4233, 0.0
      %v4388 = vmax.f32 %v4238, 0.0
      %v4389 = vmax.f32 %v4243, 0.0
      %v4390 = vmax.f32 %v4248, 0.0
      %v4391 = vmax.f32 %v4253, 0.0
      %v4392 = vmax.f32 %v4258, 0.0
      %v4393 = vmax.f32 %v4263, 0.0
      %v4394 = vmax.f32 %v4268, 0.0
      %v4395 = vmax.f32 %v4273, 0.0
      %v4396 = vmax.f32 %v4278, 0.0
      %v4397 = vmax.f32 %v4283, 0.0
      %v4398 = vmax.f32 %v4288, 0.0
      %v4399 = vmax.f32 %v4293, 0.0
      %v4400 = vmax.f32 %v4298, 0.0
      %v4401 = vmax.f32 %v4303, 0.0
      %v4402 = vmax.f32 %v4308, 0.0
      %v4403 = vmax.f32 %v4313, 0.0
      %v4404 = vmax.f32 %v4318, 0.0
      %v4405 = vmax.f32 %v4323, 0.0
      %v4406 = vmax.f32 %v4328, 0.0
      %v4407 = vmax.f32 %v4333, 0.0
      %v4408 = vmax.f32 %v4338, 0.0
      %v4409 = vmax.f32 %v4343, 0.0
      %v4410 = vmax.f32 %v4348, 0.0
      %v4411 = vmax.f32 %v4353, 0.0
      %v4412 = vmax.f32 %v4358, 0.0
      %v4413 = vmax.f32 %v4363, 0.0
      %v4414 = vmax.f32 %v4368, 0.0
      %v4415 = vmax.f32 %v4373, 0.0
      %v4416 = vmax.f32 %v4378, 0.0
      %v4417 = vmax.f32 %v4383, 0.0
      %v4450 = vcombine.high %v4386, %v4386
      %v4452 = vunpack.c.l.s4 1983009808
      %v4453 = vunpack.c.0.s8 %v4452
      %v4454 = vlaneseq
      %v4455 = vshrl.u32 %v4454, 7
      %v4456 = vsub.s32 %v4453, %v4455
      %v4457 = vrot.slane %v4386, %v4456
      %v4459 = vunpack.c.l.s4 1983009808
      %v4460 = vunpack.c.0.s8 %v4459
      %v4461 = vlaneseq
      %v4462 = vshrl.u32 %v4461, 7
      %v4463 = vsub.s32 %v4460, %v4462
      %v4464 = vrot.slane %v4450, %v4463
      %v4465 = vcombine.high %v4457, %v4457
      %v4466 = vcombine.high %v4464, %v4464
      %v4467 = vcombine.high %v4387, %v4387
      %v4469 = vunpack.c.l.s4 1983009808
      %v4470 = vunpack.c.0.s8 %v4469
      %v4471 = vlaneseq
      %v4472 = vshrl.u32 %v4471, 7
      %v4473 = vsub.s32 %v4470, %v4472
      %v4474 = vrot.slane %v4387, %v4473
      %v4476 = vunpack.c.l.s4 1983009808
      %v4477 = vunpack.c.0.s8 %v4476
      %v4478 = vlaneseq
      %v4479 = vshrl.u32 %v4478, 7
      %v4480 = vsub.s32 %v4477, %v4479
      %v4481 = vrot.slane %v4467, %v4480
      %v4482 = vcombine.high %v4474, %v4474
      %v4483 = vcombine.high %v4481, %v4481
      %v4484 = vcombine.high %v4388, %v4388
      %v4486 = vunpack.c.l.s4 1983009808
      %v4487 = vunpack.c.0.s8 %v4486
      %v4488 = vlaneseq
      %v4489 = vshrl.u32 %v4488, 7
      %v4490 = vsub.s32 %v4487, %v4489
      %v4491 = vrot.slane %v4388, %v4490
      %v4493 = vunpack.c.l.s4 1983009808
      %v4494 = vunpack.c.0.s8 %v4493
      %v4495 = vlaneseq
      %v4496 = vshrl.u32 %v4495, 7
      %v4497 = vsub.s32 %v4494, %v4496
      %v4498 = vrot.slane %v4484, %v4497
      %v4499 = vcombine.high %v4491, %v4491
      %v4500 = vcombine.high %v4498, %v4498
      %v4501 = vcombine.high %v4389, %v4389
      %v4503 = vunpack.c.l.s4 1983009808
      %v4504 = vunpack.c.0.s8 %v4503
      %v4505 = vlaneseq
      %v4506 = vshrl.u32 %v4505, 7
      %v4507 = vsub.s32 %v4504, %v4506
      %v4508 = vrot.slane %v4389, %v4507
      %v4510 = vunpack.c.l.s4 1983009808
      %v4511 = vunpack.c.0.s8 %v4510
      %v4512 = vlaneseq
      %v4513 = vshrl.u32 %v4512, 7
      %v4514 = vsub.s32 %v4511, %v4513
      %v4515 = vrot.slane %v4501, %v4514
      %v4516 = vcombine.high %v4508, %v4508
      %v4517 = vcombine.high %v4515, %v4515
      %v4518 = vcombine.high %v4390, %v4390
      %v4520 = vunpack.c.l.s4 1983009808
      %v4521 = vunpack.c.0.s8 %v4520
      %v4522 = vlaneseq
      %v4523 = vshrl.u32 %v4522, 7
      %v4524 = vsub.s32 %v4521, %v4523
      %v4525 = vrot.slane %v4390, %v4524
      %v4527 = vunpack.c.l.s4 1983009808
      %v4528 = vunpack.c.0.s8 %v4527
      %v4529 = vlaneseq
      %v4530 = vshrl.u32 %v4529, 7
      %v4531 = vsub.s32 %v4528, %v4530
      %v4532 = vrot.slane %v4518, %v4531
      %v4533 = vcombine.high %v4525, %v4525
      %v4534 = vcombine.high %v4532, %v4532
      %v4535 = vcombine.high %v4391, %v4391
      %v4537 = vunpack.c.l.s4 1983009808
      %v4538 = vunpack.c.0.s8 %v4537
      %v4539 = vlaneseq
      %v4540 = vshrl.u32 %v4539, 7
      %v4541 = vsub.s32 %v4538, %v4540
      %v4542 = vrot.slane %v4391, %v4541
      %v4544 = vunpack.c.l.s4 1983009808
      %v4545 = vunpack.c.0.s8 %v4544
      %v4546 = vlaneseq
      %v4547 = vshrl.u32 %v4546, 7
      %v4548 = vsub.s32 %v4545, %v4547
      %v4549 = vrot.slane %v4535, %v4548
      %v4550 = vcombine.high %v4542, %v4542
      %v4551 = vcombine.high %v4549, %v4549
      %v4552 = vcombine.high %v4392, %v4392
      %v4554 = vunpack.c.l.s4 1983009808
      %v4555 = vunpack.c.0.s8 %v4554
      %v4556 = vlaneseq
      %v4557 = vshrl.u32 %v4556, 7
      %v4558 = vsub.s32 %v4555, %v4557
      %v4559 = vrot.slane %v4392, %v4558
      %v4561 = vunpack.c.l.s4 1983009808
      %v4562 = vunpack.c.0.s8 %v4561
      %v4563 = vlaneseq
      %v4564 = vshrl.u32 %v4563, 7
      %v4565 = vsub.s32 %v4562, %v4564
      %v4566 = vrot.slane %v4552, %v4565
      %v4567 = vcombine.high %v4559, %v4559
      %v4568 = vcombine.high %v4566, %v4566
      %v4569 = vcombine.high %v4393, %v4393
      %v4571 = vunpack.c.l.s4 1983009808
      %v4572 = vunpack.c.0.s8 %v4571
      %v4573 = vlaneseq
      %v4574 = vshrl.u32 %v4573, 7
      %v4575 = vsub.s32 %v4572, %v4574
      %v4576 = vrot.slane %v4393, %v4575
      %v4578 = vunpack.c.l.s4 1983009808
      %v4579 = vunpack.c.0.s8 %v4578
      %v4580 = vlaneseq
      %v4581 = vshrl.u32 %v4580, 7
      %v4582 = vsub.s32 %v4579, %v4581
      %v4583 = vrot.slane %v4569, %v4582
      %v4584 = vcombine.high %v4576, %v4576
      %v4585 = vcombine.high %v4583, %v4583
      %v4586 = vcombine.high %v4394, %v4394
      %v4588 = vunpack.c.l.s4 1983009808
      %v4589 = vunpack.c.0.s8 %v4588
      %v4590 = vlaneseq
      %v4591 = vshrl.u32 %v4590, 7
      %v4592 = vsub.s32 %v4589, %v4591
      %v4593 = vrot.slane %v4394, %v4592
      %v4595 = vunpack.c.l.s4 1983009808
      %v4596 = vunpack.c.0.s8 %v4595
      %v4597 = vlaneseq
      %v4598 = vshrl.u32 %v4597, 7
      %v4599 = vsub.s32 %v4596, %v4598
      %v4600 = vrot.slane %v4586, %v4599
      %v4601 = vcombine.high %v4593, %v4593
      %v4602 = vcombine.high %v4600, %v4600
      %v4603 = vcombine.high %v4395, %v4395
      %v4605 = vunpack.c.l.s4 1983009808
      %v4606 = vunpack.c.0.s8 %v4605
      %v4607 = vlaneseq
      %v4608 = vshrl.u32 %v4607, 7
      %v4609 = vsub.s32 %v4606, %v4608
      %v4610 = vrot.slane %v4395, %v4609
      %v4612 = vunpack.c.l.s4 1983009808
      %v4613 = vunpack.c.0.s8 %v4612
      %v4614 = vlaneseq
      %v4615 = vshrl.u32 %v4614, 7
      %v4616 = vsub.s32 %v4613, %v4615
      %v4617 = vrot.slane %v4603, %v4616
      %v4618 = vcombine.high %v4610, %v4610
      %v4619 = vcombine.high %v4617, %v4617
      %v4620 = vcombine.high %v4396, %v4396
      %v4622 = vunpack.c.l.s4 1983009808
      %v4623 = vunpack.c.0.s8 %v4622
      %v4624 = vlaneseq
      %v4625 = vshrl.u32 %v4624, 7
      %v4626 = vsub.s32 %v4623, %v4625
      %v4627 = vrot.slane %v4396, %v4626
      %v4629 = vunpack.c.l.s4 1983009808
      %v4630 = vunpack.c.0.s8 %v4629
      %v4631 = vlaneseq
      %v4632 = vshrl.u32 %v4631, 7
      %v4633 = vsub.s32 %v4630, %v4632
      %v4634 = vrot.slane %v4620, %v4633
      %v4635 = vcombine.high %v4627, %v4627
      %v4636 = vcombine.high %v4634, %v4634
      %v4637 = vcombine.high %v4397, %v4397
      %v4639 = vunpack.c.l.s4 1983009808
      %v4640 = vunpack.c.0.s8 %v4639
      %v4641 = vlaneseq
      %v4642 = vshrl.u32 %v4641, 7
      %v4643 = vsub.s32 %v4640, %v4642
      %v4644 = vrot.slane %v4397, %v4643
      %v4646 = vunpack.c.l.s4 1983009808
      %v4647 = vunpack.c.0.s8 %v4646
      %v4648 = vlaneseq
      %v4649 = vshrl.u32 %v4648, 7
      %v4650 = vsub.s32 %v4647, %v4649
      %v4651 = vrot.slane %v4637, %v4650
      %v4652 = vcombine.high %v4644, %v4644
      %v4653 = vcombine.high %v4651, %v4651
      %v4654 = vcombine.high %v4398, %v4398
      %v4656 = vunpack.c.l.s4 1983009808
      %v4657 = vunpack.c.0.s8 %v4656
      %v4658 = vlaneseq
      %v4659 = vshrl.u32 %v4658, 7
      %v4660 = vsub.s32 %v4657, %v4659
      %v4661 = vrot.slane %v4398, %v4660
      %v4663 = vunpack.c.l.s4 1983009808
      %v4664 = vunpack.c.0.s8 %v4663
      %v4665 = vlaneseq
      %v4666 = vshrl.u32 %v4665, 7
      %v4667 = vsub.s32 %v4664, %v4666
      %v4668 = vrot.slane %v4654, %v4667
      %v4669 = vcombine.high %v4661, %v4661
      %v4670 = vcombine.high %v4668, %v4668
      %v4671 = vcombine.high %v4399, %v4399
      %v4673 = vunpack.c.l.s4 1983009808
      %v4674 = vunpack.c.0.s8 %v4673
      %v4675 = vlaneseq
      %v4676 = vshrl.u32 %v4675, 7
      %v4677 = vsub.s32 %v4674, %v4676
      %v4678 = vrot.slane %v4399, %v4677
      %v4680 = vunpack.c.l.s4 1983009808
      %v4681 = vunpack.c.0.s8 %v4680
      %v4682 = vlaneseq
      %v4683 = vshrl.u32 %v4682, 7
      %v4684 = vsub.s32 %v4681, %v4683
      %v4685 = vrot.slane %v4671, %v4684
      %v4686 = vcombine.high %v4678, %v4678
      %v4687 = vcombine.high %v4685, %v4685
      %v4688 = vcombine.high %v4400, %v4400
      %v4690 = vunpack.c.l.s4 1983009808
      %v4691 = vunpack.c.0.s8 %v4690
      %v4692 = vlaneseq
      %v4693 = vshrl.u32 %v4692, 7
      %v4694 = vsub.s32 %v4691, %v4693
      %v4695 = vrot.slane %v4400, %v4694
      %v4697 = vunpack.c.l.s4 1983009808
      %v4698 = vunpack.c.0.s8 %v4697
      %v4699 = vlaneseq
      %v4700 = vshrl.u32 %v4699, 7
      %v4701 = vsub.s32 %v4698, %v4700
      %v4702 = vrot.slane %v4688, %v4701
      %v4703 = vcombine.high %v4695, %v4695
      %v4704 = vcombine.high %v4702, %v4702
      %v4705 = vcombine.high %v4401, %v4401
      %v4707 = vunpack.c.l.s4 1983009808
      %v4708 = vunpack.c.0.s8 %v4707
      %v4709 = vlaneseq
      %v4710 = vshrl.u32 %v4709, 7
      %v4711 = vsub.s32 %v4708, %v4710
      %v4712 = vrot.slane %v4401, %v4711
      %v4714 = vunpack.c.l.s4 1983009808
      %v4715 = vunpack.c.0.s8 %v4714
      %v4716 = vlaneseq
      %v4717 = vshrl.u32 %v4716, 7
      %v4718 = vsub.s32 %v4715, %v4717
      %v4719 = vrot.slane %v4705, %v4718
      %v4720 = vcombine.high %v4712, %v4712
      %v4721 = vcombine.high %v4719, %v4719
      %v4722 = vcombine.high %v4402, %v4402
      %v4724 = vunpack.c.l.s4 1983009808
      %v4725 = vunpack.c.0.s8 %v4724
      %v4726 = vlaneseq
      %v4727 = vshrl.u32 %v4726, 7
      %v4728 = vsub.s32 %v4725, %v4727
      %v4729 = vrot.slane %v4402, %v4728
      %v4731 = vunpack.c.l.s4 1983009808
      %v4732 = vunpack.c.0.s8 %v4731
      %v4733 = vlaneseq
      %v4734 = vshrl.u32 %v4733, 7
      %v4735 = vsub.s32 %v4732, %v4734
      %v4736 = vrot.slane %v4722, %v4735
      %v4737 = vcombine.high %v4729, %v4729
      %v4738 = vcombine.high %v4736, %v4736
      %v4739 = vcombine.high %v4403, %v4403
      %v4741 = vunpack.c.l.s4 1983009808
      %v4742 = vunpack.c.0.s8 %v4741
      %v4743 = vlaneseq
      %v4744 = vshrl.u32 %v4743, 7
      %v4745 = vsub.s32 %v4742, %v4744
      %v4746 = vrot.slane %v4403, %v4745
      %v4748 = vunpack.c.l.s4 1983009808
      %v4749 = vunpack.c.0.s8 %v4748
      %v4750 = vlaneseq
      %v4751 = vshrl.u32 %v4750, 7
      %v4752 = vsub.s32 %v4749, %v4751
      %v4753 = vrot.slane %v4739, %v4752
      %v4754 = vcombine.high %v4746, %v4746
      %v4755 = vcombine.high %v4753, %v4753
      %v4756 = vcombine.high %v4404, %v4404
      %v4758 = vunpack.c.l.s4 1983009808
      %v4759 = vunpack.c.0.s8 %v4758
      %v4760 = vlaneseq
      %v4761 = vshrl.u32 %v4760, 7
      %v4762 = vsub.s32 %v4759, %v4761
      %v4763 = vrot.slane %v4404, %v4762
      %v4765 = vunpack.c.l.s4 1983009808
      %v4766 = vunpack.c.0.s8 %v4765
      %v4767 = vlaneseq
      %v4768 = vshrl.u32 %v4767, 7
      %v4769 = vsub.s32 %v4766, %v4768
      %v4770 = vrot.slane %v4756, %v4769
      %v4771 = vcombine.high %v4763, %v4763
      %v4772 = vcombine.high %v4770, %v4770
      %v4773 = vcombine.high %v4405, %v4405
      %v4775 = vunpack.c.l.s4 1983009808
      %v4776 = vunpack.c.0.s8 %v4775
      %v4777 = vlaneseq
      %v4778 = vshrl.u32 %v4777, 7
      %v4779 = vsub.s32 %v4776, %v4778
      %v4780 = vrot.slane %v4405, %v4779
      %v4782 = vunpack.c.l.s4 1983009808
      %v4783 = vunpack.c.0.s8 %v4782
      %v4784 = vlaneseq
      %v4785 = vshrl.u32 %v4784, 7
      %v4786 = vsub.s32 %v4783, %v4785
      %v4787 = vrot.slane %v4773, %v4786
      %v4788 = vcombine.high %v4780, %v4780
      %v4789 = vcombine.high %v4787, %v4787
      %v4790 = vcombine.high %v4406, %v4406
      %v4792 = vunpack.c.l.s4 1983009808
      %v4793 = vunpack.c.0.s8 %v4792
      %v4794 = vlaneseq
      %v4795 = vshrl.u32 %v4794, 7
      %v4796 = vsub.s32 %v4793, %v4795
      %v4797 = vrot.slane %v4406, %v4796
      %v4799 = vunpack.c.l.s4 1983009808
      %v4800 = vunpack.c.0.s8 %v4799
      %v4801 = vlaneseq
      %v4802 = vshrl.u32 %v4801, 7
      %v4803 = vsub.s32 %v4800, %v4802
      %v4804 = vrot.slane %v4790, %v4803
      %v4805 = vcombine.high %v4797, %v4797
      %v4806 = vcombine.high %v4804, %v4804
      %v4807 = vcombine.high %v4407, %v4407
      %v4809 = vunpack.c.l.s4 1983009808
      %v4810 = vunpack.c.0.s8 %v4809
      %v4811 = vlaneseq
      %v4812 = vshrl.u32 %v4811, 7
      %v4813 = vsub.s32 %v4810, %v4812
      %v4814 = vrot.slane %v4407, %v4813
      %v4816 = vunpack.c.l.s4 1983009808
      %v4817 = vunpack.c.0.s8 %v4816
      %v4818 = vlaneseq
      %v4819 = vshrl.u32 %v4818, 7
      %v4820 = vsub.s32 %v4817, %v4819
      %v4821 = vrot.slane %v4807, %v4820
      %v4822 = vcombine.high %v4814, %v4814
      %v4823 = vcombine.high %v4821, %v4821
      %v4824 = vcombine.high %v4408, %v4408
      %v4826 = vunpack.c.l.s4 1983009808
      %v4827 = vunpack.c.0.s8 %v4826
      %v4828 = vlaneseq
      %v4829 = vshrl.u32 %v4828, 7
      %v4830 = vsub.s32 %v4827, %v4829
      %v4831 = vrot.slane %v4408, %v4830
      %v4833 = vunpack.c.l.s4 1983009808
      %v4834 = vunpack.c.0.s8 %v4833
      %v4835 = vlaneseq
      %v4836 = vshrl.u32 %v4835, 7
      %v4837 = vsub.s32 %v4834, %v4836
      %v4838 = vrot.slane %v4824, %v4837
      %v4839 = vcombine.high %v4831, %v4831
      %v4840 = vcombine.high %v4838, %v4838
      %v4841 = vcombine.high %v4409, %v4409
      %v4843 = vunpack.c.l.s4 1983009808
      %v4844 = vunpack.c.0.s8 %v4843
      %v4845 = vlaneseq
      %v4846 = vshrl.u32 %v4845, 7
      %v4847 = vsub.s32 %v4844, %v4846
      %v4848 = vrot.slane %v4409, %v4847
      %v4850 = vunpack.c.l.s4 1983009808
      %v4851 = vunpack.c.0.s8 %v4850
      %v4852 = vlaneseq
      %v4853 = vshrl.u32 %v4852, 7
      %v4854 = vsub.s32 %v4851, %v4853
      %v4855 = vrot.slane %v4841, %v4854
      %v4856 = vcombine.high %v4848, %v4848
      %v4857 = vcombine.high %v4855, %v4855
      %v4858 = vcombine.high %v4410, %v4410
      %v4860 = vunpack.c.l.s4 1983009808
      %v4861 = vunpack.c.0.s8 %v4860
      %v4862 = vlaneseq
      %v4863 = vshrl.u32 %v4862, 7
      %v4864 = vsub.s32 %v4861, %v4863
      %v4865 = vrot.slane %v4410, %v4864
      %v4867 = vunpack.c.l.s4 1983009808
      %v4868 = vunpack.c.0.s8 %v4867
      %v4869 = vlaneseq
      %v4870 = vshrl.u32 %v4869, 7
      %v4871 = vsub.s32 %v4868, %v4870
      %v4872 = vrot.slane %v4858, %v4871
      %v4873 = vcombine.high %v4865, %v4865
      %v4874 = vcombine.high %v4872, %v4872
      %v4875 = vcombine.high %v4411, %v4411
      %v4877 = vunpack.c.l.s4 1983009808
      %v4878 = vunpack.c.0.s8 %v4877
      %v4879 = vlaneseq
      %v4880 = vshrl.u32 %v4879, 7
      %v4881 = vsub.s32 %v4878, %v4880
      %v4882 = vrot.slane %v4411, %v4881
      %v4884 = vunpack.c.l.s4 1983009808
      %v4885 = vunpack.c.0.s8 %v4884
      %v4886 = vlaneseq
      %v4887 = vshrl.u32 %v4886, 7
      %v4888 = vsub.s32 %v4885, %v4887
      %v4889 = vrot.slane %v4875, %v4888
      %v4890 = vcombine.high %v4882, %v4882
      %v4891 = vcombine.high %v4889, %v4889
      %v4892 = vcombine.high %v4412, %v4412
      %v4894 = vunpack.c.l.s4 1983009808
      %v4895 = vunpack.c.0.s8 %v4894
      %v4896 = vlaneseq
      %v4897 = vshrl.u32 %v4896, 7
      %v4898 = vsub.s32 %v4895, %v4897
      %v4899 = vrot.slane %v4412, %v4898
      %v4901 = vunpack.c.l.s4 1983009808
      %v4902 = vunpack.c.0.s8 %v4901
      %v4903 = vlaneseq
      %v4904 = vshrl.u32 %v4903, 7
      %v4905 = vsub.s32 %v4902, %v4904
      %v4906 = vrot.slane %v4892, %v4905
      %v4907 = vcombine.high %v4899, %v4899
      %v4908 = vcombine.high %v4906, %v4906
      %v4909 = vcombine.high %v4413, %v4413
      %v4911 = vunpack.c.l.s4 1983009808
      %v4912 = vunpack.c.0.s8 %v4911
      %v4913 = vlaneseq
      %v4914 = vshrl.u32 %v4913, 7
      %v4915 = vsub.s32 %v4912, %v4914
      %v4916 = vrot.slane %v4413, %v4915
      %v4918 = vunpack.c.l.s4 1983009808
      %v4919 = vunpack.c.0.s8 %v4918
      %v4920 = vlaneseq
      %v4921 = vshrl.u32 %v4920, 7
      %v4922 = vsub.s32 %v4919, %v4921
      %v4923 = vrot.slane %v4909, %v4922
      %v4924 = vcombine.high %v4916, %v4916
      %v4925 = vcombine.high %v4923, %v4923
      %v4926 = vcombine.high %v4414, %v4414
      %v4928 = vunpack.c.l.s4 1983009808
      %v4929 = vunpack.c.0.s8 %v4928
      %v4930 = vlaneseq
      %v4931 = vshrl.u32 %v4930, 7
      %v4932 = vsub.s32 %v4929, %v4931
      %v4933 = vrot.slane %v4414, %v4932
      %v4935 = vunpack.c.l.s4 1983009808
      %v4936 = vunpack.c.0.s8 %v4935
      %v4937 = vlaneseq
      %v4938 = vshrl.u32 %v4937, 7
      %v4939 = vsub.s32 %v4936, %v4938
      %v4940 = vrot.slane %v4926, %v4939
      %v4941 = vcombine.high %v4933, %v4933
      %v4942 = vcombine.high %v4940, %v4940
      %v4943 = vcombine.high %v4415, %v4415
      %v4945 = vunpack.c.l.s4 1983009808
      %v4946 = vunpack.c.0.s8 %v4945
      %v4947 = vlaneseq
      %v4948 = vshrl.u32 %v4947, 7
      %v4949 = vsub.s32 %v4946, %v4948
      %v4950 = vrot.slane %v4415, %v4949
      %v4952 = vunpack.c.l.s4 1983009808
      %v4953 = vunpack.c.0.s8 %v4952
      %v4954 = vlaneseq
      %v4955 = vshrl.u32 %v4954, 7
      %v4956 = vsub.s32 %v4953, %v4955
      %v4957 = vrot.slane %v4943, %v4956
      %v4958 = vcombine.high %v4950, %v4950
      %v4959 = vcombine.high %v4957, %v4957
      %v4960 = vcombine.high %v4416, %v4416
      %v4962 = vunpack.c.l.s4 1983009808
      %v4963 = vunpack.c.0.s8 %v4962
      %v4964 = vlaneseq
      %v4965 = vshrl.u32 %v4964, 7
      %v4966 = vsub.s32 %v4963, %v4965
      %v4967 = vrot.slane %v4416, %v4966
      %v4969 = vunpack.c.l.s4 1983009808
      %v4970 = vunpack.c.0.s8 %v4969
      %v4971 = vlaneseq
      %v4972 = vshrl.u32 %v4971, 7
      %v4973 = vsub.s32 %v4970, %v4972
      %v4974 = vrot.slane %v4960, %v4973
      %v4975 = vcombine.high %v4967, %v4967
      %v4976 = vcombine.high %v4974, %v4974
      %v4977 = vcombine.high %v4417, %v4417
      %v4979 = vunpack.c.l.s4 1983009808
      %v4980 = vunpack.c.0.s8 %v4979
      %v4981 = vlaneseq
      %v4982 = vshrl.u32 %v4981, 7
      %v4983 = vsub.s32 %v4980, %v4982
      %v4984 = vrot.slane %v4417, %v4983
      %v4986 = vunpack.c.l.s4 1983009808
      %v4987 = vunpack.c.0.s8 %v4986
      %v4988 = vlaneseq
      %v4989 = vshrl.u32 %v4988, 7
      %v4990 = vsub.s32 %v4987, %v4989
      %v4991 = vrot.slane %v4977, %v4990
      %v4992 = vcombine.high %v4984, %v4984
      %v4993 = vcombine.high %v4991, %v4991
      %vm5122 = vcmask 58368
      %v5123 = vsel %vm5122, %v4457, -inf
      %v5124 = vrot.slane %v5123, 4
      %v5125 = vmax.f32 %v5123, %v5124
      %v5126 = vrot.slane %v5125, 2
      %v5127 = vmax.f32 %v5125, %v5126
      %v5128 = vrot.slane %v5127, 1
      %v5129 = vmax.f32 %v5127, %v5128
      %v5130 = vsel %vm5122, %v4465, -inf
      %v5131 = vrot.slane %v5130, 4
      %v5132 = vmax.f32 %v5130, %v5131
      %v5133 = vrot.slane %v5132, 2
      %v5134 = vmax.f32 %v5132, %v5133
      %v5135 = vrot.slane %v5134, 1
      %v5136 = vmax.f32 %v5134, %v5135
      %v5137 = vsel %vm5122, %v4464, -inf
      %v5138 = vrot.slane %v5137, 4
      %v5139 = vmax.f32 %v5137, %v5138
      %v5140 = vrot.slane %v5139, 2
      %v5141 = vmax.f32 %v5139, %v5140
      %v5142 = vrot.slane %v5141, 1
      %v5143 = vmax.f32 %v5141, %v5142
      %v5144 = vsel %vm5122, %v4466, -inf
      %v5145 = vrot.slane %v5144, 4
      %v5146 = vmax.f32 %v5144, %v5145
      %v5147 = vrot.slane %v5146, 2
      %v5148 = vmax.f32 %v5146, %v5147
      %v5149 = vrot.slane %v5148, 1
      %v5150 = vmax.f32 %v5148, %v5149
      %v5151 = vsel %vm5122, %v4474, -inf
      %v5152 = vrot.slane %v5151, 4
      %v5153 = vmax.f32 %v5151, %v5152
      %v5154 = vrot.slane %v5153, 2
      %v5155 = vmax.f32 %v5153, %v5154
      %v5156 = vrot.slane %v5155, 1
      %v5157 = vmax.f32 %v5155, %v5156
      %v5158 = vsel %vm5122, %v4482, -inf
      %v5159 = vrot.slane %v5158, 4
      %v5160 = vmax.f32 %v5158, %v5159
      %v5161 = vrot.slane %v5160, 2
      %v5162 = vmax.f32 %v5160, %v5161
      %v5163 = vrot.slane %v5162, 1
      %v5164 = vmax.f32 %v5162, %v5163
      %v5165 = vsel %vm5122, %v4481, -inf
      %v5166 = vrot.slane %v5165, 4
      %v5167 = vmax.f32 %v5165, %v5166
      %v5168 = vrot.slane %v5167, 2
      %v5169 = vmax.f32 %v5167, %v5168
      %v5170 = vrot.slane %v5169, 1
      %v5171 = vmax.f32 %v5169, %v5170
      %v5172 = vsel %vm5122, %v4483, -inf
      %v5173 = vrot.slane %v5172, 4
      %v5174 = vmax.f32 %v5172, %v5173
      %v5175 = vrot.slane %v5174, 2
      %v5176 = vmax.f32 %v5174, %v5175
      %v5177 = vrot.slane %v5176, 1
      %v5178 = vmax.f32 %v5176, %v5177
      %v5179 = vsel %vm5122, %v4491, -inf
      %v5180 = vrot.slane %v5179, 4
      %v5181 = vmax.f32 %v5179, %v5180
      %v5182 = vrot.slane %v5181, 2
      %v5183 = vmax.f32 %v5181, %v5182
      %v5184 = vrot.slane %v5183, 1
      %v5185 = vmax.f32 %v5183, %v5184
      %v5186 = vsel %vm5122, %v4499, -inf
      %v5187 = vrot.slane %v5186, 4
      %v5188 = vmax.f32 %v5186, %v5187
      %v5189 = vrot.slane %v5188, 2
      %v5190 = vmax.f32 %v5188, %v5189
      %v5191 = vrot.slane %v5190, 1
      %v5192 = vmax.f32 %v5190, %v5191
      %v5193 = vsel %vm5122, %v4498, -inf
      %v5194 = vrot.slane %v5193, 4
      %v5195 = vmax.f32 %v5193, %v5194
      %v5196 = vrot.slane %v5195, 2
      %v5197 = vmax.f32 %v5195, %v5196
      %v5198 = vrot.slane %v5197, 1
      %v5199 = vmax.f32 %v5197, %v5198
      %v5200 = vsel %vm5122, %v4500, -inf
      %v5201 = vrot.slane %v5200, 4
      %v5202 = vmax.f32 %v5200, %v5201
      %v5203 = vrot.slane %v5202, 2
      %v5204 = vmax.f32 %v5202, %v5203
      %v5205 = vrot.slane %v5204, 1
      %v5206 = vmax.f32 %v5204, %v5205
      %v5207 = vsel %vm5122, %v4508, -inf
      %v5208 = vrot.slane %v5207, 4
      %v5209 = vmax.f32 %v5207, %v5208
      %v5210 = vrot.slane %v5209, 2
      %v5211 = vmax.f32 %v5209, %v5210
      %v5212 = vrot.slane %v5211, 1
      %v5213 = vmax.f32 %v5211, %v5212
      %v5214 = vsel %vm5122, %v4516, -inf
      %v5215 = vrot.slane %v5214, 4
      %v5216 = vmax.f32 %v5214, %v5215
      %v5217 = vrot.slane %v5216, 2
      %v5218 = vmax.f32 %v5216, %v5217
      %v5219 = vrot.slane %v5218, 1
      %v5220 = vmax.f32 %v5218, %v5219
      %v5221 = vsel %vm5122, %v4515, -inf
      %v5222 = vrot.slane %v5221, 4
      %v5223 = vmax.f32 %v5221, %v5222
      %v5224 = vrot.slane %v5223, 2
      %v5225 = vmax.f32 %v5223, %v5224
      %v5226 = vrot.slane %v5225, 1
      %v5227 = vmax.f32 %v5225, %v5226
      %v5228 = vsel %vm5122, %v4517, -inf
      %v5229 = vrot.slane %v5228, 4
      %v5230 = vmax.f32 %v5228, %v5229
      %v5231 = vrot.slane %v5230, 2
      %v5232 = vmax.f32 %v5230, %v5231
      %v5233 = vrot.slane %v5232, 1
      %v5234 = vmax.f32 %v5232, %v5233
      %v5235 = vsel %vm5122, %v4525, -inf
      %v5236 = vrot.slane %v5235, 4
      %v5237 = vmax.f32 %v5235, %v5236
      %v5238 = vrot.slane %v5237, 2
      %v5239 = vmax.f32 %v5237, %v5238
      %v5240 = vrot.slane %v5239, 1
      %v5241 = vmax.f32 %v5239, %v5240
      %v5242 = vsel %vm5122, %v4533, -inf
      %v5243 = vrot.slane %v5242, 4
      %v5244 = vmax.f32 %v5242, %v5243
      %v5245 = vrot.slane %v5244, 2
      %v5246 = vmax.f32 %v5244, %v5245
      %v5247 = vrot.slane %v5246, 1
      %v5248 = vmax.f32 %v5246, %v5247
      %v5249 = vsel %vm5122, %v4532, -inf
      %v5250 = vrot.slane %v5249, 4
      %v5251 = vmax.f32 %v5249, %v5250
      %v5252 = vrot.slane %v5251, 2
      %v5253 = vmax.f32 %v5251, %v5252
      %v5254 = vrot.slane %v5253, 1
      %v5255 = vmax.f32 %v5253, %v5254
      %v5256 = vsel %vm5122, %v4534, -inf
      %v5257 = vrot.slane %v5256, 4
      %v5258 = vmax.f32 %v5256, %v5257
      %v5259 = vrot.slane %v5258, 2
      %v5260 = vmax.f32 %v5258, %v5259
      %v5261 = vrot.slane %v5260, 1
      %v5262 = vmax.f32 %v5260, %v5261
      %v5263 = vsel %vm5122, %v4542, -inf
      %v5264 = vrot.slane %v5263, 4
      %v5265 = vmax.f32 %v5263, %v5264
      %v5266 = vrot.slane %v5265, 2
      %v5267 = vmax.f32 %v5265, %v5266
      %v5268 = vrot.slane %v5267, 1
      %v5269 = vmax.f32 %v5267, %v5268
      %v5270 = vsel %vm5122, %v4550, -inf
      %v5271 = vrot.slane %v5270, 4
      %v5272 = vmax.f32 %v5270, %v5271
      %v5273 = vrot.slane %v5272, 2
      %v5274 = vmax.f32 %v5272, %v5273
      %v5275 = vrot.slane %v5274, 1
      %v5276 = vmax.f32 %v5274, %v5275
      %v5277 = vsel %vm5122, %v4549, -inf
      %v5278 = vrot.slane %v5277, 4
      %v5279 = vmax.f32 %v5277, %v5278
      %v5280 = vrot.slane %v5279, 2
      %v5281 = vmax.f32 %v5279, %v5280
      %v5282 = vrot.slane %v5281, 1
      %v5283 = vmax.f32 %v5281, %v5282
      %v5284 = vsel %vm5122, %v4551, -inf
      %v5285 = vrot.slane %v5284, 4
      %v5286 = vmax.f32 %v5284, %v5285
      %v5287 = vrot.slane %v5286, 2
      %v5288 = vmax.f32 %v5286, %v5287
      %v5289 = vrot.slane %v5288, 1
      %v5290 = vmax.f32 %v5288, %v5289
      %v5291 = vsel %vm5122, %v4559, -inf
      %v5292 = vrot.slane %v5291, 4
      %v5293 = vmax.f32 %v5291, %v5292
      %v5294 = vrot.slane %v5293, 2
      %v5295 = vmax.f32 %v5293, %v5294
      %v5296 = vrot.slane %v5295, 1
      %v5297 = vmax.f32 %v5295, %v5296
      %v5298 = vsel %vm5122, %v4567, -inf
      %v5299 = vrot.slane %v5298, 4
      %v5300 = vmax.f32 %v5298, %v5299
      %v5301 = vrot.slane %v5300, 2
      %v5302 = vmax.f32 %v5300, %v5301
      %v5303 = vrot.slane %v5302, 1
      %v5304 = vmax.f32 %v5302, %v5303
      %v5305 = vsel %vm5122, %v4566, -inf
      %v5306 = vrot.slane %v5305, 4
      %v5307 = vmax.f32 %v5305, %v5306
      %v5308 = vrot.slane %v5307, 2
      %v5309 = vmax.f32 %v5307, %v5308
      %v5310 = vrot.slane %v5309, 1
      %v5311 = vmax.f32 %v5309, %v5310
      %v5312 = vsel %vm5122, %v4568, -inf
      %v5313 = vrot.slane %v5312, 4
      %v5314 = vmax.f32 %v5312, %v5313
      %v5315 = vrot.slane %v5314, 2
      %v5316 = vmax.f32 %v5314, %v5315
      %v5317 = vrot.slane %v5316, 1
      %v5318 = vmax.f32 %v5316, %v5317
      %v5319 = vsel %vm5122, %v4576, -inf
      %v5320 = vrot.slane %v5319, 4
      %v5321 = vmax.f32 %v5319, %v5320
      %v5322 = vrot.slane %v5321, 2
      %v5323 = vmax.f32 %v5321, %v5322
      %v5324 = vrot.slane %v5323, 1
      %v5325 = vmax.f32 %v5323, %v5324
      %v5326 = vsel %vm5122, %v4584, -inf
      %v5327 = vrot.slane %v5326, 4
      %v5328 = vmax.f32 %v5326, %v5327
      %v5329 = vrot.slane %v5328, 2
      %v5330 = vmax.f32 %v5328, %v5329
      %v5331 = vrot.slane %v5330, 1
      %v5332 = vmax.f32 %v5330, %v5331
      %v5333 = vsel %vm5122, %v4583, -inf
      %v5334 = vrot.slane %v5333, 4
      %v5335 = vmax.f32 %v5333, %v5334
      %v5336 = vrot.slane %v5335, 2
      %v5337 = vmax.f32 %v5335, %v5336
      %v5338 = vrot.slane %v5337, 1
      %v5339 = vmax.f32 %v5337, %v5338
      %v5340 = vsel %vm5122, %v4585, -inf
      %v5341 = vrot.slane %v5340, 4
      %v5342 = vmax.f32 %v5340, %v5341
      %v5343 = vrot.slane %v5342, 2
      %v5344 = vmax.f32 %v5342, %v5343
      %v5345 = vrot.slane %v5344, 1
      %v5346 = vmax.f32 %v5344, %v5345
      %v5347 = vsel %vm5122, %v4593, -inf
      %v5348 = vrot.slane %v5347, 4
      %v5349 = vmax.f32 %v5347, %v5348
      %v5350 = vrot.slane %v5349, 2
      %v5351 = vmax.f32 %v5349, %v5350
      %v5352 = vrot.slane %v5351, 1
      %v5353 = vmax.f32 %v5351, %v5352
      %v5354 = vsel %vm5122, %v4601, -inf
      %v5355 = vrot.slane %v5354, 4
      %v5356 = vmax.f32 %v5354, %v5355
      %v5357 = vrot.slane %v5356, 2
      %v5358 = vmax.f32 %v5356, %v5357
      %v5359 = vrot.slane %v5358, 1
      %v5360 = vmax.f32 %v5358, %v5359
      %v5361 = vsel %vm5122, %v4600, -inf
      %v5362 = vrot.slane %v5361, 4
      %v5363 = vmax.f32 %v5361, %v5362
      %v5364 = vrot.slane %v5363, 2
      %v5365 = vmax.f32 %v5363, %v5364
      %v5366 = vrot.slane %v5365, 1
      %v5367 = vmax.f32 %v5365, %v5366
      %v5368 = vsel %vm5122, %v4602, -inf
      %v5369 = vrot.slane %v5368, 4
      %v5370 = vmax.f32 %v5368, %v5369
      %v5371 = vrot.slane %v5370, 2
      %v5372 = vmax.f32 %v5370, %v5371
      %v5373 = vrot.slane %v5372, 1
      %v5374 = vmax.f32 %v5372, %v5373
      %v5375 = vsel %vm5122, %v4610, -inf
      %v5376 = vrot.slane %v5375, 4
      %v5377 = vmax.f32 %v5375, %v5376
      %v5378 = vrot.slane %v5377, 2
      %v5379 = vmax.f32 %v5377, %v5378
      %v5380 = vrot.slane %v5379, 1
      %v5381 = vmax.f32 %v5379, %v5380
      %v5382 = vsel %vm5122, %v4618, -inf
      %v5383 = vrot.slane %v5382, 4
      %v5384 = vmax.f32 %v5382, %v5383
      %v5385 = vrot.slane %v5384, 2
      %v5386 = vmax.f32 %v5384, %v5385
      %v5387 = vrot.slane %v5386, 1
      %v5388 = vmax.f32 %v5386, %v5387
      %v5389 = vsel %vm5122, %v4617, -inf
      %v5390 = vrot.slane %v5389, 4
      %v5391 = vmax.f32 %v5389, %v5390
      %v5392 = vrot.slane %v5391, 2
      %v5393 = vmax.f32 %v5391, %v5392
      %v5394 = vrot.slane %v5393, 1
      %v5395 = vmax.f32 %v5393, %v5394
      %v5396 = vsel %vm5122, %v4619, -inf
      %v5397 = vrot.slane %v5396, 4
      %v5398 = vmax.f32 %v5396, %v5397
      %v5399 = vrot.slane %v5398, 2
      %v5400 = vmax.f32 %v5398, %v5399
      %v5401 = vrot.slane %v5400, 1
      %v5402 = vmax.f32 %v5400, %v5401
      %v5403 = vsel %vm5122, %v4627, -inf
      %v5404 = vrot.slane %v5403, 4
      %v5405 = vmax.f32 %v5403, %v5404
      %v5406 = vrot.slane %v5405, 2
      %v5407 = vmax.f32 %v5405, %v5406
      %v5408 = vrot.slane %v5407, 1
      %v5409 = vmax.f32 %v5407, %v5408
      %v5410 = vsel %vm5122, %v4635, -inf
      %v5411 = vrot.slane %v5410, 4
      %v5412 = vmax.f32 %v5410, %v5411
      %v5413 = vrot.slane %v5412, 2
      %v5414 = vmax.f32 %v5412, %v5413
      %v5415 = vrot.slane %v5414, 1
      %v5416 = vmax.f32 %v5414, %v5415
      %v5417 = vsel %vm5122, %v4634, -inf
      %v5418 = vrot.slane %v5417, 4
      %v5419 = vmax.f32 %v5417, %v5418
      %v5420 = vrot.slane %v5419, 2
      %v5421 = vmax.f32 %v5419, %v5420
      %v5422 = vrot.slane %v5421, 1
      %v5423 = vmax.f32 %v5421, %v5422
      %v5424 = vsel %vm5122, %v4636, -inf
      %v5425 = vrot.slane %v5424, 4
      %v5426 = vmax.f32 %v5424, %v5425
      %v5427 = vrot.slane %v5426, 2
      %v5428 = vmax.f32 %v5426, %v5427
      %v5429 = vrot.slane %v5428, 1
      %v5430 = vmax.f32 %v5428, %v5429
      %v5431 = vsel %vm5122, %v4644, -inf
      %v5432 = vrot.slane %v5431, 4
      %v5433 = vmax.f32 %v5431, %v5432
      %v5434 = vrot.slane %v5433, 2
      %v5435 = vmax.f32 %v5433, %v5434
      %v5436 = vrot.slane %v5435, 1
      %v5437 = vmax.f32 %v5435, %v5436
      %v5438 = vsel %vm5122, %v4652, -inf
      %v5439 = vrot.slane %v5438, 4
      %v5440 = vmax.f32 %v5438, %v5439
      %v5441 = vrot.slane %v5440, 2
      %v5442 = vmax.f32 %v5440, %v5441
      %v5443 = vrot.slane %v5442, 1
      %v5444 = vmax.f32 %v5442, %v5443
      %v5445 = vsel %vm5122, %v4651, -inf
      %v5446 = vrot.slane %v5445, 4
      %v5447 = vmax.f32 %v5445, %v5446
      %v5448 = vrot.slane %v5447, 2
      %v5449 = vmax.f32 %v5447, %v5448
      %v5450 = vrot.slane %v5449, 1
      %v5451 = vmax.f32 %v5449, %v5450
      %v5452 = vsel %vm5122, %v4653, -inf
      %v5453 = vrot.slane %v5452, 4
      %v5454 = vmax.f32 %v5452, %v5453
      %v5455 = vrot.slane %v5454, 2
      %v5456 = vmax.f32 %v5454, %v5455
      %v5457 = vrot.slane %v5456, 1
      %v5458 = vmax.f32 %v5456, %v5457
      %v5459 = vsel %vm5122, %v4661, -inf
      %v5460 = vrot.slane %v5459, 4
      %v5461 = vmax.f32 %v5459, %v5460
      %v5462 = vrot.slane %v5461, 2
      %v5463 = vmax.f32 %v5461, %v5462
      %v5464 = vrot.slane %v5463, 1
      %v5465 = vmax.f32 %v5463, %v5464
      %v5466 = vsel %vm5122, %v4669, -inf
      %v5467 = vrot.slane %v5466, 4
      %v5468 = vmax.f32 %v5466, %v5467
      %v5469 = vrot.slane %v5468, 2
      %v5470 = vmax.f32 %v5468, %v5469
      %v5471 = vrot.slane %v5470, 1
      %v5472 = vmax.f32 %v5470, %v5471
      %v5473 = vsel %vm5122, %v4668, -inf
      %v5474 = vrot.slane %v5473, 4
      %v5475 = vmax.f32 %v5473, %v5474
      %v5476 = vrot.slane %v5475, 2
      %v5477 = vmax.f32 %v5475, %v5476
      %v5478 = vrot.slane %v5477, 1
      %v5479 = vmax.f32 %v5477, %v5478
      %v5480 = vsel %vm5122, %v4670, -inf
      %v5481 = vrot.slane %v5480, 4
      %v5482 = vmax.f32 %v5480, %v5481
      %v5483 = vrot.slane %v5482, 2
      %v5484 = vmax.f32 %v5482, %v5483
      %v5485 = vrot.slane %v5484, 1
      %v5486 = vmax.f32 %v5484, %v5485
      %v5487 = vsel %vm5122, %v4678, -inf
      %v5488 = vrot.slane %v5487, 4
      %v5489 = vmax.f32 %v5487, %v5488
      %v5490 = vrot.slane %v5489, 2
      %v5491 = vmax.f32 %v5489, %v5490
      %v5492 = vrot.slane %v5491, 1
      %v5493 = vmax.f32 %v5491, %v5492
      %v5494 = vsel %vm5122, %v4686, -inf
      %v5495 = vrot.slane %v5494, 4
      %v5496 = vmax.f32 %v5494, %v5495
      %v5497 = vrot.slane %v5496, 2
      %v5498 = vmax.f32 %v5496, %v5497
      %v5499 = vrot.slane %v5498, 1
      %v5500 = vmax.f32 %v5498, %v5499
      %v5501 = vsel %vm5122, %v4685, -inf
      %v5502 = vrot.slane %v5501, 4
      %v5503 = vmax.f32 %v5501, %v5502
      %v5504 = vrot.slane %v5503, 2
      %v5505 = vmax.f32 %v5503, %v5504
      %v5506 = vrot.slane %v5505, 1
      %v5507 = vmax.f32 %v5505, %v5506
      %v5508 = vsel %vm5122, %v4687, -inf
      %v5509 = vrot.slane %v5508, 4
      %v5510 = vmax.f32 %v5508, %v5509
      %v5511 = vrot.slane %v5510, 2
      %v5512 = vmax.f32 %v5510, %v5511
      %v5513 = vrot.slane %v5512, 1
      %v5514 = vmax.f32 %v5512, %v5513
      %v5515 = vsel %vm5122, %v4695, -inf
      %v5516 = vrot.slane %v5515, 4
      %v5517 = vmax.f32 %v5515, %v5516
      %v5518 = vrot.slane %v5517, 2
      %v5519 = vmax.f32 %v5517, %v5518
      %v5520 = vrot.slane %v5519, 1
      %v5521 = vmax.f32 %v5519, %v5520
      %v5522 = vsel %vm5122, %v4703, -inf
      %v5523 = vrot.slane %v5522, 4
      %v5524 = vmax.f32 %v5522, %v5523
      %v5525 = vrot.slane %v5524, 2
      %v5526 = vmax.f32 %v5524, %v5525
      %v5527 = vrot.slane %v5526, 1
      %v5528 = vmax.f32 %v5526, %v5527
      %v5529 = vsel %vm5122, %v4702, -inf
      %v5530 = vrot.slane %v5529, 4
      %v5531 = vmax.f32 %v5529, %v5530
      %v5532 = vrot.slane %v5531, 2
      %v5533 = vmax.f32 %v5531, %v5532
      %v5534 = vrot.slane %v5533, 1
      %v5535 = vmax.f32 %v5533, %v5534
      %v5536 = vsel %vm5122, %v4704, -inf
      %v5537 = vrot.slane %v5536, 4
      %v5538 = vmax.f32 %v5536, %v5537
      %v5539 = vrot.slane %v5538, 2
      %v5540 = vmax.f32 %v5538, %v5539
      %v5541 = vrot.slane %v5540, 1
      %v5542 = vmax.f32 %v5540, %v5541
      %v5543 = vsel %vm5122, %v4712, -inf
      %v5544 = vrot.slane %v5543, 4
      %v5545 = vmax.f32 %v5543, %v5544
      %v5546 = vrot.slane %v5545, 2
      %v5547 = vmax.f32 %v5545, %v5546
      %v5548 = vrot.slane %v5547, 1
      %v5549 = vmax.f32 %v5547, %v5548
      %v5550 = vsel %vm5122, %v4720, -inf
      %v5551 = vrot.slane %v5550, 4
      %v5552 = vmax.f32 %v5550, %v5551
      %v5553 = vrot.slane %v5552, 2
      %v5554 = vmax.f32 %v5552, %v5553
      %v5555 = vrot.slane %v5554, 1
      %v5556 = vmax.f32 %v5554, %v5555
      %v5557 = vsel %vm5122, %v4719, -inf
      %v5558 = vrot.slane %v5557, 4
      %v5559 = vmax.f32 %v5557, %v5558
      %v5560 = vrot.slane %v5559, 2
      %v5561 = vmax.f32 %v5559, %v5560
      %v5562 = vrot.slane %v5561, 1
      %v5563 = vmax.f32 %v5561, %v5562
      %v5564 = vsel %vm5122, %v4721, -inf
      %v5565 = vrot.slane %v5564, 4
      %v5566 = vmax.f32 %v5564, %v5565
      %v5567 = vrot.slane %v5566, 2
      %v5568 = vmax.f32 %v5566, %v5567
      %v5569 = vrot.slane %v5568, 1
      %v5570 = vmax.f32 %v5568, %v5569
      %v5571 = vsel %vm5122, %v4729, -inf
      %v5572 = vrot.slane %v5571, 4
      %v5573 = vmax.f32 %v5571, %v5572
      %v5574 = vrot.slane %v5573, 2
      %v5575 = vmax.f32 %v5573, %v5574
      %v5576 = vrot.slane %v5575, 1
      %v5577 = vmax.f32 %v5575, %v5576
      %v5578 = vsel %vm5122, %v4737, -inf
      %v5579 = vrot.slane %v5578, 4
      %v5580 = vmax.f32 %v5578, %v5579
      %v5581 = vrot.slane %v5580, 2
      %v5582 = vmax.f32 %v5580, %v5581
      %v5583 = vrot.slane %v5582, 1
      %v5584 = vmax.f32 %v5582, %v5583
      %v5585 = vsel %vm5122, %v4736, -inf
      %v5586 = vrot.slane %v5585, 4
      %v5587 = vmax.f32 %v5585, %v5586
      %v5588 = vrot.slane %v5587, 2
      %v5589 = vmax.f32 %v5587, %v5588
      %v5590 = vrot.slane %v5589, 1
      %v5591 = vmax.f32 %v5589, %v5590
      %v5592 = vsel %vm5122, %v4738, -inf
      %v5593 = vrot.slane %v5592, 4
      %v5594 = vmax.f32 %v5592, %v5593
      %v5595 = vrot.slane %v5594, 2
      %v5596 = vmax.f32 %v5594, %v5595
      %v5597 = vrot.slane %v5596, 1
      %v5598 = vmax.f32 %v5596, %v5597
      %v5599 = vsel %vm5122, %v4746, -inf
      %v5600 = vrot.slane %v5599, 4
      %v5601 = vmax.f32 %v5599, %v5600
      %v5602 = vrot.slane %v5601, 2
      %v5603 = vmax.f32 %v5601, %v5602
      %v5604 = vrot.slane %v5603, 1
      %v5605 = vmax.f32 %v5603, %v5604
      %v5606 = vsel %vm5122, %v4754, -inf
      %v5607 = vrot.slane %v5606, 4
      %v5608 = vmax.f32 %v5606, %v5607
      %v5609 = vrot.slane %v5608, 2
      %v5610 = vmax.f32 %v5608, %v5609
      %v5611 = vrot.slane %v5610, 1
      %v5612 = vmax.f32 %v5610, %v5611
      %v5613 = vsel %vm5122, %v4753, -inf
      %v5614 = vrot.slane %v5613, 4
      %v5615 = vmax.f32 %v5613, %v5614
      %v5616 = vrot.slane %v5615, 2
      %v5617 = vmax.f32 %v5615, %v5616
      %v5618 = vrot.slane %v5617, 1
      %v5619 = vmax.f32 %v5617, %v5618
      %v5620 = vsel %vm5122, %v4755, -inf
      %v5621 = vrot.slane %v5620, 4
      %v5622 = vmax.f32 %v5620, %v5621
      %v5623 = vrot.slane %v5622, 2
      %v5624 = vmax.f32 %v5622, %v5623
      %v5625 = vrot.slane %v5624, 1
      %v5626 = vmax.f32 %v5624, %v5625
      %v5627 = vsel %vm5122, %v4763, -inf
      %v5628 = vrot.slane %v5627, 4
      %v5629 = vmax.f32 %v5627, %v5628
      %v5630 = vrot.slane %v5629, 2
      %v5631 = vmax.f32 %v5629, %v5630
      %v5632 = vrot.slane %v5631, 1
      %v5633 = vmax.f32 %v5631, %v5632
      %v5634 = vsel %vm5122, %v4771, -inf
      %v5635 = vrot.slane %v5634, 4
      %v5636 = vmax.f32 %v5634, %v5635
      %v5637 = vrot.slane %v5636, 2
      %v5638 = vmax.f32 %v5636, %v5637
      %v5639 = vrot.slane %v5638, 1
      %v5640 = vmax.f32 %v5638, %v5639
      %v5641 = vsel %vm5122, %v4770, -inf
      %v5642 = vrot.slane %v5641, 4
      %v5643 = vmax.f32 %v5641, %v5642
      %v5644 = vrot.slane %v5643, 2
      %v5645 = vmax.f32 %v5643, %v5644
      %v5646 = vrot.slane %v5645, 1
      %v5647 = vmax.f32 %v5645, %v5646
      %v5648 = vsel %vm5122, %v4772, -inf
      %v5649 = vrot.slane %v5648, 4
      %v5650 = vmax.f32 %v5648, %v5649
      %v5651 = vrot.slane %v5650, 2
      %v5652 = vmax.f32 %v5650, %v5651
      %v5653 = vrot.slane %v5652, 1
      %v5654 = vmax.f32 %v5652, %v5653
      %v5655 = vsel %vm5122, %v4780, -inf
      %v5656 = vrot.slane %v5655, 4
      %v5657 = vmax.f32 %v5655, %v5656
      %v5658 = vrot.slane %v5657, 2
      %v5659 = vmax.f32 %v5657, %v5658
      %v5660 = vrot.slane %v5659, 1
      %v5661 = vmax.f32 %v5659, %v5660
      %v5662 = vsel %vm5122, %v4788, -inf
      %v5663 = vrot.slane %v5662, 4
      %v5664 = vmax.f32 %v5662, %v5663
      %v5665 = vrot.slane %v5664, 2
      %v5666 = vmax.f32 %v5664, %v5665
      %v5667 = vrot.slane %v5666, 1
      %v5668 = vmax.f32 %v5666, %v5667
      %v5669 = vsel %vm5122, %v4787, -inf
      %v5670 = vrot.slane %v5669, 4
      %v5671 = vmax.f32 %v5669, %v5670
      %v5672 = vrot.slane %v5671, 2
      %v5673 = vmax.f32 %v5671, %v5672
      %v5674 = vrot.slane %v5673, 1
      %v5675 = vmax.f32 %v5673, %v5674
      %v5676 = vsel %vm5122, %v4789, -inf
      %v5677 = vrot.slane %v5676, 4
      %v5678 = vmax.f32 %v5676, %v5677
      %v5679 = vrot.slane %v5678, 2
      %v5680 = vmax.f32 %v5678, %v5679
      %v5681 = vrot.slane %v5680, 1
      %v5682 = vmax.f32 %v5680, %v5681
      %v5683 = vsel %vm5122, %v4797, -inf
      %v5684 = vrot.slane %v5683, 4
      %v5685 = vmax.f32 %v5683, %v5684
      %v5686 = vrot.slane %v5685, 2
      %v5687 = vmax.f32 %v5685, %v5686
      %v5688 = vrot.slane %v5687, 1
      %v5689 = vmax.f32 %v5687, %v5688
      %v5690 = vsel %vm5122, %v4805, -inf
      %v5691 = vrot.slane %v5690, 4
      %v5692 = vmax.f32 %v5690, %v5691
      %v5693 = vrot.slane %v5692, 2
      %v5694 = vmax.f32 %v5692, %v5693
      %v5695 = vrot.slane %v5694, 1
      %v5696 = vmax.f32 %v5694, %v5695
      %v5697 = vsel %vm5122, %v4804, -inf
      %v5698 = vrot.slane %v5697, 4
      %v5699 = vmax.f32 %v5697, %v5698
      %v5700 = vrot.slane %v5699, 2
      %v5701 = vmax.f32 %v5699, %v5700
      %v5702 = vrot.slane %v5701, 1
      %v5703 = vmax.f32 %v5701, %v5702
      %v5704 = vsel %vm5122, %v4806, -inf
      %v5705 = vrot.slane %v5704, 4
      %v5706 = vmax.f32 %v5704, %v5705
      %v5707 = vrot.slane %v5706, 2
      %v5708 = vmax.f32 %v5706, %v5707
      %v5709 = vrot.slane %v5708, 1
      %v5710 = vmax.f32 %v5708, %v5709
      %v5711 = vsel %vm5122, %v4814, -inf
      %v5712 = vrot.slane %v5711, 4
      %v5713 = vmax.f32 %v5711, %v5712
      %v5714 = vrot.slane %v5713, 2
      %v5715 = vmax.f32 %v5713, %v5714
      %v5716 = vrot.slane %v5715, 1
      %v5717 = vmax.f32 %v5715, %v5716
      %v5718 = vsel %vm5122, %v4822, -inf
      %v5719 = vrot.slane %v5718, 4
      %v5720 = vmax.f32 %v5718, %v5719
      %v5721 = vrot.slane %v5720, 2
      %v5722 = vmax.f32 %v5720, %v5721
      %v5723 = vrot.slane %v5722, 1
      %v5724 = vmax.f32 %v5722, %v5723
      %v5725 = vsel %vm5122, %v4821, -inf
      %v5726 = vrot.slane %v5725, 4
      %v5727 = vmax.f32 %v5725, %v5726
      %v5728 = vrot.slane %v5727, 2
      %v5729 = vmax.f32 %v5727, %v5728
      %v5730 = vrot.slane %v5729, 1
      %v5731 = vmax.f32 %v5729, %v5730
      %v5732 = vsel %vm5122, %v4823, -inf
      %v5733 = vrot.slane %v5732, 4
      %v5734 = vmax.f32 %v5732, %v5733
      %v5735 = vrot.slane %v5734, 2
      %v5736 = vmax.f32 %v5734, %v5735
      %v5737 = vrot.slane %v5736, 1
      %v5738 = vmax.f32 %v5736, %v5737
      %v5739 = vsel %vm5122, %v4831, -inf
      %v5740 = vrot.slane %v5739, 4
      %v5741 = vmax.f32 %v5739, %v5740
      %v5742 = vrot.slane %v5741, 2
      %v5743 = vmax.f32 %v5741, %v5742
      %v5744 = vrot.slane %v5743, 1
      %v5745 = vmax.f32 %v5743, %v5744
      %v5746 = vsel %vm5122, %v4839, -inf
      %v5747 = vrot.slane %v5746, 4
      %v5748 = vmax.f32 %v5746, %v5747
      %v5749 = vrot.slane %v5748, 2
      %v5750 = vmax.f32 %v5748, %v5749
      %v5751 = vrot.slane %v5750, 1
      %v5752 = vmax.f32 %v5750, %v5751
      %v5753 = vsel %vm5122, %v4838, -inf
      %v5754 = vrot.slane %v5753, 4
      %v5755 = vmax.f32 %v5753, %v5754
      %v5756 = vrot.slane %v5755, 2
      %v5757 = vmax.f32 %v5755, %v5756
      %v5758 = vrot.slane %v5757, 1
      %v5759 = vmax.f32 %v5757, %v5758
      %v5760 = vsel %vm5122, %v4840, -inf
      %v5761 = vrot.slane %v5760, 4
      %v5762 = vmax.f32 %v5760, %v5761
      %v5763 = vrot.slane %v5762, 2
      %v5764 = vmax.f32 %v5762, %v5763
      %v5765 = vrot.slane %v5764, 1
      %v5766 = vmax.f32 %v5764, %v5765
      %v5767 = vsel %vm5122, %v4848, -inf
      %v5768 = vrot.slane %v5767, 4
      %v5769 = vmax.f32 %v5767, %v5768
      %v5770 = vrot.slane %v5769, 2
      %v5771 = vmax.f32 %v5769, %v5770
      %v5772 = vrot.slane %v5771, 1
      %v5773 = vmax.f32 %v5771, %v5772
      %v5774 = vsel %vm5122, %v4856, -inf
      %v5775 = vrot.slane %v5774, 4
      %v5776 = vmax.f32 %v5774, %v5775
      %v5777 = vrot.slane %v5776, 2
      %v5778 = vmax.f32 %v5776, %v5777
      %v5779 = vrot.slane %v5778, 1
      %v5780 = vmax.f32 %v5778, %v5779
      %v5781 = vsel %vm5122, %v4855, -inf
      %v5782 = vrot.slane %v5781, 4
      %v5783 = vmax.f32 %v5781, %v5782
      %v5784 = vrot.slane %v5783, 2
      %v5785 = vmax.f32 %v5783, %v5784
      %v5786 = vrot.slane %v5785, 1
      %v5787 = vmax.f32 %v5785, %v5786
      %v5788 = vsel %vm5122, %v4857, -inf
      %v5789 = vrot.slane %v5788, 4
      %v5790 = vmax.f32 %v5788, %v5789
      %v5791 = vrot.slane %v5790, 2
      %v5792 = vmax.f32 %v5790, %v5791
      %v5793 = vrot.slane %v5792, 1
      %v5794 = vmax.f32 %v5792, %v5793
      %v5795 = vsel %vm5122, %v4865, -inf
      %v5796 = vrot.slane %v5795, 4
      %v5797 = vmax.f32 %v5795, %v5796
      %v5798 = vrot.slane %v5797, 2
      %v5799 = vmax.f32 %v5797, %v5798
      %v5800 = vrot.slane %v5799, 1
      %v5801 = vmax.f32 %v5799, %v5800
      %v5802 = vsel %vm5122, %v4873, -inf
      %v5803 = vrot.slane %v5802, 4
      %v5804 = vmax.f32 %v5802, %v5803
      %v5805 = vrot.slane %v5804, 2
      %v5806 = vmax.f32 %v5804, %v5805
      %v5807 = vrot.slane %v5806, 1
      %v5808 = vmax.f32 %v5806, %v5807
      %v5809 = vsel %vm5122, %v4872, -inf
      %v5810 = vrot.slane %v5809, 4
      %v5811 = vmax.f32 %v5809, %v5810
      %v5812 = vrot.slane %v5811, 2
      %v5813 = vmax.f32 %v5811, %v5812
      %v5814 = vrot.slane %v5813, 1
      %v5815 = vmax.f32 %v5813, %v5814
      %v5816 = vsel %vm5122, %v4874, -inf
      %v5817 = vrot.slane %v5816, 4
      %v5818 = vmax.f32 %v5816, %v5817
      %v5819 = vrot.slane %v5818, 2
      %v5820 = vmax.f32 %v5818, %v5819
      %v5821 = vrot.slane %v5820, 1
      %v5822 = vmax.f32 %v5820, %v5821
      %v5823 = vsel %vm5122, %v4882, -inf
      %v5824 = vrot.slane %v5823, 4
      %v5825 = vmax.f32 %v5823, %v5824
      %v5826 = vrot.slane %v5825, 2
      %v5827 = vmax.f32 %v5825, %v5826
      %v5828 = vrot.slane %v5827, 1
      %v5829 = vmax.f32 %v5827, %v5828
      %v5830 = vsel %vm5122, %v4890, -inf
      %v5831 = vrot.slane %v5830, 4
      %v5832 = vmax.f32 %v5830, %v5831
      %v5833 = vrot.slane %v5832, 2
      %v5834 = vmax.f32 %v5832, %v5833
      %v5835 = vrot.slane %v5834, 1
      %v5836 = vmax.f32 %v5834, %v5835
      %v5837 = vsel %vm5122, %v4889, -inf
      %v5838 = vrot.slane %v5837, 4
      %v5839 = vmax.f32 %v5837, %v5838
      %v5840 = vrot.slane %v5839, 2
      %v5841 = vmax.f32 %v5839, %v5840
      %v5842 = vrot.slane %v5841, 1
      %v5843 = vmax.f32 %v5841, %v5842
      %v5844 = vsel %vm5122, %v4891, -inf
      %v5845 = vrot.slane %v5844, 4
      %v5846 = vmax.f32 %v5844, %v5845
      %v5847 = vrot.slane %v5846, 2
      %v5848 = vmax.f32 %v5846, %v5847
      %v5849 = vrot.slane %v5848, 1
      %v5850 = vmax.f32 %v5848, %v5849
      %v5851 = vsel %vm5122, %v4899, -inf
      %v5852 = vrot.slane %v5851, 4
      %v5853 = vmax.f32 %v5851, %v5852
      %v5854 = vrot.slane %v5853, 2
      %v5855 = vmax.f32 %v5853, %v5854
      %v5856 = vrot.slane %v5855, 1
      %v5857 = vmax.f32 %v5855, %v5856
      %v5858 = vsel %vm5122, %v4907, -inf
      %v5859 = vrot.slane %v5858, 4
      %v5860 = vmax.f32 %v5858, %v5859
      %v5861 = vrot.slane %v5860, 2
      %v5862 = vmax.f32 %v5860, %v5861
      %v5863 = vrot.slane %v5862, 1
      %v5864 = vmax.f32 %v5862, %v5863
      %v5865 = vsel %vm5122, %v4906, -inf
      %v5866 = vrot.slane %v5865, 4
      %v5867 = vmax.f32 %v5865, %v5866
      %v5868 = vrot.slane %v5867, 2
      %v5869 = vmax.f32 %v5867, %v5868
      %v5870 = vrot.slane %v5869, 1
      %v5871 = vmax.f32 %v5869, %v5870
      %v5872 = vsel %vm5122, %v4908, -inf
      %v5873 = vrot.slane %v5872, 4
      %v5874 = vmax.f32 %v5872, %v5873
      %v5875 = vrot.slane %v5874, 2
      %v5876 = vmax.f32 %v5874, %v5875
      %v5877 = vrot.slane %v5876, 1
      %v5878 = vmax.f32 %v5876, %v5877
      %v5879 = vsel %vm5122, %v4916, -inf
      %v5880 = vrot.slane %v5879, 4
      %v5881 = vmax.f32 %v5879, %v5880
      %v5882 = vrot.slane %v5881, 2
      %v5883 = vmax.f32 %v5881, %v5882
      %v5884 = vrot.slane %v5883, 1
      %v5885 = vmax.f32 %v5883, %v5884
      %v5886 = vsel %vm5122, %v4924, -inf
      %v5887 = vrot.slane %v5886, 4
      %v5888 = vmax.f32 %v5886, %v5887
      %v5889 = vrot.slane %v5888, 2
      %v5890 = vmax.f32 %v5888, %v5889
      %v5891 = vrot.slane %v5890, 1
      %v5892 = vmax.f32 %v5890, %v5891
      %v5893 = vsel %vm5122, %v4923, -inf
      %v5894 = vrot.slane %v5893, 4
      %v5895 = vmax.f32 %v5893, %v5894
      %v5896 = vrot.slane %v5895, 2
      %v5897 = vmax.f32 %v5895, %v5896
      %v5898 = vrot.slane %v5897, 1
      %v5899 = vmax.f32 %v5897, %v5898
      %v5900 = vsel %vm5122, %v4925, -inf
      %v5901 = vrot.slane %v5900, 4
      %v5902 = vmax.f32 %v5900, %v5901
      %v5903 = vrot.slane %v5902, 2
      %v5904 = vmax.f32 %v5902, %v5903
      %v5905 = vrot.slane %v5904, 1
      %v5906 = vmax.f32 %v5904, %v5905
      %v5907 = vsel %vm5122, %v4933, -inf
      %v5908 = vrot.slane %v5907, 4
      %v5909 = vmax.f32 %v5907, %v5908
      %v5910 = vrot.slane %v5909, 2
      %v5911 = vmax.f32 %v5909, %v5910
      %v5912 = vrot.slane %v5911, 1
      %v5913 = vmax.f32 %v5911, %v5912
      %v5914 = vsel %vm5122, %v4941, -inf
      %v5915 = vrot.slane %v5914, 4
      %v5916 = vmax.f32 %v5914, %v5915
      %v5917 = vrot.slane %v5916, 2
      %v5918 = vmax.f32 %v5916, %v5917
      %v5919 = vrot.slane %v5918, 1
      %v5920 = vmax.f32 %v5918, %v5919
      %v5921 = vsel %vm5122, %v4940, -inf
      %v5922 = vrot.slane %v5921, 4
      %v5923 = vmax.f32 %v5921, %v5922
      %v5924 = vrot.slane %v5923, 2
      %v5925 = vmax.f32 %v5923, %v5924
      %v5926 = vrot.slane %v5925, 1
      %v5927 = vmax.f32 %v5925, %v5926
      %v5928 = vsel %vm5122, %v4942, -inf
      %v5929 = vrot.slane %v5928, 4
      %v5930 = vmax.f32 %v5928, %v5929
      %v5931 = vrot.slane %v5930, 2
      %v5932 = vmax.f32 %v5930, %v5931
      %v5933 = vrot.slane %v5932, 1
      %v5934 = vmax.f32 %v5932, %v5933
      %v5935 = vsel %vm5122, %v4950, -inf
      %v5936 = vrot.slane %v5935, 4
      %v5937 = vmax.f32 %v5935, %v5936
      %v5938 = vrot.slane %v5937, 2
      %v5939 = vmax.f32 %v5937, %v5938
      %v5940 = vrot.slane %v5939, 1
      %v5941 = vmax.f32 %v5939, %v5940
      %v5942 = vsel %vm5122, %v4958, -inf
      %v5943 = vrot.slane %v5942, 4
      %v5944 = vmax.f32 %v5942, %v5943
      %v5945 = vrot.slane %v5944, 2
      %v5946 = vmax.f32 %v5944, %v5945
      %v5947 = vrot.slane %v5946, 1
      %v5948 = vmax.f32 %v5946, %v5947
      %v5949 = vsel %vm5122, %v4957, -inf
      %v5950 = vrot.slane %v5949, 4
      %v5951 = vmax.f32 %v5949, %v5950
      %v5952 = vrot.slane %v5951, 2
      %v5953 = vmax.f32 %v5951, %v5952
      %v5954 = vrot.slane %v5953, 1
      %v5955 = vmax.f32 %v5953, %v5954
      %v5956 = vsel %vm5122, %v4959, -inf
      %v5957 = vrot.slane %v5956, 4
      %v5958 = vmax.f32 %v5956, %v5957
      %v5959 = vrot.slane %v5958, 2
      %v5960 = vmax.f32 %v5958, %v5959
      %v5961 = vrot.slane %v5960, 1
      %v5962 = vmax.f32 %v5960, %v5961
      %v5963 = vsel %vm5122, %v4967, -inf
      %v5964 = vrot.slane %v5963, 4
      %v5965 = vmax.f32 %v5963, %v5964
      %v5966 = vrot.slane %v5965, 2
      %v5967 = vmax.f32 %v5965, %v5966
      %v5968 = vrot.slane %v5967, 1
      %v5969 = vmax.f32 %v5967, %v5968
      %v5970 = vsel %vm5122, %v4975, -inf
      %v5971 = vrot.slane %v5970, 4
      %v5972 = vmax.f32 %v5970, %v5971
      %v5973 = vrot.slane %v5972, 2
      %v5974 = vmax.f32 %v5972, %v5973
      %v5975 = vrot.slane %v5974, 1
      %v5976 = vmax.f32 %v5974, %v5975
      %v5977 = vsel %vm5122, %v4974, -inf
      %v5978 = vrot.slane %v5977, 4
      %v5979 = vmax.f32 %v5977, %v5978
      %v5980 = vrot.slane %v5979, 2
      %v5981 = vmax.f32 %v5979, %v5980
      %v5982 = vrot.slane %v5981, 1
      %v5983 = vmax.f32 %v5981, %v5982
      %v5984 = vsel %vm5122, %v4976, -inf
      %v5985 = vrot.slane %v5984, 4
      %v5986 = vmax.f32 %v5984, %v5985
      %v5987 = vrot.slane %v5986, 2
      %v5988 = vmax.f32 %v5986, %v5987
      %v5989 = vrot.slane %v5988, 1
      %v5990 = vmax.f32 %v5988, %v5989
      %v5991 = vsel %vm5122, %v4984, -inf
      %v5992 = vrot.slane %v5991, 4
      %v5993 = vmax.f32 %v5991, %v5992
      %v5994 = vrot.slane %v5993, 2
      %v5995 = vmax.f32 %v5993, %v5994
      %v5996 = vrot.slane %v5995, 1
      %v5997 = vmax.f32 %v5995, %v5996
      %v5998 = vsel %vm5122, %v4992, -inf
      %v5999 = vrot.slane %v5998, 4
      %v6000 = vmax.f32 %v5998, %v5999
      %v6001 = vrot.slane %v6000, 2
      %v6002 = vmax.f32 %v6000, %v6001
      %v6003 = vrot.slane %v6002, 1
      %v6004 = vmax.f32 %v6002, %v6003
      %v6005 = vsel %vm5122, %v4991, -inf
      %v6006 = vrot.slane %v6005, 4
      %v6007 = vmax.f32 %v6005, %v6006
      %v6008 = vrot.slane %v6007, 2
      %v6009 = vmax.f32 %v6007, %v6008
      %v6010 = vrot.slane %v6009, 1
      %v6011 = vmax.f32 %v6009, %v6010
      %v6012 = vsel %vm5122, %v4993, -inf
      %v6013 = vrot.slane %v6012, 4
      %v6014 = vmax.f32 %v6012, %v6013
      %v6015 = vrot.slane %v6014, 2
      %v6016 = vmax.f32 %v6014, %v6015
      %v6017 = vrot.slane %v6016, 1
      %v6018 = vmax.f32 %v6016, %v6017
      %v6019 = vsel %vm225, %v5129, -inf
      %v6020 = vsel %vm225, %v5185, -inf
      %v6021 = vmax.f32 %v6019, %v6020
      %v6022 = vsel %vm225, %v5136, -inf
      %v6023 = vsel %vm225, %v5192, -inf
      %v6024 = vmax.f32 %v6022, %v6023
      %v6025 = vsel %vm225, %v5143, -inf
      %v6026 = vsel %vm225, %v5199, -inf
      %v6027 = vmax.f32 %v6025, %v6026
      %v6028 = vsel %vm225, %v5150, -inf
      %v6029 = vsel %vm225, %v5206, -inf
      %v6030 = vmax.f32 %v6028, %v6029
      %v6031 = vsel %vm225, %v5157, -inf
      %v6032 = vsel %vm225, %v5213, -inf
      %v6033 = vmax.f32 %v6031, %v6032
      %v6034 = vsel %vm225, %v5164, -inf
      %v6035 = vsel %vm225, %v5220, -inf
      %v6036 = vmax.f32 %v6034, %v6035
      %v6037 = vsel %vm225, %v5171, -inf
      %v6038 = vsel %vm225, %v5227, -inf
      %v6039 = vmax.f32 %v6037, %v6038
      %v6040 = vsel %vm225, %v5178, -inf
      %v6041 = vsel %vm225, %v5234, -inf
      %v6042 = vmax.f32 %v6040, %v6041
      %v6043 = vsel %vm225, %v5241, -inf
      %v6044 = vsel %vm225, %v5297, -inf
      %v6045 = vmax.f32 %v6043, %v6044
      %v6046 = vsel %vm225, %v5248, -inf
      %v6047 = vsel %vm225, %v5304, -inf
      %v6048 = vmax.f32 %v6046, %v6047
      %v6049 = vsel %vm225, %v5255, -inf
      %v6050 = vsel %vm225, %v5311, -inf
      %v6051 = vmax.f32 %v6049, %v6050
      %v6052 = vsel %vm225, %v5262, -inf
      %v6053 = vsel %vm225, %v5318, -inf
      %v6054 = vmax.f32 %v6052, %v6053
      %v6055 = vsel %vm225, %v5269, -inf
      %v6056 = vsel %vm225, %v5325, -inf
      %v6057 = vmax.f32 %v6055, %v6056
      %v6058 = vsel %vm225, %v5276, -inf
      %v6059 = vsel %vm225, %v5332, -inf
      %v6060 = vmax.f32 %v6058, %v6059
      %v6061 = vsel %vm225, %v5283, -inf
      %v6062 = vsel %vm225, %v5339, -inf
      %v6063 = vmax.f32 %v6061, %v6062
      %v6064 = vsel %vm225, %v5290, -inf
      %v6065 = vsel %vm225, %v5346, -inf
      %v6066 = vmax.f32 %v6064, %v6065
      %v6067 = vsel %vm225, %v5353, -inf
      %v6068 = vsel %vm225, %v5409, -inf
      %v6069 = vmax.f32 %v6067, %v6068
      %v6070 = vsel %vm225, %v5360, -inf
      %v6071 = vsel %vm225, %v5416, -inf
      %v6072 = vmax.f32 %v6070, %v6071
      %v6073 = vsel %vm225, %v5367, -inf
      %v6074 = vsel %vm225, %v5423, -inf
      %v6075 = vmax.f32 %v6073, %v6074
      %v6076 = vsel %vm225, %v5374, -inf
      %v6077 = vsel %vm225, %v5430, -inf
      %v6078 = vmax.f32 %v6076, %v6077
      %v6079 = vsel %vm225, %v5381, -inf
      %v6080 = vsel %vm225, %v5437, -inf
      %v6081 = vmax.f32 %v6079, %v6080
      %v6082 = vsel %vm225, %v5388, -inf
      %v6083 = vsel %vm225, %v5444, -inf
      %v6084 = vmax.f32 %v6082, %v6083
      %v6085 = vsel %vm225, %v5395, -inf
      %v6086 = vsel %vm225, %v5451, -inf
      %v6087 = vmax.f32 %v6085, %v6086
      %v6088 = vsel %vm225, %v5402, -inf
      %v6089 = vsel %vm225, %v5458, -inf
      %v6090 = vmax.f32 %v6088, %v6089
      %v6091 = vsel %vm225, %v5465, -inf
      %v6092 = vsel %vm225, %v5521, -inf
      %v6093 = vmax.f32 %v6091, %v6092
      %v6094 = vsel %vm225, %v5472, -inf
      %v6095 = vsel %vm225, %v5528, -inf
      %v6096 = vmax.f32 %v6094, %v6095
      %v6097 = vsel %vm225, %v5479, -inf
      %v6098 = vsel %vm225, %v5535, -inf
      %v6099 = vmax.f32 %v6097, %v6098
      %v6100 = vsel %vm225, %v5486, -inf
      %v6101 = vsel %vm225, %v5542, -inf
      %v6102 = vmax.f32 %v6100, %v6101
      %v6103 = vsel %vm225, %v5493, -inf
      %v6104 = vsel %vm225, %v5549, -inf
      %v6105 = vmax.f32 %v6103, %v6104
      %v6106 = vsel %vm225, %v5500, -inf
      %v6107 = vsel %vm225, %v5556, -inf
      %v6108 = vmax.f32 %v6106, %v6107
      %v6109 = vsel %vm225, %v5507, -inf
      %v6110 = vsel %vm225, %v5563, -inf
      %v6111 = vmax.f32 %v6109, %v6110
      %v6112 = vsel %vm225, %v5514, -inf
      %v6113 = vsel %vm225, %v5570, -inf
      %v6114 = vmax.f32 %v6112, %v6113
      %v6115 = vsel %vm225, %v5577, -inf
      %v6116 = vsel %vm225, %v5633, -inf
      %v6117 = vmax.f32 %v6115, %v6116
      %v6118 = vsel %vm225, %v5584, -inf
      %v6119 = vsel %vm225, %v5640, -inf
      %v6120 = vmax.f32 %v6118, %v6119
      %v6121 = vsel %vm225, %v5591, -inf
      %v6122 = vsel %vm225, %v5647, -inf
      %v6123 = vmax.f32 %v6121, %v6122
      %v6124 = vsel %vm225, %v5598, -inf
      %v6125 = vsel %vm225, %v5654, -inf
      %v6126 = vmax.f32 %v6124, %v6125
      %v6127 = vsel %vm225, %v5605, -inf
      %v6128 = vsel %vm225, %v5661, -inf
      %v6129 = vmax.f32 %v6127, %v6128
      %v6130 = vsel %vm225, %v5612, -inf
      %v6131 = vsel %vm225, %v5668, -inf
      %v6132 = vmax.f32 %v6130, %v6131
      %v6133 = vsel %vm225, %v5619, -inf
      %v6134 = vsel %vm225, %v5675, -inf
      %v6135 = vmax.f32 %v6133, %v6134
      %v6136 = vsel %vm225, %v5626, -inf
      %v6137 = vsel %vm225, %v5682, -inf
      %v6138 = vmax.f32 %v6136, %v6137
      %v6139 = vsel %vm225, %v5689, -inf
      %v6140 = vsel %vm225, %v5745, -inf
      %v6141 = vmax.f32 %v6139, %v6140
      %v6142 = vsel %vm225, %v5696, -inf
      %v6143 = vsel %vm225, %v5752, -inf
      %v6144 = vmax.f32 %v6142, %v6143
      %v6145 = vsel %vm225, %v5703, -inf
      %v6146 = vsel %vm225, %v5759, -inf
      %v6147 = vmax.f32 %v6145, %v6146
      %v6148 = vsel %vm225, %v5710, -inf
      %v6149 = vsel %vm225, %v5766, -inf
      %v6150 = vmax.f32 %v6148, %v6149
      %v6151 = vsel %vm225, %v5717, -inf
      %v6152 = vsel %vm225, %v5773, -inf
      %v6153 = vmax.f32 %v6151, %v6152
      %v6154 = vsel %vm225, %v5724, -inf
      %v6155 = vsel %vm225, %v5780, -inf
      %v6156 = vmax.f32 %v6154, %v6155
      %v6157 = vsel %vm225, %v5731, -inf
      %v6158 = vsel %vm225, %v5787, -inf
      %v6159 = vmax.f32 %v6157, %v6158
      %v6160 = vsel %vm225, %v5738, -inf
      %v6161 = vsel %vm225, %v5794, -inf
      %v6162 = vmax.f32 %v6160, %v6161
      %v6163 = vsel %vm225, %v5801, -inf
      %v6164 = vsel %vm225, %v5857, -inf
      %v6165 = vmax.f32 %v6163, %v6164
      %v6166 = vsel %vm225, %v5808, -inf
      %v6167 = vsel %vm225, %v5864, -inf
      %v6168 = vmax.f32 %v6166, %v6167
      %v6169 = vsel %vm225, %v5815, -inf
      %v6170 = vsel %vm225, %v5871, -inf
      %v6171 = vmax.f32 %v6169, %v6170
      %v6172 = vsel %vm225, %v5822, -inf
      %v6173 = vsel %vm225, %v5878, -inf
      %v6174 = vmax.f32 %v6172, %v6173
      %v6175 = vsel %vm225, %v5829, -inf
      %v6176 = vsel %vm225, %v5885, -inf
      %v6177 = vmax.f32 %v6175, %v6176
      %v6178 = vsel %vm225, %v5836, -inf
      %v6179 = vsel %vm225, %v5892, -inf
      %v6180 = vmax.f32 %v6178, %v6179
      %v6181 = vsel %vm225, %v5843, -inf
      %v6182 = vsel %vm225, %v5899, -inf
      %v6183 = vmax.f32 %v6181, %v6182
      %v6184 = vsel %vm225, %v5850, -inf
      %v6185 = vsel %vm225, %v5906, -inf
      %v6186 = vmax.f32 %v6184, %v6185
      %v6187 = vsel %vm225, %v5913, -inf
      %v6188 = vsel %vm225, %v5969, -inf
      %v6189 = vmax.f32 %v6187, %v6188
      %v6190 = vsel %vm225, %v5920, -inf
      %v6191 = vsel %vm225, %v5976, -inf
      %v6192 = vmax.f32 %v6190, %v6191
      %v6193 = vsel %vm225, %v5927, -inf
      %v6194 = vsel %vm225, %v5983, -inf
      %v6195 = vmax.f32 %v6193, %v6194
      %v6196 = vsel %vm225, %v5934, -inf
      %v6197 = vsel %vm225, %v5990, -inf
      %v6198 = vmax.f32 %v6196, %v6197
      %v6199 = vsel %vm225, %v5941, -inf
      %v6200 = vsel %vm225, %v5997, -inf
      %v6201 = vmax.f32 %v6199, %v6200
      %v6202 = vsel %vm225, %v5948, -inf
      %v6203 = vsel %vm225, %v6004, -inf
      %v6204 = vmax.f32 %v6202, %v6203
      %v6205 = vsel %vm225, %v5955, -inf
      %v6206 = vsel %vm225, %v6011, -inf
      %v6207 = vmax.f32 %v6205, %v6206
      %v6208 = vsel %vm225, %v5962, -inf
      %v6209 = vsel %vm225, %v6018, -inf
      %v6210 = vmax.f32 %v6208, %v6209
      %vm6275 = vcmask 1041409
      %v6276 = vsel %vm6275, %v6024, %v6021
      %vm6277 = vcmask 1042434
      %v6278 = vsel %vm6277, %v6027, %v6276
      %vm6279 = vcmask 1043459
      %v6280 = vsel %vm6279, %v6030, %v6278
      %vm6281 = vcmask 1044484
      %v6282 = vsel %vm6281, %v6033, %v6280
      %vm6283 = vcmask 1045509
      %v6284 = vsel %vm6283, %v6036, %v6282
      %vm6285 = vcmask 1046534
      %v6286 = vsel %vm6285, %v6039, %v6284
      %vm6287 = vcmask 1047559
      %v6288 = vsel %vm6287, %v6042, %v6286
      %v6289 = vsel %vm6275, %v6048, %v6045
      %v6290 = vsel %vm6277, %v6051, %v6289
      %v6291 = vsel %vm6279, %v6054, %v6290
      %v6292 = vsel %vm6281, %v6057, %v6291
      %v6293 = vsel %vm6283, %v6060, %v6292
      %v6294 = vsel %vm6285, %v6063, %v6293
      %v6295 = vsel %vm6287, %v6066, %v6294
      %v6296 = vsel %vm6275, %v6072, %v6069
      %v6297 = vsel %vm6277, %v6075, %v6296
      %v6298 = vsel %vm6279, %v6078, %v6297
      %v6299 = vsel %vm6281, %v6081, %v6298
      %v6300 = vsel %vm6283, %v6084, %v6299
      %v6301 = vsel %vm6285, %v6087, %v6300
      %v6302 = vsel %vm6287, %v6090, %v6301
      %v6303 = vsel %vm6275, %v6096, %v6093
      %v6304 = vsel %vm6277, %v6099, %v6303
      %v6305 = vsel %vm6279, %v6102, %v6304
      %v6306 = vsel %vm6281, %v6105, %v6305
      %v6307 = vsel %vm6283, %v6108, %v6306
      %v6308 = vsel %vm6285, %v6111, %v6307
      %v6309 = vsel %vm6287, %v6114, %v6308
      %v6310 = vsel %vm6275, %v6120, %v6117
      %v6311 = vsel %vm6277, %v6123, %v6310
      %v6312 = vsel %vm6279, %v6126, %v6311
      %v6313 = vsel %vm6281, %v6129, %v6312
      %v6314 = vsel %vm6283, %v6132, %v6313
      %v6315 = vsel %vm6285, %v6135, %v6314
      %v6316 = vsel %vm6287, %v6138, %v6315
      %v6317 = vsel %vm6275, %v6144, %v6141
      %v6318 = vsel %vm6277, %v6147, %v6317
      %v6319 = vsel %vm6279, %v6150, %v6318
      %v6320 = vsel %vm6281, %v6153, %v6319
      %v6321 = vsel %vm6283, %v6156, %v6320
      %v6322 = vsel %vm6285, %v6159, %v6321
      %v6323 = vsel %vm6287, %v6162, %v6322
      %v6324 = vsel %vm6275, %v6168, %v6165
      %v6325 = vsel %vm6277, %v6171, %v6324
      %v6326 = vsel %vm6279, %v6174, %v6325
      %v6327 = vsel %vm6281, %v6177, %v6326
      %v6328 = vsel %vm6283, %v6180, %v6327
      %v6329 = vsel %vm6285, %v6183, %v6328
      %v6330 = vsel %vm6287, %v6186, %v6329
      %v6331 = vsel %vm6275, %v6192, %v6189
      %v6332 = vsel %vm6277, %v6195, %v6331
      %v6333 = vsel %vm6279, %v6198, %v6332
      %v6334 = vsel %vm6281, %v6201, %v6333
      %v6335 = vsel %vm6283, %v6204, %v6334
      %v6336 = vsel %vm6285, %v6207, %v6335
      %v6337 = vsel %vm6287, %v6210, %v6336
      %6346 = vst.msk [vmem:[%s224] sm:$0xff] %vm225, %v6288
      %6347 = vst.msk [vmem:[%s224 + $0x8] sm:$0xff] %vm225, %v6295
      %6348 = vst.msk [vmem:[%s224 + $0x10] sm:$0xff] %vm225, %v6302
      %6349 = vst.msk [vmem:[%s224 + $0x18] sm:$0xff] %vm225, %v6309
      %6350 = vst.msk [vmem:[%s224 + $0x20] sm:$0xff] %vm225, %v6316
      %6351 = vst.msk [vmem:[%s224 + $0x28] sm:$0xff] %vm225, %v6323
      %6352 = vst.msk [vmem:[%s224 + $0x30] sm:$0xff] %vm225, %v6330
      %6353 = vst.msk [vmem:[%s224 + $0x38] sm:$0xff] %vm225, %v6337
      %p6354 = scmp.lt.s32.totalorder %s16, 1
      %s6355 = scalar_select %p6354, %s16, 1
      %s6356 = smul.addr %s6355, 8
      %s6357 = smul.addr %s6356, 8
      %s6358 = scalar_lea.vmem %s5, %s6357
      // Predicated region
      $region41: #{vgg_block_forward.1} parent=39 // pred_check
        %p6359 = pneg %p144
      $region42: #{vgg_block_forward.1} parent=39 // pred_check_branch
        %6361 = sbr.rel (%p6359) target = $region44
      $region43: #{vgg_block_forward.1} parent=39 // pred_region
        _
      $region44: #{vgg_block_forward.1} parent=39 // pred_fallthru
        _
    $region40: #{vgg_block_forward.1} parent=5 // pred_fallthru
      _
    %p6362 = scmp.le.s32.totalorder 2, %s11
    // Predicated region
    $region45: #{vgg_block_forward.1} parent=5 // pred_check
      %p6363 = pneg %p6362
    $region46: #{vgg_block_forward.1} parent=5 // pred_check_branch
      %6365 = sbr.rel (%p6363) target = $region48
    $region47: #{vgg_block_forward.1} parent=5 // pred_region
      %s6366 = ssub.s32 %s11, 2
      // Predicated region
      $region49: #{vgg_block_forward.1} parent=47 // pred_check
        %p6367 = pneg %p150
      $region50: #{vgg_block_forward.1} parent=47 // pred_check_branch
        %6369 = sbr.rel (%p6367) target = $region52
      $region51: #{vgg_block_forward.1} parent=47 // pred_region
        %p6370 = scmp.lt.s32.totalorder %s17, 1
        %s6371 = scalar_select %p6370, %s17, 1
        %s6372 = smul.addr %s6371, 8
        %s6373 = smul.addr %s6372, 8
        %s6374 = scalar_lea.vmem %s5, %s6373
      $region52: #{vgg_block_forward.1} parent=47 // pred_fallthru
        _
    $region48: #{vgg_block_forward.1} parent=5 // pred_fallthru
      _
  $region6: #{vgg_block_forward.1} parent=0 // loop_footer
    %s15 = sadd.s32 1, %s11
  $region7: #{vgg_block_forward.1} parent=0 // loop_footer_branch
    %10 = sbr.rel target = $region3
  $region8: #{vgg_block_forward.1} parent=0 // loop_exit
    _

</llo_original>
